<compile_context>
chip_gen: v6e
topology: v6e:2x2x1
jax: 0.10.0
libtpu: 0.0.40
codegen_flags: <defaults>
</compile_context>

<pallas_src>
import math

import numpy as np
import jax
import jax.numpy as jnp
from jax.experimental import pallas as pl
from jax.experimental.pallas import tpu as pltpu


def _grid_spectral_points(H, W, k):
    # TODO(synk): robust_spectral.grid_spectral_points is not available here;
    # a deterministic separable-cosine (DCT-like) grid-mode basis is used as a stand-in.
    pairs = sorted(((kh, kw) for kh in range(H) for kw in range(W)),
                   key=lambda p: (p[0] + p[1], p[0], p[1]))[:k]
    hh = np.arange(H) + 0.5
    ww = np.arange(W) + 0.5
    cols = []
    for kh, kw in pairs:
        cols.append(np.outer(np.cos(np.pi * hh * kh / H),
                             np.cos(np.pi * ww * kw / W)).reshape(-1))
    return np.stack(cols, axis=-1).astype(np.float32)          # (H*W, k)


def _csm_kernel(patches_ref, w_in_ref, b_in_ref, wg_ref, bg_ref, inver_ref,
                lnw_ref, lnb_ref, mlp_ref, wo_ref, bo_ref, o_ref):
    """One grid step = one batch element; all heads handled in an unrolled loop."""
    heads, dim_head, freq_num = wg_ref.shape
    inner = heads * dim_head

    patches = patches_ref[0]                                          # (N, 9C)

    # Both 3x3 convs for ALL heads as one 256-wide MXU matmul:
    #   columns [0, inner)        -> fx_mid (head-major)
    #   columns [inner, 2*inner)  -> x_mid  (head-major)
    proj = jnp.dot(patches, w_in_ref[...],
                   preferred_element_type=jnp.float32) + b_in_ref[...]  # (N, 2*inner)

    inver = inver_ref[...]                                            # (N, F)
    lnw = lnw_ref[...]                                                # (F, Dh)
    lnb = lnb_ref[...]                                                # (F, Dh)
    mlp = mlp_ref[...]                                                # (Dh, Dh)

    out_heads = []
    for h in range(heads):                                            # statically unrolled
        fx = proj[:, h * dim_head:(h + 1) * dim_head]                 # (N, Dh)
        xm = proj[:, inner + h * dim_head: inner + (h + 1) * dim_head]

        # Calibrated gates: softmax((x_mid @ Wg^T + bg) / clamp(temp)).
        # Temperature is folded into wg_ref / bg_ref by the wrapper (exact rewrite).
        logits = jnp.dot(xm, wg_ref[h],
                         preferred_element_type=jnp.float32) + bg_ref[h]  # (N, F)
        m = jnp.max(logits, axis=-1, keepdims=True)
        e = jnp.exp(logits - m)
        s = jnp.sum(e, axis=-1, keepdims=True)
        gates = e * pl.reciprocal(s, approx=True)                     # divide on EUP
        eigens = gates * inver                                        # (N, F)

        # spectral_feature[g, c] = sum_n eigens[n, g] * fx[n, c]   (contraction over N)
        sf = jax.lax.dot_general(eigens, fx, (((0,), (0,)), ((), ())),
                                 preferred_element_type=jnp.float32)  # (F, Dh)

        # LayerNorm over the whole (F, Dh) slab == nn.LayerNorm((freq_num, dim_head)).
        n_elem = sf.shape[0] * sf.shape[1]
        total = jnp.sum(jnp.sum(sf, axis=1, keepdims=True), axis=0, keepdims=True)
        mean = total / n_elem                                         # (1, 1)
        cen = sf - mean
        var = jnp.sum(jnp.sum(cen * cen, axis=1, keepdims=True),
                      axis=0, keepdims=True) / n_elem                 # (1, 1)
        sf_n = cen * jax.lax.rsqrt(var + 1e-5) * lnw + lnb

        # Spectral-domain mixing + back-projection to the N grid points.
        out_sp = jnp.dot(sf_n, mlp, preferred_element_type=jnp.float32)   # (F, Dh)
        out_heads.append(jnp.dot(eigens, out_sp,
                                 preferred_element_type=jnp.float32))     # (N, Dh)

    # Lane-dense (N, inner=128) slab -> single full-depth to_out matmul,
    # written to the output block exactly once.
    out_all = jnp.concatenate(out_heads, axis=-1)                     # (N, inner)
    o_ref[0] = jnp.dot(out_all, wo_ref[...],
                       preferred_element_type=jnp.float32) + bo_ref[...]  # (N, dim)


def calibrated_spectral_mixer_pallas(x, params, *, H, W, heads, dim_head, freq_num):
    """x: (B, N=H*W, dim) float32. Returns (B, N, dim) float32."""
    (wfx_conv, bfx, wx_conv, bx, wg, bg, temp, inver,
     ln_w, ln_b, mlp_w, wo, bo) = params
    B, N, C = x.shape
    assert N == H * W
    inner = heads * dim_head
    dim = C
    K = 9 * C

    # --- im2col (layout plumbing in the wrapper; conv FLOPs run in-kernel) ---
    # TODO(synk): for much larger N/C, replace im2col with an in-kernel 9-shift
    # conv to avoid the 9x HBM inflation of the patches tensor.
    x_img = x.reshape(B, H, W, C)
    xp = jnp.pad(x_img, ((0, 0), (1, 1), (1, 1), (0, 0)))
    cols = [xp[:, dh:dh + H, dw:dw + W, :] for dh in range(3) for dw in range(3)]
    patches = jnp.concatenate(cols, axis=-1).reshape(B, N, K)

    # --- fuse both conv weights (all heads) into one (9C, 2*inner) matrix ---
    def conv_w_cols(w):                      # (inner, C, 3, 3) -> (9C, inner)
        return jnp.transpose(w, (2, 3, 1, 0)).reshape(K, inner)

    w_in = jnp.concatenate([conv_w_cols(wfx_conv), conv_w_cols(wx_conv)], axis=1)  # (K, 2*inner)
    b_in = jnp.concatenate([bfx, bx]).reshape(1, 2 * inner)

    # --- fold the temperature clamp/divide into the gate weights (exact) ---
    t = jnp.clip(temp.reshape(heads), 0.1, 5.0)
    wg_h = wg.T[None, :, :] / t[:, None, None]                  # (heads, Dh, F)
    bg_h = (bg[None, :] / t[:, None]).reshape(heads, 1, freq_num)

    wo_t = wo.T                                                 # (inner, dim)
    bo_2d = bo.reshape(1, dim)

    flops_per_batch = (2 * N * K * (2 * inner)
                       + heads * (3 * 2 * N * freq_num * dim_head
                                  + 2 * freq_num * dim_head * dim_head)
                       + 2 * N * inner * dim)
    cost = pl.CostEstimate(
        flops=int(B * flops_per_batch),
        transcendentals=int(B * heads * N * (freq_num + 1)),
        bytes_accessed=int(4 * (B * N * K + B * N * dim
                                + K * 2 * inner + 2 * inner
                                + heads * dim_head * freq_num + heads * freq_num
                                + N * freq_num + 2 * freq_num * dim_head
                                + dim_head * dim_head + inner * dim + dim)))

    out = pl.pallas_call(
        _csm_kernel,
        out_shape=jax.ShapeDtypeStruct((B, N, dim), jnp.float32),
        grid_spec=pltpu.PrefetchScalarGridSpec(
            num_scalar_prefetch=0,
            grid=(B,),
            in_specs=[
                pl.BlockSpec((1, N, K), lambda b: (b, 0, 0)),                 # im2col patches
                pl.BlockSpec((K, 2 * inner), lambda b: (0, 0)),               # fused conv W (resident)
                pl.BlockSpec((1, 2 * inner), lambda b: (0, 0)),               # fused conv b
                pl.BlockSpec((heads, dim_head, freq_num), lambda b: (0, 0, 0)),  # gate W (/temp)
                pl.BlockSpec((heads, 1, freq_num), lambda b: (0, 0, 0)),      # gate b (/temp)
                pl.BlockSpec((N, freq_num), lambda b: (0, 0)),                # inver basis
                pl.BlockSpec((freq_num, dim_head), lambda b: (0, 0)),         # LN weight
                pl.BlockSpec((freq_num, dim_head), lambda b: (0, 0)),         # LN bias
                pl.BlockSpec((dim_head, dim_head), lambda b: (0, 0)),         # mlp_trans_weights
                pl.BlockSpec((inner, dim), lambda b: (0, 0)),                 # to_out W^T
                pl.BlockSpec((1, dim), lambda b: (0, 0)),                     # to_out b
            ],
            out_specs=pl.BlockSpec((1, N, dim), lambda b: (b, 0, 0)),
        ),
        compiler_params=pltpu.CompilerParams(
            dimension_semantics=("parallel",)),
        cost_estimate=cost,
    )(patches, w_in, b_in, wg_h, bg_h, inver, ln_w, ln_b, mlp_w, wo_t, bo_2d)
    return out


def calibrated_spectral_mixer_reference(x, params, *, H, W, heads, dim_head, freq_num):
    """Pure-JAX reference matching the PyTorch forward (eval mode)."""
    (wfx_conv, bfx, wx_conv, bx, wg, bg, temp, inver,
     ln_w, ln_b, mlp_w, wo, bo) = params
    B, N, C = x.shape
    hi = jax.lax.Precision.HIGHEST
    x_img = x.reshape(B, H, W, C).transpose(0, 3, 1, 2)          # NCHW

    def conv(w, b):
        y = jax.lax.conv_general_dilated(
            x_img, w, (1, 1), ((1, 1), (1, 1)),
            dimension_numbers=("NCHW", "OIHW", "NCHW"), precision=hi)
        return y + b[None, :, None, None]

    def to_heads(t):
        return t.transpose(0, 2, 3, 1).reshape(B, N, heads, dim_head).transpose(0, 2, 1, 3)

    fx_mid = to_heads(conv(wfx_conv, bfx))                       # (B, h, N, Dh)
    x_mid = to_heads(conv(wx_conv, bx))

    temp_c = jnp.clip(temp, 0.1, 5.0)                            # (1, h, 1, 1)
    logits = jnp.einsum('bhnd,fd->bhnf', x_mid, wg, precision=hi) + bg
    gates = jax.nn.softmax(logits / temp_c, axis=-1)
    eigens = gates * inver[None, None]                           # (B, h, N, F)

    sf = jnp.einsum('bhnc,bhng->bhgc', fx_mid, eigens, precision=hi)
    mean = sf.mean(axis=(-2, -1), keepdims=True)
    var = ((sf - mean) ** 2).mean(axis=(-2, -1), keepdims=True)
    sf_n = (sf - mean) * jax.lax.rsqrt(var + 1e-5) * ln_w + ln_b

    out_sp = jnp.einsum('bhgi,io->bhgo', sf_n, mlp_w, precision=hi)
    out_x = jnp.einsum('bhgc,bhng->bhnc', out_sp, eigens, precision=hi)
    out_x = out_x.transpose(0, 2, 1, 3).reshape(B, N, heads * dim_head)
    return jnp.dot(out_x, wo.T, precision=hi) + bo


if __name__ == "__main__":
    # Small shapes consistent with the module: B=2, H=16, W=8 (N=128 points),
    # dim=64, heads=4, dim_head=32 (inner_dim=128), freq_num=32, kernelsize=3.
    B = 2
    H, W = 16, 8
    N = H * W
    dim = 64
    heads, dim_head = 4, 32
    freq_num = 32
    inner = heads * dim_head

    key = jax.random.PRNGKey(0)
    ks = jax.random.split(key, 13)

    bc = 1.0 / math.sqrt(dim * 9)          # conv fan-in bound
    bl = 1.0 / math.sqrt(dim_head)
    bout = 1.0 / math.sqrt(inner)

    wfx_conv = jax.random.uniform(ks[0], (inner, dim, 3, 3), jnp.float32, -bc, bc)
    bfx = jax.random.uniform(ks[1], (inner,), jnp.float32, -bc, bc)
    wx_conv = jax.random.uniform(ks[2], (inner, dim, 3, 3), jnp.float32, -bc, bc)
    bx = jax.random.uniform(ks[3], (inner,), jnp.float32, -bc, bc)
    wg = jax.random.uniform(ks[4], (freq_num, dim_head), jnp.float32, -bl, bl)
    bg = jax.random.uniform(ks[5], (freq_num,), jnp.float32, -bl, bl)
    temp = jax.random.uniform(ks[6], (1, heads, 1, 1), jnp.float32, 0.05, 6.0)
    ln_w = 1.0 + 0.1 * jax.random.normal(ks[7], (freq_num, dim_head), jnp.float32)
    ln_b = 0.1 * jax.random.normal(ks[8], (freq_num, dim_head), jnp.float32)
    mlp_w = jax.random.uniform(ks[9], (dim_head, dim_head), jnp.float32, -bl, bl)
    wo = jax.random.uniform(ks[10], (dim, inner), jnp.float32, -bout, bout)
    bo = jax.random.uniform(ks[11], (dim,), jnp.float32, -bout, bout)

    base = _grid_spectral_points(H, W, freq_num + 3)[:, :freq_num]
    base = base / np.maximum(np.linalg.norm(base, axis=-1, keepdims=True), 1e-12)
    inver = jnp.asarray(base)                                     # (N, F), L2-normalized rows

    params = (wfx_conv, bfx, wx_conv, bx, wg, bg, temp, inver,
              ln_w, ln_b, mlp_w, wo, bo)

    x = jax.random.normal(ks[12], (B, N, dim), jnp.float32)

    y = calibrated_spectral_mixer_pallas(
        x, params, H=H, W=W, heads=heads, dim_head=dim_head, freq_num=freq_num)
    y = jax.block_until_ready(y)

    y_ref = calibrated_spectral_mixer_reference(
        x, params, H=H, W=W, heads=heads, dim_head=dim_head, freq_num=freq_num)

    assert y.shape == (B, N, dim)
    assert jnp.allclose(y, y_ref, atol=2e-3, rtol=2e-3), \
        f"mismatch vs reference: max abs err = {float(jnp.max(jnp.abs(y - y_ref)))}"
    print("KERNEL_OK")
</pallas_src>

<mosaic_0001>
module attributes {stable_mosaic.version = 11 : i64} {
  func.func @_csm_kernel(%arg0: i32, %arg1: memref<1x128x576xf32, #tpu.memory_space<vmem>>, %arg2: memref<576x256xf32, #tpu.memory_space<vmem>>, %arg3: memref<1x256xf32, #tpu.memory_space<vmem>>, %arg4: memref<4x32x32xf32, #tpu.memory_space<vmem>>, %arg5: memref<4x1x32xf32, #tpu.memory_space<vmem>>, %arg6: memref<128x32xf32, #tpu.memory_space<vmem>>, %arg7: memref<32x32xf32, #tpu.memory_space<vmem>>, %arg8: memref<32x32xf32, #tpu.memory_space<vmem>>, %arg9: memref<32x32xf32, #tpu.memory_space<vmem>>, %arg10: memref<128x64xf32, #tpu.memory_space<vmem>>, %arg11: memref<1x64xf32, #tpu.memory_space<vmem>>, %arg12: memref<1x128x64xf32, #tpu.memory_space<vmem>>) attributes {dimension_semantics = [#tpu.dimension_semantics<parallel>], iteration_bounds = array<i64: 2>, scalar_prefetch = 0 : i64, scratch_operands = 0 : i64, tpu.core_type = #tpu.core_type<tc>, window_params = [{transform_indices = @transform_0, window_bounds = array<i64: 1, 128, 576>}, {pipeline_mode = #tpu.pipeline_mode<synchronous>, transform_indices = @transform_1, window_bounds = array<i64: 576, 256>}, {pipeline_mode = #tpu.pipeline_mode<synchronous>, transform_indices = @transform_2, window_bounds = array<i64: 1, 256>}, {pipeline_mode = #tpu.pipeline_mode<synchronous>, transform_indices = @transform_3, window_bounds = array<i64: 4, 32, 32>}, {pipeline_mode = #tpu.pipeline_mode<synchronous>, transform_indices = @transform_4, window_bounds = array<i64: 4, 1, 32>}, {pipeline_mode = #tpu.pipeline_mode<synchronous>, transform_indices = @transform_5, window_bounds = array<i64: 128, 32>}, {pipeline_mode = #tpu.pipeline_mode<synchronous>, transform_indices = @transform_6, window_bounds = array<i64: 32, 32>}, {pipeline_mode = #tpu.pipeline_mode<synchronous>, transform_indices = @transform_7, window_bounds = array<i64: 32, 32>}, {pipeline_mode = #tpu.pipeline_mode<synchronous>, transform_indices = @transform_8, window_bounds = array<i64: 32, 32>}, {pipeline_mode = #tpu.pipeline_mode<synchronous>, transform_indices = @transform_9, window_bounds = array<i64: 128, 64>}, {pipeline_mode = #tpu.pipeline_mode<synchronous>, transform_indices = @transform_10, window_bounds = array<i64: 1, 64>}, {transform_indices = @transform_11, window_bounds = array<i64: 1, 128, 64>}]} {
    %c0 = arith.constant 0 : index
    %c0_0 = arith.constant 0 : index
    %c0_1 = arith.constant 0 : index
    %0 = vector.load %arg1[%c0, %c0_0, %c0_1] : memref<1x128x576xf32, #tpu.memory_space<vmem>>, vector<1x128x576xf32>
    %1 = vector.shape_cast %0 : vector<1x128x576xf32> to vector<128x576xf32>
    %c0_2 = arith.constant 0 : index
    %c0_3 = arith.constant 0 : index
    %2 = vector.load %arg2[%c0_2, %c0_3] : memref<576x256xf32, #tpu.memory_space<vmem>>, vector<576x256xf32>
    %cst = arith.constant dense<0.000000e+00> : vector<128x256xf32>
    %3 = tpu.matmul %1, %2, %cst {dimension_numbers = #tpu.dot_dimension_numbers<[1], [0], [0], [1], [0, 0, 1, 1], [], []>} : vector<128x576xf32>, vector<576x256xf32>, vector<128x256xf32> -> vector<128x256xf32>
    %c0_4 = arith.constant 0 : index
    %c0_5 = arith.constant 0 : index
    %4 = vector.load %arg3[%c0_4, %c0_5] : memref<1x256xf32, #tpu.memory_space<vmem>>, vector<1x256xf32>
    %5 = vector.broadcast %4 : vector<1x256xf32> to vector<128x256xf32>
    %6 = arith.addf %3, %5 : vector<128x256xf32>
    %c0_6 = arith.constant 0 : index
    %c0_7 = arith.constant 0 : index
    %7 = vector.load %arg6[%c0_6, %c0_7] : memref<128x32xf32, #tpu.memory_space<vmem>>, vector<128x32xf32>
    %c0_8 = arith.constant 0 : index
    %c0_9 = arith.constant 0 : index
    %8 = vector.load %arg7[%c0_8, %c0_9] : memref<32x32xf32, #tpu.memory_space<vmem>>, vector<32x32xf32>
    %c0_10 = arith.constant 0 : index
    %c0_11 = arith.constant 0 : index
    %9 = vector.load %arg8[%c0_10, %c0_11] : memref<32x32xf32, #tpu.memory_space<vmem>>, vector<32x32xf32>
    %c0_12 = arith.constant 0 : index
    %c0_13 = arith.constant 0 : index
    %10 = vector.load %arg9[%c0_12, %c0_13] : memref<32x32xf32, #tpu.memory_space<vmem>>, vector<32x32xf32>
    %11 = vector.extract_strided_slice %6 {offsets = [0, 0], sizes = [128, 32], strides = [1, 1]} : vector<128x256xf32> to vector<128x32xf32>
    %12 = vector.extract_strided_slice %6 {offsets = [0, 128], sizes = [128, 32], strides = [1, 1]} : vector<128x256xf32> to vector<128x32xf32>
    %c0_14 = arith.constant 0 : index
    %c0_15 = arith.constant 0 : index
    %c0_16 = arith.constant 0 : index
    %13 = vector.load %arg4[%c0_14, %c0_15, %c0_16] : memref<4x32x32xf32, #tpu.memory_space<vmem>>, vector<1x32x32xf32>
    %14 = vector.shape_cast %13 : vector<1x32x32xf32> to vector<32x32xf32>
    %cst_17 = arith.constant dense<0.000000e+00> : vector<128x32xf32>
    %15 = tpu.matmul %12, %14, %cst_17 {dimension_numbers = #tpu.dot_dimension_numbers<[1], [0], [0], [1], [0, 0, 1, 1], [], []>} : vector<128x32xf32>, vector<32x32xf32>, vector<128x32xf32> -> vector<128x32xf32>
    %c0_18 = arith.constant 0 : index
    %c0_19 = arith.constant 0 : index
    %c0_20 = arith.constant 0 : index
    %16 = vector.load %arg5[%c0_18, %c0_19, %c0_20] : memref<4x1x32xf32, #tpu.memory_space<vmem>>, vector<1x1x32xf32>
    %17 = vector.shape_cast %16 : vector<1x1x32xf32> to vector<1x32xf32>
    %18 = vector.broadcast %17 : vector<1x32xf32> to vector<128x32xf32>
    %19 = arith.addf %15, %18 : vector<128x32xf32>
    %cst_21 = arith.constant dense<0xFF800000> : vector<128xf32>
    %20 = vector.multi_reduction <maximumf>, %19, %cst_21 [1] : vector<128x32xf32> to vector<128xf32>
    %21 = vector.shape_cast %20 : vector<128xf32> to vector<128x1xf32>
    %22 = vector.broadcast %21 : vector<128x1xf32> to vector<128x32xf32>
    %23 = arith.subf %19, %22 : vector<128x32xf32>
    %24 = math.exp %23 : vector<128x32xf32>
    %cst_22 = arith.constant dense<0.000000e+00> : vector<128xf32>
    %25 = vector.multi_reduction <add>, %24, %cst_22 [1] : vector<128x32xf32> to vector<128xf32>
    %26 = vector.shape_cast %25 : vector<128xf32> to vector<128x1xf32>
    %27 = tpu.reciprocal %26 {approx = true} : vector<128x1xf32> -> vector<128x1xf32>
    %28 = vector.broadcast %27 : vector<128x1xf32> to vector<128x32xf32>
    %29 = arith.mulf %24, %28 : vector<128x32xf32>
    %30 = arith.mulf %29, %7 : vector<128x32xf32>
    %cst_23 = arith.constant dense<0.000000e+00> : vector<32x32xf32>
    %31 = tpu.matmul %30, %11, %cst_23 {dimension_numbers = #tpu.dot_dimension_numbers<[0], [0], [1], [1], [0, 1, 1, 1], [], []>} : vector<128x32xf32>, vector<128x32xf32>, vector<32x32xf32> -> vector<32x32xf32>
    %cst_24 = arith.constant dense<0.000000e+00> : vector<32xf32>
    %32 = vector.multi_reduction <add>, %31, %cst_24 [1] : vector<32x32xf32> to vector<32xf32>
    %33 = vector.shape_cast %32 : vector<32xf32> to vector<32x1xf32>
    %cst_25 = arith.constant dense<0.000000e+00> : vector<1xf32>
    %34 = vector.multi_reduction <add>, %33, %cst_25 [0] : vector<32x1xf32> to vector<1xf32>
    %35 = vector.shape_cast %34 : vector<1xf32> to vector<1x1xf32>
    %cst_26 = arith.constant 1.024000e+03 : f32
    %36 = vector.broadcast %cst_26 : f32 to vector<1x1xf32>
    %37 = arith.divf %35, %36 : vector<1x1xf32>
    %38 = vector.broadcast %37 : vector<1x1xf32> to vector<32x32xf32>
    %39 = arith.subf %31, %38 : vector<32x32xf32>
    %40 = arith.mulf %39, %39 : vector<32x32xf32>
    %cst_27 = arith.constant dense<0.000000e+00> : vector<32xf32>
    %41 = vector.multi_reduction <add>, %40, %cst_27 [1] : vector<32x32xf32> to vector<32xf32>
    %42 = vector.shape_cast %41 : vector<32xf32> to vector<32x1xf32>
    %cst_28 = arith.constant dense<0.000000e+00> : vector<1xf32>
    %43 = vector.multi_reduction <add>, %42, %cst_28 [0] : vector<32x1xf32> to vector<1xf32>
    %44 = vector.shape_cast %43 : vector<1xf32> to vector<1x1xf32>
    %cst_29 = arith.constant 1.024000e+03 : f32
    %45 = vector.broadcast %cst_29 : f32 to vector<1x1xf32>
    %46 = arith.divf %44, %45 : vector<1x1xf32>
    %cst_30 = arith.constant 9.99999974E-6 : f32
    %47 = vector.broadcast %cst_30 : f32 to vector<1x1xf32>
    %48 = arith.addf %46, %47 : vector<1x1xf32>
    %49 = math.rsqrt %48 : vector<1x1xf32>
    %50 = vector.broadcast %49 : vector<1x1xf32> to vector<32x32xf32>
    %51 = arith.mulf %39, %50 : vector<32x32xf32>
    %52 = arith.mulf %51, %8 : vector<32x32xf32>
    %53 = arith.addf %52, %9 : vector<32x32xf32>
    %cst_31 = arith.constant dense<0.000000e+00> : vector<32x32xf32>
    %54 = tpu.matmul %53, %10, %cst_31 {dimension_numbers = #tpu.dot_dimension_numbers<[1], [0], [0], [1], [0, 0, 1, 1], [], []>} : vector<32x32xf32>, vector<32x32xf32>, vector<32x32xf32> -> vector<32x32xf32>
    %cst_32 = arith.constant dense<0.000000e+00> : vector<128x32xf32>
    %55 = tpu.matmul %30, %54, %cst_32 {dimension_numbers = #tpu.dot_dimension_numbers<[1], [0], [0], [1], [0, 0, 1, 1], [], []>} : vector<128x32xf32>, vector<32x32xf32>, vector<128x32xf32> -> vector<128x32xf32>
    %56 = vector.extract_strided_slice %6 {offsets = [0, 32], sizes = [128, 32], strides = [1, 1]} : vector<128x256xf32> to vector<128x32xf32>
    %57 = vector.extract_strided_slice %6 {offsets = [0, 160], sizes = [128, 32], strides = [1, 1]} : vector<128x256xf32> to vector<128x32xf32>
    %c1 = arith.constant 1 : index
    %c0_33 = arith.constant 0 : index
    %c0_34 = arith.constant 0 : index
    %58 = vector.load %arg4[%c1, %c0_33, %c0_34] : memref<4x32x32xf32, #tpu.memory_space<vmem>>, vector<1x32x32xf32>
    %59 = vector.shape_cast %58 : vector<1x32x32xf32> to vector<32x32xf32>
    %cst_35 = arith.constant dense<0.000000e+00> : vector<128x32xf32>
    %60 = tpu.matmul %57, %59, %cst_35 {dimension_numbers = #tpu.dot_dimension_numbers<[1], [0], [0], [1], [0, 0, 1, 1], [], []>} : vector<128x32xf32>, vector<32x32xf32>, vector<128x32xf32> -> vector<128x32xf32>
    %c1_36 = arith.constant 1 : index
    %c0_37 = arith.constant 0 : index
    %c0_38 = arith.constant 0 : index
    %61 = vector.load %arg5[%c1_36, %c0_37, %c0_38] : memref<4x1x32xf32, #tpu.memory_space<vmem>>, vector<1x1x32xf32>
    %62 = vector.shape_cast %61 : vector<1x1x32xf32> to vector<1x32xf32>
    %63 = vector.broadcast %62 : vector<1x32xf32> to vector<128x32xf32>
    %64 = arith.addf %60, %63 : vector<128x32xf32>
    %cst_39 = arith.constant dense<0xFF800000> : vector<128xf32>
    %65 = vector.multi_reduction <maximumf>, %64, %cst_39 [1] : vector<128x32xf32> to vector<128xf32>
    %66 = vector.shape_cast %65 : vector<128xf32> to vector<128x1xf32>
    %67 = vector.broadcast %66 : vector<128x1xf32> to vector<128x32xf32>
    %68 = arith.subf %64, %67 : vector<128x32xf32>
    %69 = math.exp %68 : vector<128x32xf32>
    %cst_40 = arith.constant dense<0.000000e+00> : vector<128xf32>
    %70 = vector.multi_reduction <add>, %69, %cst_40 [1] : vector<128x32xf32> to vector<128xf32>
    %71 = vector.shape_cast %70 : vector<128xf32> to vector<128x1xf32>
    %72 = tpu.reciprocal %71 {approx = true} : vector<128x1xf32> -> vector<128x1xf32>
    %73 = vector.broadcast %72 : vector<128x1xf32> to vector<128x32xf32>
    %74 = arith.mulf %69, %73 : vector<128x32xf32>
    %75 = arith.mulf %74, %7 : vector<128x32xf32>
    %cst_41 = arith.constant dense<0.000000e+00> : vector<32x32xf32>
    %76 = tpu.matmul %75, %56, %cst_41 {dimension_numbers = #tpu.dot_dimension_numbers<[0], [0], [1], [1], [0, 1, 1, 1], [], []>} : vector<128x32xf32>, vector<128x32xf32>, vector<32x32xf32> -> vector<32x32xf32>
    %cst_42 = arith.constant dense<0.000000e+00> : vector<32xf32>
    %77 = vector.multi_reduction <add>, %76, %cst_42 [1] : vector<32x32xf32> to vector<32xf32>
    %78 = vector.shape_cast %77 : vector<32xf32> to vector<32x1xf32>
    %cst_43 = arith.constant dense<0.000000e+00> : vector<1xf32>
    %79 = vector.multi_reduction <add>, %78, %cst_43 [0] : vector<32x1xf32> to vector<1xf32>
    %80 = vector.shape_cast %79 : vector<1xf32> to vector<1x1xf32>
    %cst_44 = arith.constant 1.024000e+03 : f32
    %81 = vector.broadcast %cst_44 : f32 to vector<1x1xf32>
    %82 = arith.divf %80, %81 : vector<1x1xf32>
    %83 = vector.broadcast %82 : vector<1x1xf32> to vector<32x32xf32>
    %84 = arith.subf %76, %83 : vector<32x32xf32>
    %85 = arith.mulf %84, %84 : vector<32x32xf32>
    %cst_45 = arith.constant dense<0.000000e+00> : vector<32xf32>
    %86 = vector.multi_reduction <add>, %85, %cst_45 [1] : vector<32x32xf32> to vector<32xf32>
    %87 = vector.shape_cast %86 : vector<32xf32> to vector<32x1xf32>
    %cst_46 = arith.constant dense<0.000000e+00> : vector<1xf32>
    %88 = vector.multi_reduction <add>, %87, %cst_46 [0] : vector<32x1xf32> to vector<1xf32>
    %89 = vector.shape_cast %88 : vector<1xf32> to vector<1x1xf32>
    %cst_47 = arith.constant 1.024000e+03 : f32
    %90 = vector.broadcast %cst_47 : f32 to vector<1x1xf32>
    %91 = arith.divf %89, %90 : vector<1x1xf32>
    %cst_48 = arith.constant 9.99999974E-6 : f32
    %92 = vector.broadcast %cst_48 : f32 to vector<1x1xf32>
    %93 = arith.addf %91, %92 : vector<1x1xf32>
    %94 = math.rsqrt %93 : vector<1x1xf32>
    %95 = vector.broadcast %94 : vector<1x1xf32> to vector<32x32xf32>
    %96 = arith.mulf %84, %95 : vector<32x32xf32>
    %97 = arith.mulf %96, %8 : vector<32x32xf32>
    %98 = arith.addf %97, %9 : vector<32x32xf32>
    %cst_49 = arith.constant dense<0.000000e+00> : vector<32x32xf32>
    %99 = tpu.matmul %98, %10, %cst_49 {dimension_numbers = #tpu.dot_dimension_numbers<[1], [0], [0], [1], [0, 0, 1, 1], [], []>} : vector<32x32xf32>, vector<32x32xf32>, vector<32x32xf32> -> vector<32x32xf32>
    %cst_50 = arith.constant dense<0.000000e+00> : vector<128x32xf32>
    %100 = tpu.matmul %75, %99, %cst_50 {dimension_numbers = #tpu.dot_dimension_numbers<[1], [0], [0], [1], [0, 0, 1, 1], [], []>} : vector<128x32xf32>, vector<32x32xf32>, vector<128x32xf32> -> vector<128x32xf32>
    %101 = vector.extract_strided_slice %6 {offsets = [0, 64], sizes = [128, 32], strides = [1, 1]} : vector<128x256xf32> to vector<128x32xf32>
    %102 = vector.extract_strided_slice %6 {offsets = [0, 192], sizes = [128, 32], strides = [1, 1]} : vector<128x256xf32> to vector<128x32xf32>
    %c2 = arith.constant 2 : index
    %c0_51 = arith.constant 0 : index
    %c0_52 = arith.constant 0 : index
    %103 = vector.load %arg4[%c2, %c0_51, %c0_52] : memref<4x32x32xf32, #tpu.memory_space<vmem>>, vector<1x32x32xf32>
    %104 = vector.shape_cast %103 : vector<1x32x32xf32> to vector<32x32xf32>
    %cst_53 = arith.constant dense<0.000000e+00> : vector<128x32xf32>
    %105 = tpu.matmul %102, %104, %cst_53 {dimension_numbers = #tpu.dot_dimension_numbers<[1], [0], [0], [1], [0, 0, 1, 1], [], []>} : vector<128x32xf32>, vector<32x32xf32>, vector<128x32xf32> -> vector<128x32xf32>
    %c2_54 = arith.constant 2 : index
    %c0_55 = arith.constant 0 : index
    %c0_56 = arith.constant 0 : index
    %106 = vector.load %arg5[%c2_54, %c0_55, %c0_56] : memref<4x1x32xf32, #tpu.memory_space<vmem>>, vector<1x1x32xf32>
    %107 = vector.shape_cast %106 : vector<1x1x32xf32> to vector<1x32xf32>
    %108 = vector.broadcast %107 : vector<1x32xf32> to vector<128x32xf32>
    %109 = arith.addf %105, %108 : vector<128x32xf32>
    %cst_57 = arith.constant dense<0xFF800000> : vector<128xf32>
    %110 = vector.multi_reduction <maximumf>, %109, %cst_57 [1] : vector<128x32xf32> to vector<128xf32>
    %111 = vector.shape_cast %110 : vector<128xf32> to vector<128x1xf32>
    %112 = vector.broadcast %111 : vector<128x1xf32> to vector<128x32xf32>
    %113 = arith.subf %109, %112 : vector<128x32xf32>
    %114 = math.exp %113 : vector<128x32xf32>
    %cst_58 = arith.constant dense<0.000000e+00> : vector<128xf32>
    %115 = vector.multi_reduction <add>, %114, %cst_58 [1] : vector<128x32xf32> to vector<128xf32>
    %116 = vector.shape_cast %115 : vector<128xf32> to vector<128x1xf32>
    %117 = tpu.reciprocal %116 {approx = true} : vector<128x1xf32> -> vector<128x1xf32>
    %118 = vector.broadcast %117 : vector<128x1xf32> to vector<128x32xf32>
    %119 = arith.mulf %114, %118 : vector<128x32xf32>
    %120 = arith.mulf %119, %7 : vector<128x32xf32>
    %cst_59 = arith.constant dense<0.000000e+00> : vector<32x32xf32>
    %121 = tpu.matmul %120, %101, %cst_59 {dimension_numbers = #tpu.dot_dimension_numbers<[0], [0], [1], [1], [0, 1, 1, 1], [], []>} : vector<128x32xf32>, vector<128x32xf32>, vector<32x32xf32> -> vector<32x32xf32>
    %cst_60 = arith.constant dense<0.000000e+00> : vector<32xf32>
    %122 = vector.multi_reduction <add>, %121, %cst_60 [1] : vector<32x32xf32> to vector<32xf32>
    %123 = vector.shape_cast %122 : vector<32xf32> to vector<32x1xf32>
    %cst_61 = arith.constant dense<0.000000e+00> : vector<1xf32>
    %124 = vector.multi_reduction <add>, %123, %cst_61 [0] : vector<32x1xf32> to vector<1xf32>
    %125 = vector.shape_cast %124 : vector<1xf32> to vector<1x1xf32>
    %cst_62 = arith.constant 1.024000e+03 : f32
    %126 = vector.broadcast %cst_62 : f32 to vector<1x1xf32>
    %127 = arith.divf %125, %126 : vector<1x1xf32>
    %128 = vector.broadcast %127 : vector<1x1xf32> to vector<32x32xf32>
    %129 = arith.subf %121, %128 : vector<32x32xf32>
    %130 = arith.mulf %129, %129 : vector<32x32xf32>
    %cst_63 = arith.constant dense<0.000000e+00> : vector<32xf32>
    %131 = vector.multi_reduction <add>, %130, %cst_63 [1] : vector<32x32xf32> to vector<32xf32>
    %132 = vector.shape_cast %131 : vector<32xf32> to vector<32x1xf32>
    %cst_64 = arith.constant dense<0.000000e+00> : vector<1xf32>
    %133 = vector.multi_reduction <add>, %132, %cst_64 [0] : vector<32x1xf32> to vector<1xf32>
    %134 = vector.shape_cast %133 : vector<1xf32> to vector<1x1xf32>
    %cst_65 = arith.constant 1.024000e+03 : f32
    %135 = vector.broadcast %cst_65 : f32 to vector<1x1xf32>
    %136 = arith.divf %134, %135 : vector<1x1xf32>
    %cst_66 = arith.constant 9.99999974E-6 : f32
    %137 = vector.broadcast %cst_66 : f32 to vector<1x1xf32>
    %138 = arith.addf %136, %137 : vector<1x1xf32>
    %139 = math.rsqrt %138 : vector<1x1xf32>
    %140 = vector.broadcast %139 : vector<1x1xf32> to vector<32x32xf32>
    %141 = arith.mulf %129, %140 : vector<32x32xf32>
    %142 = arith.mulf %141, %8 : vector<32x32xf32>
    %143 = arith.addf %142, %9 : vector<32x32xf32>
    %cst_67 = arith.constant dense<0.000000e+00> : vector<32x32xf32>
    %144 = tpu.matmul %143, %10, %cst_67 {dimension_numbers = #tpu.dot_dimension_numbers<[1], [0], [0], [1], [0, 0, 1, 1], [], []>} : vector<32x32xf32>, vector<32x32xf32>, vector<32x32xf32> -> vector<32x32xf32>
    %cst_68 = arith.constant dense<0.000000e+00> : vector<128x32xf32>
    %145 = tpu.matmul %120, %144, %cst_68 {dimension_numbers = #tpu.dot_dimension_numbers<[1], [0], [0], [1], [0, 0, 1, 1], [], []>} : vector<128x32xf32>, vector<32x32xf32>, vector<128x32xf32> -> vector<128x32xf32>
    %146 = vector.extract_strided_slice %6 {offsets = [0, 96], sizes = [128, 32], strides = [1, 1]} : vector<128x256xf32> to vector<128x32xf32>
    %147 = vector.extract_strided_slice %6 {offsets = [0, 224], sizes = [128, 32], strides = [1, 1]} : vector<128x256xf32> to vector<128x32xf32>
    %c3 = arith.constant 3 : index
    %c0_69 = arith.constant 0 : index
    %c0_70 = arith.constant 0 : index
    %148 = vector.load %arg4[%c3, %c0_69, %c0_70] : memref<4x32x32xf32, #tpu.memory_space<vmem>>, vector<1x32x32xf32>
    %149 = vector.shape_cast %148 : vector<1x32x32xf32> to vector<32x32xf32>
    %cst_71 = arith.constant dense<0.000000e+00> : vector<128x32xf32>
    %150 = tpu.matmul %147, %149, %cst_71 {dimension_numbers = #tpu.dot_dimension_numbers<[1], [0], [0], [1], [0, 0, 1, 1], [], []>} : vector<128x32xf32>, vector<32x32xf32>, vector<128x32xf32> -> vector<128x32xf32>
    %c3_72 = arith.constant 3 : index
    %c0_73 = arith.constant 0 : index
    %c0_74 = arith.constant 0 : index
    %151 = vector.load %arg5[%c3_72, %c0_73, %c0_74] : memref<4x1x32xf32, #tpu.memory_space<vmem>>, vector<1x1x32xf32>
    %152 = vector.shape_cast %151 : vector<1x1x32xf32> to vector<1x32xf32>
    %153 = vector.broadcast %152 : vector<1x32xf32> to vector<128x32xf32>
    %154 = arith.addf %150, %153 : vector<128x32xf32>
    %cst_75 = arith.constant dense<0xFF800000> : vector<128xf32>
    %155 = vector.multi_reduction <maximumf>, %154, %cst_75 [1] : vector<128x32xf32> to vector<128xf32>
    %156 = vector.shape_cast %155 : vector<128xf32> to vector<128x1xf32>
    %157 = vector.broadcast %156 : vector<128x1xf32> to vector<128x32xf32>
    %158 = arith.subf %154, %157 : vector<128x32xf32>
    %159 = math.exp %158 : vector<128x32xf32>
    %cst_76 = arith.constant dense<0.000000e+00> : vector<128xf32>
    %160 = vector.multi_reduction <add>, %159, %cst_76 [1] : vector<128x32xf32> to vector<128xf32>
    %161 = vector.shape_cast %160 : vector<128xf32> to vector<128x1xf32>
    %162 = tpu.reciprocal %161 {approx = true} : vector<128x1xf32> -> vector<128x1xf32>
    %163 = vector.broadcast %162 : vector<128x1xf32> to vector<128x32xf32>
    %164 = arith.mulf %159, %163 : vector<128x32xf32>
    %165 = arith.mulf %164, %7 : vector<128x32xf32>
    %cst_77 = arith.constant dense<0.000000e+00> : vector<32x32xf32>
    %166 = tpu.matmul %165, %146, %cst_77 {dimension_numbers = #tpu.dot_dimension_numbers<[0], [0], [1], [1], [0, 1, 1, 1], [], []>} : vector<128x32xf32>, vector<128x32xf32>, vector<32x32xf32> -> vector<32x32xf32>
    %cst_78 = arith.constant dense<0.000000e+00> : vector<32xf32>
    %167 = vector.multi_reduction <add>, %166, %cst_78 [1] : vector<32x32xf32> to vector<32xf32>
    %168 = vector.shape_cast %167 : vector<32xf32> to vector<32x1xf32>
    %cst_79 = arith.constant dense<0.000000e+00> : vector<1xf32>
    %169 = vector.multi_reduction <add>, %168, %cst_79 [0] : vector<32x1xf32> to vector<1xf32>
    %170 = vector.shape_cast %169 : vector<1xf32> to vector<1x1xf32>
    %cst_80 = arith.constant 1.024000e+03 : f32
    %171 = vector.broadcast %cst_80 : f32 to vector<1x1xf32>
    %172 = arith.divf %170, %171 : vector<1x1xf32>
    %173 = vector.broadcast %172 : vector<1x1xf32> to vector<32x32xf32>
    %174 = arith.subf %166, %173 : vector<32x32xf32>
    %175 = arith.mulf %174, %174 : vector<32x32xf32>
    %cst_81 = arith.constant dense<0.000000e+00> : vector<32xf32>
    %176 = vector.multi_reduction <add>, %175, %cst_81 [1] : vector<32x32xf32> to vector<32xf32>
    %177 = vector.shape_cast %176 : vector<32xf32> to vector<32x1xf32>
    %cst_82 = arith.constant dense<0.000000e+00> : vector<1xf32>
    %178 = vector.multi_reduction <add>, %177, %cst_82 [0] : vector<32x1xf32> to vector<1xf32>
    %179 = vector.shape_cast %178 : vector<1xf32> to vector<1x1xf32>
    %cst_83 = arith.constant 1.024000e+03 : f32
    %180 = vector.broadcast %cst_83 : f32 to vector<1x1xf32>
    %181 = arith.divf %179, %180 : vector<1x1xf32>
    %cst_84 = arith.constant 9.99999974E-6 : f32
    %182 = vector.broadcast %cst_84 : f32 to vector<1x1xf32>
    %183 = arith.addf %181, %182 : vector<1x1xf32>
    %184 = math.rsqrt %183 : vector<1x1xf32>
    %185 = vector.broadcast %184 : vector<1x1xf32> to vector<32x32xf32>
    %186 = arith.mulf %174, %185 : vector<32x32xf32>
    %187 = arith.mulf %186, %8 : vector<32x32xf32>
    %188 = arith.addf %187, %9 : vector<32x32xf32>
    %cst_85 = arith.constant dense<0.000000e+00> : vector<32x32xf32>
    %189 = tpu.matmul %188, %10, %cst_85 {dimension_numbers = #tpu.dot_dimension_numbers<[1], [0], [0], [1], [0, 0, 1, 1], [], []>} : vector<32x32xf32>, vector<32x32xf32>, vector<32x32xf32> -> vector<32x32xf32>
    %cst_86 = arith.constant dense<0.000000e+00> : vector<128x32xf32>
    %190 = tpu.matmul %165, %189, %cst_86 {dimension_numbers = #tpu.dot_dimension_numbers<[1], [0], [0], [1], [0, 0, 1, 1], [], []>} : vector<128x32xf32>, vector<32x32xf32>, vector<128x32xf32> -> vector<128x32xf32>
    %191 = tpu.concatenate %55, %100, %145, %190 in 1 : vector<128x32xf32>, vector<128x32xf32>, vector<128x32xf32>, vector<128x32xf32> -> vector<128x128xf32>
    %c0_87 = arith.constant 0 : index
    %c0_88 = arith.constant 0 : index
    %192 = vector.load %arg10[%c0_87, %c0_88] : memref<128x64xf32, #tpu.memory_space<vmem>>, vector<128x64xf32>
    %cst_89 = arith.constant dense<0.000000e+00> : vector<128x64xf32>
    %193 = tpu.matmul %191, %192, %cst_89 {dimension_numbers = #tpu.dot_dimension_numbers<[1], [0], [0], [1], [0, 0, 1, 1], [], []>} : vector<128x128xf32>, vector<128x64xf32>, vector<128x64xf32> -> vector<128x64xf32>
    %c0_90 = arith.constant 0 : index
    %c0_91 = arith.constant 0 : index
    %194 = vector.load %arg11[%c0_90, %c0_91] : memref<1x64xf32, #tpu.memory_space<vmem>>, vector<1x64xf32>
    %195 = vector.broadcast %194 : vector<1x64xf32> to vector<128x64xf32>
    %196 = arith.addf %193, %195 : vector<128x64xf32>
    %c0_92 = arith.constant 0 : index
    %c0_93 = arith.constant 0 : index
    %c0_94 = arith.constant 0 : index
    %197 = vector.load %arg12[%c0_92, %c0_93, %c0_94] : memref<1x128x64xf32, #tpu.memory_space<vmem>>, vector<1x128x64xf32>
    %198 = vector.shape_cast %197 : vector<1x128x64xf32> to vector<128x64xf32>
    %199 = vector.shape_cast %196 : vector<128x64xf32> to vector<1x128x64xf32>
    tpu.vector_store %arg12[%c0_92, %c0_93, %c0_94], %199 {strides = array<i32>} : memref<1x128x64xf32, #tpu.memory_space<vmem>>, vector<1x128x64xf32>,
    return
  }
  func.func @transform_0(%arg0: i32) -> (i32, i32, i32) {
    %c0_i32 = arith.constant 0 : i32
    %c0_i32_0 = arith.constant 0 : i32
    %c0_i32_1 = arith.constant 0 : i32
    return %arg0, %c0_i32, %c0_i32_0 : i32, i32, i32
  }
  func.func @transform_1(%arg0: i32) -> (i32, i32) {
    %c0_i32 = arith.constant 0 : i32
    %c0_i32_0 = arith.constant 0 : i32
    %c0_i32_1 = arith.constant 0 : i32
    return %c0_i32, %c0_i32_0 : i32, i32
  }
  func.func @transform_2(%arg0: i32) -> (i32, i32) {
    %c0_i32 = arith.constant 0 : i32
    %c0_i32_0 = arith.constant 0 : i32
    %c0_i32_1 = arith.constant 0 : i32
    return %c0_i32, %c0_i32_0 : i32, i32
  }
  func.func @transform_3(%arg0: i32) -> (i32, i32, i32) {
    %c0_i32 = arith.constant 0 : i32
    %c0_i32_0 = arith.constant 0 : i32
    %c0_i32_1 = arith.constant 0 : i32
    %c0_i32_2 = arith.constant 0 : i32
    return %c0_i32, %c0_i32_0, %c0_i32_1 : i32, i32, i32
  }
  func.func @transform_4(%arg0: i32) -> (i32, i32, i32) {
    %c0_i32 = arith.constant 0 : i32
    %c0_i32_0 = arith.constant 0 : i32
    %c0_i32_1 = arith.constant 0 : i32
    %c0_i32_2 = arith.constant 0 : i32
    return %c0_i32, %c0_i32_0, %c0_i32_1 : i32, i32, i32
  }
  func.func @transform_5(%arg0: i32) -> (i32, i32) {
    %c0_i32 = arith.constant 0 : i32
    %c0_i32_0 = arith.constant 0 : i32
    %c0_i32_1 = arith.constant 0 : i32
    return %c0_i32, %c0_i32_0 : i32, i32
  }
  func.func @transform_6(%arg0: i32) -> (i32, i32) {
    %c0_i32 = arith.constant 0 : i32
    %c0_i32_0 = arith.constant 0 : i32
    %c0_i32_1 = arith.constant 0 : i32
    return %c0_i32, %c0_i32_0 : i32, i32
  }
  func.func @transform_7(%arg0: i32) -> (i32, i32) {
    %c0_i32 = arith.constant 0 : i32
    %c0_i32_0 = arith.constant 0 : i32
    %c0_i32_1 = arith.constant 0 : i32
    return %c0_i32, %c0_i32_0 : i32, i32
  }
  func.func @transform_8(%arg0: i32) -> (i32, i32) {
    %c0_i32 = arith.constant 0 : i32
    %c0_i32_0 = arith.constant 0 : i32
    %c0_i32_1 = arith.constant 0 : i32
    return %c0_i32, %c0_i32_0 : i32, i32
  }
  func.func @transform_9(%arg0: i32) -> (i32, i32) {
    %c0_i32 = arith.constant 0 : i32
    %c0_i32_0 = arith.constant 0 : i32
    %c0_i32_1 = arith.constant 0 : i32
    return %c0_i32, %c0_i32_0 : i32, i32
  }
  func.func @transform_10(%arg0: i32) -> (i32, i32) {
    %c0_i32 = arith.constant 0 : i32
    %c0_i32_0 = arith.constant 0 : i32
    %c0_i32_1 = arith.constant 0 : i32
    return %c0_i32, %c0_i32_0 : i32, i32
  }
  func.func @transform_11(%arg0: i32) -> (i32, i32, i32) {
    %c0_i32 = arith.constant 0 : i32
    %c0_i32_0 = arith.constant 0 : i32
    %c0_i32_1 = arith.constant 0 : i32
    return %arg0, %c0_i32, %c0_i32_0 : i32, i32, i32
  }
}

</mosaic_0001>

<llo_original>
// kernel: tpu_custom_call.1
$region0: #{tpu_custom_call.1}
  #allocation0 [shape = 'u32[]', space=smem, size = 0x4, offset = 0x4, fixed_abs, tag = 'smem constant byte address 0x4 - core index']
  #allocation1 [shape = 'u32[144,128]{1,0:T(1,128)}', space=vmem, size = 0x12000, scoped, tag = 'internal scratch']
  %s0 = inlined_call_operand.vmem [shape: f32[2,128,576], index: 0, kind: input, shape index: {}]
  %s1 = inlined_call_operand.vmem [shape: f32[576,256], index: 1, kind: input, shape index: {}]
  %s2 = inlined_call_operand.vmem [shape: f32[1,256], index: 2, kind: input, shape index: {}]
  %s3 = inlined_call_operand.vmem [shape: f32[4,32,32], index: 3, kind: input, shape index: {}]
  %s4 = inlined_call_operand.vmem [shape: f32[4,1,32], index: 4, kind: input, shape index: {}]
  %s5 = inlined_call_operand.vmem [shape: f32[128,32], index: 5, kind: input, shape index: {}]
  %s6 = inlined_call_operand.vmem [shape: f32[32,32], index: 6, kind: input, shape index: {}]
  %s7 = inlined_call_operand.vmem [shape: f32[32,32], index: 7, kind: input, shape index: {}]
  %s8 = inlined_call_operand.vmem [shape: f32[32,32], index: 8, kind: input, shape index: {}]
  %s9 = inlined_call_operand.vmem [shape: f32[128,64], index: 9, kind: input, shape index: {}]
  %s10 = inlined_call_operand.vmem [shape: f32[1,64], index: 10, kind: input, shape index: {}]
  %s11 = inlined_call_operand.vmem [shape: f32[2,128,64], index: 11, kind: output, shape index: {}]
  %s12 = sld [smem:[#allocation0]]
  $region77: #{tpu_custom_call.1} parent=0
    _
  %s14 = ssub.s32 1, %s12
  %s15 = scalar_select 0, %s14, %s12
  loop: start=0, step=1, limit=4
  $region2: #{tpu_custom_call.1} parent=0 // loop_pre_header
    _
  $region3: #{tpu_custom_call.1} parent=0 // loop_header
    %s17 = sphi 0, %s21
    %p18 = scmp.ge.s32.totalorder %s17, 4
    %s27 = sphi 0, %s29
    %s30 = sphi 0, %s27
    %s31 = sphi 0, %s30
    %s47 = sphi 0, %s31
    %s51 = sphi 0, %s51
    %s53 = sphi 0, %s51
    %s54 = sphi 0, %s53
    %s68 = sphi 0, %s54
    %s72 = sphi 0, %s72
    %s74 = sphi 0, %s72
    %s75 = sphi 0, %s74
    %s89 = sphi 0, %s75
    %s93 = sphi 0, %s93
    %s95 = sphi 0, %s93
    %s96 = sphi 0, %s95
    %s110 = sphi 0, %s96
    %s114 = sphi 0, %s114
    %s116 = sphi 0, %s114
    %s117 = sphi 0, %s116
    %s131 = sphi 0, %s117
    %s135 = sphi 0, %s135
    %s137 = sphi 0, %s135
    %s138 = sphi 0, %s137
    %s152 = sphi 0, %s138
    %s156 = sphi 0, %s156
    %s158 = sphi 0, %s156
    %s159 = sphi 0, %s158
    %s173 = sphi 0, %s159
    %s177 = sphi 0, %s177
    %s179 = sphi 0, %s177
    %s180 = sphi 0, %s179
    %s194 = sphi 0, %s180
    %s198 = sphi 0, %s198
    %s200 = sphi 0, %s198
    %s201 = sphi 0, %s200
    %s215 = sphi 0, %s201
    %s219 = sphi 0, %s219
    %s221 = sphi 0, %s219
    %s222 = sphi 0, %s221
    %s236 = sphi 0, %s222
    %s240 = sphi 0, %s240
    %s242 = sphi 0, %s240
    %s243 = sphi 0, %s242
    %s257 = sphi 0, %s243
    %s263 = sphi 0, %s265
    %s266 = sphi 0, %s263
    %s267 = sphi 0, %s266
    %s283 = sphi 0, %s267
  $region4: #{tpu_custom_call.1} parent=0 // loop_header_branch
    %20 = sbr.rel (%p18) target = $region8
  $region5: #{tpu_custom_call.1} parent=0 // loop_body
    %s22 = ssub.s32 %s17, 1
    %s23 = ssub.s32 %s17, 2
    %s24 = sadd.s32 %s17, 1
    %s25 = ssub.s32 %s17, %s24
    %p26 = scmp.eq.s32.totalorder %s25, 0
    %s28 = sadd.s32 %s27, 1
    %s29 = scalar_select %p26, %s27, %s28
    %p32 = pneg %p26
    %p33 = scmp.eq.s32.totalorder %s17, 1
    %p34 = por %p32, %p33
    %p35 = scmp.ne.s32.totalorder %s27, %s30
    %p36 = scmp.eq.s32.totalorder %s17, 0
    %p37 = por %p35, %p36
    %p38 = scmp.ne.s32.totalorder %s27, %s30
    %p39 = scmp.eq.s32.totalorder %s22, 1
    %p40 = por %p38, %p39
    %p41 = scmp.ne.s32.totalorder %s30, %s31
    %p42 = scmp.eq.s32.totalorder %s22, 0
    %p43 = por %p41, %p42
    %p44 = scmp.ne.s32.totalorder %s30, %s31
    %p45 = scmp.eq.s32.totalorder %s23, 1
    %p46 = por %p44, %p45
    %p48 = scmp.ne.s32.totalorder %s31, %s47
    %p49 = scmp.eq.s32.totalorder %s23, 0
    %p50 = por %p48, %p49
    %s52 = sadd.s32 %s51, 1
    %p55 = scmp.eq.s32.totalorder %s17, 1
    %p56 = scmp.ne.s32.totalorder %s51, %s53
    %p57 = scmp.eq.s32.totalorder %s17, 0
    %p58 = por %p56, %p57
    %p59 = scmp.ne.s32.totalorder %s51, %s53
    %p60 = scmp.eq.s32.totalorder %s22, 1
    %p61 = por %p59, %p60
    %p62 = scmp.ne.s32.totalorder %s53, %s54
    %p63 = scmp.eq.s32.totalorder %s22, 0
    %p64 = por %p62, %p63
    %p65 = scmp.ne.s32.totalorder %s53, %s54
    %p66 = scmp.eq.s32.totalorder %s23, 1
    %p67 = por %p65, %p66
    %p69 = scmp.ne.s32.totalorder %s54, %s68
    %p70 = scmp.eq.s32.totalorder %s23, 0
    %p71 = por %p69, %p70
    %s73 = sadd.s32 %s72, 1
    %p76 = scmp.eq.s32.totalorder %s17, 1
    %p77 = scmp.ne.s32.totalorder %s72, %s74
    %p78 = scmp.eq.s32.totalorder %s17, 0
    %p79 = por %p77, %p78
    %p80 = scmp.ne.s32.totalorder %s72, %s74
    %p81 = scmp.eq.s32.totalorder %s22, 1
    %p82 = por %p80, %p81
    %p83 = scmp.ne.s32.totalorder %s74, %s75
    %p84 = scmp.eq.s32.totalorder %s22, 0
    %p85 = por %p83, %p84
    %p86 = scmp.ne.s32.totalorder %s74, %s75
    %p87 = scmp.eq.s32.totalorder %s23, 1
    %p88 = por %p86, %p87
    %p90 = scmp.ne.s32.totalorder %s75, %s89
    %p91 = scmp.eq.s32.totalorder %s23, 0
    %p92 = por %p90, %p91
    %s94 = sadd.s32 %s93, 1
    %p97 = scmp.eq.s32.totalorder %s17, 1
    %p98 = scmp.ne.s32.totalorder %s93, %s95
    %p99 = scmp.eq.s32.totalorder %s17, 0
    %p100 = por %p98, %p99
    %p101 = scmp.ne.s32.totalorder %s93, %s95
    %p102 = scmp.eq.s32.totalorder %s22, 1
    %p103 = por %p101, %p102
    %p104 = scmp.ne.s32.totalorder %s95, %s96
    %p105 = scmp.eq.s32.totalorder %s22, 0
    %p106 = por %p104, %p105
    %p107 = scmp.ne.s32.totalorder %s95, %s96
    %p108 = scmp.eq.s32.totalorder %s23, 1
    %p109 = por %p107, %p108
    %p111 = scmp.ne.s32.totalorder %s96, %s110
    %p112 = scmp.eq.s32.totalorder %s23, 0
    %p113 = por %p111, %p112
    %s115 = sadd.s32 %s114, 1
    %p118 = scmp.eq.s32.totalorder %s17, 1
    %p119 = scmp.ne.s32.totalorder %s114, %s116
    %p120 = scmp.eq.s32.totalorder %s17, 0
    %p121 = por %p119, %p120
    %p122 = scmp.ne.s32.totalorder %s114, %s116
    %p123 = scmp.eq.s32.totalorder %s22, 1
    %p124 = por %p122, %p123
    %p125 = scmp.ne.s32.totalorder %s116, %s117
    %p126 = scmp.eq.s32.totalorder %s22, 0
    %p127 = por %p125, %p126
    %p128 = scmp.ne.s32.totalorder %s116, %s117
    %p129 = scmp.eq.s32.totalorder %s23, 1
    %p130 = por %p128, %p129
    %p132 = scmp.ne.s32.totalorder %s117, %s131
    %p133 = scmp.eq.s32.totalorder %s23, 0
    %p134 = por %p132, %p133
    %s136 = sadd.s32 %s135, 1
    %p139 = scmp.eq.s32.totalorder %s17, 1
    %p140 = scmp.ne.s32.totalorder %s135, %s137
    %p141 = scmp.eq.s32.totalorder %s17, 0
    %p142 = por %p140, %p141
    %p143 = scmp.ne.s32.totalorder %s135, %s137
    %p144 = scmp.eq.s32.totalorder %s22, 1
    %p145 = por %p143, %p144
    %p146 = scmp.ne.s32.totalorder %s137, %s138
    %p147 = scmp.eq.s32.totalorder %s22, 0
    %p148 = por %p146, %p147
    %p149 = scmp.ne.s32.totalorder %s137, %s138
    %p150 = scmp.eq.s32.totalorder %s23, 1
    %p151 = por %p149, %p150
    %p153 = scmp.ne.s32.totalorder %s138, %s152
    %p154 = scmp.eq.s32.totalorder %s23, 0
    %p155 = por %p153, %p154
    %s157 = sadd.s32 %s156, 1
    %p160 = scmp.eq.s32.totalorder %s17, 1
    %p161 = scmp.ne.s32.totalorder %s156, %s158
    %p162 = scmp.eq.s32.totalorder %s17, 0
    %p163 = por %p161, %p162
    %p164 = scmp.ne.s32.totalorder %s156, %s158
    %p165 = scmp.eq.s32.totalorder %s22, 1
    %p166 = por %p164, %p165
    %p167 = scmp.ne.s32.totalorder %s158, %s159
    %p168 = scmp.eq.s32.totalorder %s22, 0
    %p169 = por %p167, %p168
    %p170 = scmp.ne.s32.totalorder %s158, %s159
    %p171 = scmp.eq.s32.totalorder %s23, 1
    %p172 = por %p170, %p171
    %p174 = scmp.ne.s32.totalorder %s159, %s173
    %p175 = scmp.eq.s32.totalorder %s23, 0
    %p176 = por %p174, %p175
    %s178 = sadd.s32 %s177, 1
    %p181 = scmp.eq.s32.totalorder %s17, 1
    %p182 = scmp.ne.s32.totalorder %s177, %s179
    %p183 = scmp.eq.s32.totalorder %s17, 0
    %p184 = por %p182, %p183
    %p185 = scmp.ne.s32.totalorder %s177, %s179
    %p186 = scmp.eq.s32.totalorder %s22, 1
    %p187 = por %p185, %p186
    %p188 = scmp.ne.s32.totalorder %s179, %s180
    %p189 = scmp.eq.s32.totalorder %s22, 0
    %p190 = por %p188, %p189
    %p191 = scmp.ne.s32.totalorder %s179, %s180
    %p192 = scmp.eq.s32.totalorder %s23, 1
    %p193 = por %p191, %p192
    %p195 = scmp.ne.s32.totalorder %s180, %s194
    %p196 = scmp.eq.s32.totalorder %s23, 0
    %p197 = por %p195, %p196
    %s199 = sadd.s32 %s198, 1
    %p202 = scmp.eq.s32.totalorder %s17, 1
    %p203 = scmp.ne.s32.totalorder %s198, %s200
    %p204 = scmp.eq.s32.totalorder %s17, 0
    %p205 = por %p203, %p204
    %p206 = scmp.ne.s32.totalorder %s198, %s200
    %p207 = scmp.eq.s32.totalorder %s22, 1
    %p208 = por %p206, %p207
    %p209 = scmp.ne.s32.totalorder %s200, %s201
    %p210 = scmp.eq.s32.totalorder %s22, 0
    %p211 = por %p209, %p210
    %p212 = scmp.ne.s32.totalorder %s200, %s201
    %p213 = scmp.eq.s32.totalorder %s23, 1
    %p214 = por %p212, %p213
    %p216 = scmp.ne.s32.totalorder %s201, %s215
    %p217 = scmp.eq.s32.totalorder %s23, 0
    %p218 = por %p216, %p217
    %s220 = sadd.s32 %s219, 1
    %p223 = scmp.eq.s32.totalorder %s17, 1
    %p224 = scmp.ne.s32.totalorder %s219, %s221
    %p225 = scmp.eq.s32.totalorder %s17, 0
    %p226 = por %p224, %p225
    %p227 = scmp.ne.s32.totalorder %s219, %s221
    %p228 = scmp.eq.s32.totalorder %s22, 1
    %p229 = por %p227, %p228
    %p230 = scmp.ne.s32.totalorder %s221, %s222
    %p231 = scmp.eq.s32.totalorder %s22, 0
    %p232 = por %p230, %p231
    %p233 = scmp.ne.s32.totalorder %s221, %s222
    %p234 = scmp.eq.s32.totalorder %s23, 1
    %p235 = por %p233, %p234
    %p237 = scmp.ne.s32.totalorder %s222, %s236
    %p238 = scmp.eq.s32.totalorder %s23, 0
    %p239 = por %p237, %p238
    %s241 = sadd.s32 %s240, 1
    %p244 = scmp.eq.s32.totalorder %s17, 1
    %p245 = scmp.ne.s32.totalorder %s240, %s242
    %p246 = scmp.eq.s32.totalorder %s17, 0
    %p247 = por %p245, %p246
    %p248 = scmp.ne.s32.totalorder %s240, %s242
    %p249 = scmp.eq.s32.totalorder %s22, 1
    %p250 = por %p248, %p249
    %p251 = scmp.ne.s32.totalorder %s242, %s243
    %p252 = scmp.eq.s32.totalorder %s22, 0
    %p253 = por %p251, %p252
    %p254 = scmp.ne.s32.totalorder %s242, %s243
    %p255 = scmp.eq.s32.totalorder %s23, 1
    %p256 = por %p254, %p255
    %p258 = scmp.ne.s32.totalorder %s243, %s257
    %p259 = scmp.eq.s32.totalorder %s23, 0
    %p260 = por %p258, %p259
    %s261 = ssub.s32 %s17, %s24
    %p262 = scmp.eq.s32.totalorder %s261, 0
    %s264 = sadd.s32 %s263, 1
    %s265 = scalar_select %p262, %s263, %s264
    %p268 = pneg %p262
    %p269 = scmp.eq.s32.totalorder %s17, 1
    %p270 = por %p268, %p269
    %p271 = scmp.ne.s32.totalorder %s263, %s266
    %p272 = scmp.eq.s32.totalorder %s17, 0
    %p273 = por %p271, %p272
    %p274 = scmp.ne.s32.totalorder %s263, %s266
    %p275 = scmp.eq.s32.totalorder %s22, 1
    %p276 = por %p274, %p275
    %p277 = scmp.ne.s32.totalorder %s266, %s267
    %p278 = scmp.eq.s32.totalorder %s22, 0
    %p279 = por %p277, %p278
    %p280 = scmp.ne.s32.totalorder %s266, %s267
    %p281 = scmp.eq.s32.totalorder %s23, 1
    %p282 = por %p280, %p281
    %p284 = scmp.ne.s32.totalorder %s267, %s283
    %p285 = scmp.eq.s32.totalorder %s23, 0
    %p286 = por %p284, %p285
    %p287 = scmp.le.s32.totalorder 1, %s17
    %p288 = scmp.lt.s32.totalorder %s17, 3
    %p289 = pnand %p287, %p288
    %p290 = pneg %p289
    // Predicated region
    $region9: #{tpu_custom_call.1} parent=5 // pred_check
      _
    $region10: #{tpu_custom_call.1} parent=5 // pred_check_branch
      %292 = sbr.rel (%p289) target = $region12
    $region11: #{tpu_custom_call.1} parent=5 // pred_region
      %s293 = ssub.s32 %s17, 1
      // Predicated region
      $region13: #{tpu_custom_call.1} parent=11 // pred_check
        %p294 = pneg %p64
      $region14: #{tpu_custom_call.1} parent=11 // pred_check_branch
        %296 = sbr.rel (%p294) target = $region16
      $region15: #{tpu_custom_call.1} parent=11 // pred_region
        _
      $region16: #{tpu_custom_call.1} parent=11 // pred_fallthru
        _
      // Predicated region
      $region17: #{tpu_custom_call.1} parent=11 // pred_check
        %p297 = pneg %p85
      $region18: #{tpu_custom_call.1} parent=11 // pred_check_branch
        %299 = sbr.rel (%p297) target = $region20
      $region19: #{tpu_custom_call.1} parent=11 // pred_region
        _
      $region20: #{tpu_custom_call.1} parent=11 // pred_fallthru
        _
      // Predicated region
      $region21: #{tpu_custom_call.1} parent=11 // pred_check
        %p300 = pneg %p106
      $region22: #{tpu_custom_call.1} parent=11 // pred_check_branch
        %302 = sbr.rel (%p300) target = $region24
      $region23: #{tpu_custom_call.1} parent=11 // pred_region
        _
      $region24: #{tpu_custom_call.1} parent=11 // pred_fallthru
        _
      // Predicated region
      $region25: #{tpu_custom_call.1} parent=11 // pred_check
        %p303 = pneg %p127
      $region26: #{tpu_custom_call.1} parent=11 // pred_check_branch
        %305 = sbr.rel (%p303) target = $region28
      $region27: #{tpu_custom_call.1} parent=11 // pred_region
        _
      $region28: #{tpu_custom_call.1} parent=11 // pred_fallthru
        _
      // Predicated region
      $region29: #{tpu_custom_call.1} parent=11 // pred_check
        %p306 = pneg %p148
      $region30: #{tpu_custom_call.1} parent=11 // pred_check_branch
        %308 = sbr.rel (%p306) target = $region32
      $region31: #{tpu_custom_call.1} parent=11 // pred_region
        _
      $region32: #{tpu_custom_call.1} parent=11 // pred_fallthru
        _
      // Predicated region
      $region33: #{tpu_custom_call.1} parent=11 // pred_check
        %p309 = pneg %p169
      $region34: #{tpu_custom_call.1} parent=11 // pred_check_branch
        %311 = sbr.rel (%p309) target = $region36
      $region35: #{tpu_custom_call.1} parent=11 // pred_region
        _
      $region36: #{tpu_custom_call.1} parent=11 // pred_fallthru
        _
      // Predicated region
      $region37: #{tpu_custom_call.1} parent=11 // pred_check
        %p312 = pneg %p190
      $region38: #{tpu_custom_call.1} parent=11 // pred_check_branch
        %314 = sbr.rel (%p312) target = $region40
      $region39: #{tpu_custom_call.1} parent=11 // pred_region
        _
      $region40: #{tpu_custom_call.1} parent=11 // pred_fallthru
        _
      // Predicated region
      $region41: #{tpu_custom_call.1} parent=11 // pred_check
        %p315 = pneg %p211
      $region42: #{tpu_custom_call.1} parent=11 // pred_check_branch
        %317 = sbr.rel (%p315) target = $region44
      $region43: #{tpu_custom_call.1} parent=11 // pred_region
        _
      $region44: #{tpu_custom_call.1} parent=11 // pred_fallthru
        _
      // Predicated region
      $region45: #{tpu_custom_call.1} parent=11 // pred_check
        %p318 = pneg %p232
      $region46: #{tpu_custom_call.1} parent=11 // pred_check_branch
        %320 = sbr.rel (%p318) target = $region48
      $region47: #{tpu_custom_call.1} parent=11 // pred_region
        _
      $region48: #{tpu_custom_call.1} parent=11 // pred_fallthru
        _
      // Predicated region
      $region49: #{tpu_custom_call.1} parent=11 // pred_check
        %p321 = pneg %p253
      $region50: #{tpu_custom_call.1} parent=11 // pred_check_branch
        %323 = sbr.rel (%p321) target = $region52
      $region51: #{tpu_custom_call.1} parent=11 // pred_region
        _
      $region52: #{tpu_custom_call.1} parent=11 // pred_fallthru
        _
    $region12: #{tpu_custom_call.1} parent=5 // pred_fallthru
      _
    %p324 = scmp.lt.s32.totalorder %s17, 2
    // Predicated region
    $region53: #{tpu_custom_call.1} parent=5 // pred_check
      %p325 = pneg %p324
    $region54: #{tpu_custom_call.1} parent=5 // pred_check_branch
      %327 = sbr.rel (%p325) target = $region56
    $region55: #{tpu_custom_call.1} parent=5 // pred_region
      // Predicated region
      $region57: #{tpu_custom_call.1} parent=55 // pred_check
        %p328 = pneg %p37
      $region58: #{tpu_custom_call.1} parent=55 // pred_check_branch
        %330 = sbr.rel (%p328) target = $region60
      $region59: #{tpu_custom_call.1} parent=55 // pred_region
        %p331 = scmp.lt.s32.totalorder %s17, 1
        %s332 = scalar_select %p331, %s17, 1
        %s333 = smul.addr %s332, 80
        %s334 = smul.addr %s333, 8
        %s335 = scalar_lea.vmem %s0, %s334
      $region60: #{tpu_custom_call.1} parent=55 // pred_fallthru
        _
    $region56: #{tpu_custom_call.1} parent=5 // pred_fallthru
      _
    %p336 = scmp.le.s32.totalorder 1, %s17
    %p337 = scmp.lt.s32.totalorder %s17, 3
    %p338 = pnand %p336, %p337
    %p339 = pneg %p338
    // Predicated region
    $region61: #{tpu_custom_call.1} parent=5 // pred_check
      _
    $region62: #{tpu_custom_call.1} parent=5 // pred_check_branch
      %341 = sbr.rel (%p338) target = $region64
    $region63: #{tpu_custom_call.1} parent=5 // pred_region
      %s342 = ssub.s32 %s17, 1
      %p343 = scmp.lt.s32.totalorder %s22, 1
      %s344 = scalar_select %p343, %s22, 1
      %s345 = smul.addr %s344, 80
      %s346 = smul.addr %s345, 8
      %s347 = scalar_lea.vmem %s0, %s346
      %p348 = pneg %p43
      %p349 = pneg %p40
      %p350 = pneg %p64
      %p351 = pneg %p61
      %p352 = pneg %p85
      %p353 = pneg %p82
      %p354 = pneg %p106
      %p355 = pneg %p103
      %p356 = pneg %p127
      %p357 = pneg %p124
      %p358 = pneg %p148
      %p359 = pneg %p145
      %p360 = pneg %p169
      %p361 = pneg %p166
      %p362 = pneg %p190
      %p363 = pneg %p187
      %p364 = pneg %p211
      %p365 = pneg %p208
      %p366 = pneg %p232
      %p367 = pneg %p229
      %p368 = pneg %p253
      %p369 = pneg %p250
      %p370 = pneg %p279
      %p371 = pneg %p276
      %p372 = scmp.lt.s32.totalorder %s22, 1
      %s373 = scalar_select %p372, %s22, 1
      %s374 = smul.addr %s373, 16
      %s375 = smul.addr %s374, 8
      %s376 = scalar_lea.vmem %s11, %s375
      %p377 = scmp.lt.s32.totalorder %s22, 1
      %s378 = scalar_select %p377, %s22, 1
      %s379 = smul.addr %s378, 80
      %s380 = smul.addr %s379, 8
      %s381 = scalar_lea.vmem %s0, %s380
      %p382 = scmp.lt.s32.totalorder %s22, 1
      %s383 = scalar_select %p382, %s22, 1
      %s384 = smul.addr %s383, 16
      %s385 = smul.addr %s384, 8
      %s386 = scalar_lea.vmem %s11, %s385
      %v387 = vld [vmem:[%s381] sm:$0xff]
      %v388 = vld [vmem:[%s381 + $0x8] sm:$0xff]
      %v389 = vld [vmem:[%s381 + $0x10] sm:$0xff]
      %v390 = vld [vmem:[%s381 + $0x18] sm:$0xff]
      %v391 = vld [vmem:[%s381 + $0x20] sm:$0xff]
      %v392 = vld [vmem:[%s381 + $0x28] sm:$0xff]
      %v393 = vld [vmem:[%s381 + $0x30] sm:$0xff]
      %v394 = vld [vmem:[%s381 + $0x38] sm:$0xff]
      %v395 = vld [vmem:[%s381 + $0x40] sm:$0xff]
      %v396 = vld [vmem:[%s381 + $0x48] sm:$0xff]
      %v397 = vld [vmem:[%s381 + $0x50] sm:$0xff]
      %v398 = vld [vmem:[%s381 + $0x58] sm:$0xff]
      %v399 = vld [vmem:[%s381 + $0x60] sm:$0xff]
      %v400 = vld [vmem:[%s381 + $0x68] sm:$0xff]
      %v401 = vld [vmem:[%s381 + $0x70] sm:$0xff]
      %v402 = vld [vmem:[%s381 + $0x78] sm:$0xff]
      %v403 = vld [vmem:[%s381 + $0x80] sm:$0xff]
      %v404 = vld [vmem:[%s381 + $0x88] sm:$0xff]
      %v405 = vld [vmem:[%s381 + $0x90] sm:$0xff]
      %v406 = vld [vmem:[%s381 + $0x98] sm:$0xff]
      %v407 = vld [vmem:[%s381 + $0xa0] sm:$0xff]
      %v408 = vld [vmem:[%s381 + $0xa8] sm:$0xff]
      %v409 = vld [vmem:[%s381 + $0xb0] sm:$0xff]
      %v410 = vld [vmem:[%s381 + $0xb8] sm:$0xff]
      %v411 = vld [vmem:[%s381 + $0xc0] sm:$0xff]
      %v412 = vld [vmem:[%s381 + $0xc8] sm:$0xff]
      %v413 = vld [vmem:[%s381 + $0xd0] sm:$0xff]
      %v414 = vld [vmem:[%s381 + $0xd8] sm:$0xff]
      %v415 = vld [vmem:[%s381 + $0xe0] sm:$0xff]
      %v416 = vld [vmem:[%s381 + $0xe8] sm:$0xff]
      %v417 = vld [vmem:[%s381 + $0xf0] sm:$0xff]
      %v418 = vld [vmem:[%s381 + $0xf8] sm:$0xff]
      %v419 = vld [vmem:[%s381 + $0x100] sm:$0xff]
      %v420 = vld [vmem:[%s381 + $0x108] sm:$0xff]
      %v421 = vld [vmem:[%s381 + $0x110] sm:$0xff]
      %v422 = vld [vmem:[%s381 + $0x118] sm:$0xff]
      %v423 = vld [vmem:[%s381 + $0x120] sm:$0xff]
      %v424 = vld [vmem:[%s381 + $0x128] sm:$0xff]
      %v425 = vld [vmem:[%s381 + $0x130] sm:$0xff]
      %v426 = vld [vmem:[%s381 + $0x138] sm:$0xff]
      %v427 = vld [vmem:[%s381 + $0x140] sm:$0xff]
      %v428 = vld [vmem:[%s381 + $0x148] sm:$0xff]
      %v429 = vld [vmem:[%s381 + $0x150] sm:$0xff]
      %v430 = vld [vmem:[%s381 + $0x158] sm:$0xff]
      %v431 = vld [vmem:[%s381 + $0x160] sm:$0xff]
      %v432 = vld [vmem:[%s381 + $0x168] sm:$0xff]
      %v433 = vld [vmem:[%s381 + $0x170] sm:$0xff]
      %v434 = vld [vmem:[%s381 + $0x178] sm:$0xff]
      %v435 = vld [vmem:[%s381 + $0x180] sm:$0xff]
      %v436 = vld [vmem:[%s381 + $0x188] sm:$0xff]
      %v437 = vld [vmem:[%s381 + $0x190] sm:$0xff]
      %v438 = vld [vmem:[%s381 + $0x198] sm:$0xff]
      %v439 = vld [vmem:[%s381 + $0x1a0] sm:$0xff]
      %v440 = vld [vmem:[%s381 + $0x1a8] sm:$0xff]
      %v441 = vld [vmem:[%s381 + $0x1b0] sm:$0xff]
      %v442 = vld [vmem:[%s381 + $0x1b8] sm:$0xff]
      %v443 = vld [vmem:[%s381 + $0x1c0] sm:$0xff]
      %v444 = vld [vmem:[%s381 + $0x1c8] sm:$0xff]
      %v445 = vld [vmem:[%s381 + $0x1d0] sm:$0xff]
      %v446 = vld [vmem:[%s381 + $0x1d8] sm:$0xff]
      %v447 = vld [vmem:[%s381 + $0x1e0] sm:$0xff]
      %v448 = vld [vmem:[%s381 + $0x1e8] sm:$0xff]
      %v449 = vld [vmem:[%s381 + $0x1f0] sm:$0xff]
      %v450 = vld [vmem:[%s381 + $0x1f8] sm:$0xff]
      %v451 = vld [vmem:[%s381 + $0x200] sm:$0xff]
      %v452 = vld [vmem:[%s381 + $0x208] sm:$0xff]
      %v453 = vld [vmem:[%s381 + $0x210] sm:$0xff]
      %v454 = vld [vmem:[%s381 + $0x218] sm:$0xff]
      %v455 = vld [vmem:[%s381 + $0x220] sm:$0xff]
      %v456 = vld [vmem:[%s381 + $0x228] sm:$0xff]
      %v457 = vld [vmem:[%s381 + $0x230] sm:$0xff]
      %v458 = vld [vmem:[%s381 + $0x238] sm:$0xff]
      %v459 = vld [vmem:[%s381 + $0x240] sm:$0xff]
      %v460 = vld [vmem:[%s381 + $0x248] sm:$0xff]
      %v461 = vld [vmem:[%s381 + $0x250] sm:$0xff]
      %v462 = vld [vmem:[%s381 + $0x258] sm:$0xff]
      %v463 = vld [vmem:[%s381 + $0x260] sm:$0xff]
      %v464 = vld [vmem:[%s381 + $0x268] sm:$0xff]
      %v465 = vld [vmem:[%s381 + $0x270] sm:$0xff]
      %v466 = vld [vmem:[%s381 + $0x278] sm:$0xff]
      %v467 = vld [vmem:[%s1] sm:$0xff]
      %v468 = vld [vmem:[%s1 + $0x8] sm:$0xff]
      %v469 = vld [vmem:[%s1 + $0x10] sm:$0xff]
      %v470 = vld [vmem:[%s1 + $0x18] sm:$0xff]
      %v471 = vld [vmem:[%s1 + $0x20] sm:$0xff]
      %v472 = vld [vmem:[%s1 + $0x28] sm:$0xff]
      %v473 = vld [vmem:[%s1 + $0x30] sm:$0xff]
      %v474 = vld [vmem:[%s1 + $0x38] sm:$0xff]
      %v475 = vld [vmem:[%s1 + $0x40] sm:$0xff]
      %v476 = vld [vmem:[%s1 + $0x48] sm:$0xff]
      %v477 = vld [vmem:[%s1 + $0x50] sm:$0xff]
      %v478 = vld [vmem:[%s1 + $0x58] sm:$0xff]
      %v479 = vld [vmem:[%s1 + $0x60] sm:$0xff]
      %v480 = vld [vmem:[%s1 + $0x68] sm:$0xff]
      %v481 = vld [vmem:[%s1 + $0x70] sm:$0xff]
      %v482 = vld [vmem:[%s1 + $0x78] sm:$0xff]
      %v483 = vld [vmem:[%s1 + $0x80] sm:$0xff]
      %v484 = vld [vmem:[%s1 + $0x88] sm:$0xff]
      %v485 = vld [vmem:[%s1 + $0x90] sm:$0xff]
      %v486 = vld [vmem:[%s1 + $0x98] sm:$0xff]
      %v487 = vld [vmem:[%s1 + $0xa0] sm:$0xff]
      %v488 = vld [vmem:[%s1 + $0xa8] sm:$0xff]
      %v489 = vld [vmem:[%s1 + $0xb0] sm:$0xff]
      %v490 = vld [vmem:[%s1 + $0xb8] sm:$0xff]
      %v491 = vld [vmem:[%s1 + $0xc0] sm:$0xff]
      %v492 = vld [vmem:[%s1 + $0xc8] sm:$0xff]
      %v493 = vld [vmem:[%s1 + $0xd0] sm:$0xff]
      %v494 = vld [vmem:[%s1 + $0xd8] sm:$0xff]
      %v495 = vld [vmem:[%s1 + $0xe0] sm:$0xff]
      %v496 = vld [vmem:[%s1 + $0xe8] sm:$0xff]
      %v497 = vld [vmem:[%s1 + $0xf0] sm:$0xff]
      %v498 = vld [vmem:[%s1 + $0xf8] sm:$0xff]
      %v499 = vld [vmem:[%s1 + $0x100] sm:$0xff]
      %v500 = vld [vmem:[%s1 + $0x108] sm:$0xff]
      %v501 = vld [vmem:[%s1 + $0x110] sm:$0xff]
      %v502 = vld [vmem:[%s1 + $0x118] sm:$0xff]
      %v503 = vld [vmem:[%s1 + $0x120] sm:$0xff]
      %v504 = vld [vmem:[%s1 + $0x128] sm:$0xff]
      %v505 = vld [vmem:[%s1 + $0x130] sm:$0xff]
      %v506 = vld [vmem:[%s1 + $0x138] sm:$0xff]
      %v507 = vld [vmem:[%s1 + $0x140] sm:$0xff]
      %v508 = vld [vmem:[%s1 + $0x148] sm:$0xff]
      %v509 = vld [vmem:[%s1 + $0x150] sm:$0xff]
      %v510 = vld [vmem:[%s1 + $0x158] sm:$0xff]
      %v511 = vld [vmem:[%s1 + $0x160] sm:$0xff]
      %v512 = vld [vmem:[%s1 + $0x168] sm:$0xff]
      %v513 = vld [vmem:[%s1 + $0x170] sm:$0xff]
      %v514 = vld [vmem:[%s1 + $0x178] sm:$0xff]
      %v515 = vld [vmem:[%s1 + $0x180] sm:$0xff]
      %v516 = vld [vmem:[%s1 + $0x188] sm:$0xff]
      %v517 = vld [vmem:[%s1 + $0x190] sm:$0xff]
      %v518 = vld [vmem:[%s1 + $0x198] sm:$0xff]
      %v519 = vld [vmem:[%s1 + $0x1a0] sm:$0xff]
      %v520 = vld [vmem:[%s1 + $0x1a8] sm:$0xff]
      %v521 = vld [vmem:[%s1 + $0x1b0] sm:$0xff]
      %v522 = vld [vmem:[%s1 + $0x1b8] sm:$0xff]
      %v523 = vld [vmem:[%s1 + $0x1c0] sm:$0xff]
      %v524 = vld [vmem:[%s1 + $0x1c8] sm:$0xff]
      %v525 = vld [vmem:[%s1 + $0x1d0] sm:$0xff]
      %v526 = vld [vmem:[%s1 + $0x1d8] sm:$0xff]
      %v527 = vld [vmem:[%s1 + $0x1e0] sm:$0xff]
      %v528 = vld [vmem:[%s1 + $0x1e8] sm:$0xff]
      %v529 = vld [vmem:[%s1 + $0x1f0] sm:$0xff]
      %v530 = vld [vmem:[%s1 + $0x1f8] sm:$0xff]
      %v531 = vld [vmem:[%s1 + $0x200] sm:$0xff]
      %v532 = vld [vmem:[%s1 + $0x208] sm:$0xff]
      %v533 = vld [vmem:[%s1 + $0x210] sm:$0xff]
      %v534 = vld [vmem:[%s1 + $0x218] sm:$0xff]
      %v535 = vld [vmem:[%s1 + $0x220] sm:$0xff]
      %v536 = vld [vmem:[%s1 + $0x228] sm:$0xff]
      %v537 = vld [vmem:[%s1 + $0x230] sm:$0xff]
      %v538 = vld [vmem:[%s1 + $0x238] sm:$0xff]
      %v539 = vld [vmem:[%s1 + $0x240] sm:$0xff]
      %v540 = vld [vmem:[%s1 + $0x248] sm:$0xff]
      %v541 = vld [vmem:[%s1 + $0x250] sm:$0xff]
      %v542 = vld [vmem:[%s1 + $0x258] sm:$0xff]
      %v543 = vld [vmem:[%s1 + $0x260] sm:$0xff]
      %v544 = vld [vmem:[%s1 + $0x268] sm:$0xff]
      %v545 = vld [vmem:[%s1 + $0x270] sm:$0xff]
      %v546 = vld [vmem:[%s1 + $0x278] sm:$0xff]
      %v547 = vld [vmem:[%s1 + $0x280] sm:$0xff]
      %v548 = vld [vmem:[%s1 + $0x288] sm:$0xff]
      %v549 = vld [vmem:[%s1 + $0x290] sm:$0xff]
      %v550 = vld [vmem:[%s1 + $0x298] sm:$0xff]
      %v551 = vld [vmem:[%s1 + $0x2a0] sm:$0xff]
      %v552 = vld [vmem:[%s1 + $0x2a8] sm:$0xff]
      %v553 = vld [vmem:[%s1 + $0x2b0] sm:$0xff]
      %v554 = vld [vmem:[%s1 + $0x2b8] sm:$0xff]
      %v555 = vld [vmem:[%s1 + $0x2c0] sm:$0xff]
      %v556 = vld [vmem:[%s1 + $0x2c8] sm:$0xff]
      %v557 = vld [vmem:[%s1 + $0x2d0] sm:$0xff]
      %v558 = vld [vmem:[%s1 + $0x2d8] sm:$0xff]
      %v559 = vld [vmem:[%s1 + $0x2e0] sm:$0xff]
      %v560 = vld [vmem:[%s1 + $0x2e8] sm:$0xff]
      %v561 = vld [vmem:[%s1 + $0x2f0] sm:$0xff]
      %v562 = vld [vmem:[%s1 + $0x2f8] sm:$0xff]
      %v563 = vld [vmem:[%s1 + $0x300] sm:$0xff]
      %v564 = vld [vmem:[%s1 + $0x308] sm:$0xff]
      %v565 = vld [vmem:[%s1 + $0x310] sm:$0xff]
      %v566 = vld [vmem:[%s1 + $0x318] sm:$0xff]
      %v567 = vld [vmem:[%s1 + $0x320] sm:$0xff]
      %v568 = vld [vmem:[%s1 + $0x328] sm:$0xff]
      %v569 = vld [vmem:[%s1 + $0x330] sm:$0xff]
      %v570 = vld [vmem:[%s1 + $0x338] sm:$0xff]
      %v571 = vld [vmem:[%s1 + $0x340] sm:$0xff]
      %v572 = vld [vmem:[%s1 + $0x348] sm:$0xff]
      %v573 = vld [vmem:[%s1 + $0x350] sm:$0xff]
      %v574 = vld [vmem:[%s1 + $0x358] sm:$0xff]
      %v575 = vld [vmem:[%s1 + $0x360] sm:$0xff]
      %v576 = vld [vmem:[%s1 + $0x368] sm:$0xff]
      %v577 = vld [vmem:[%s1 + $0x370] sm:$0xff]
      %v578 = vld [vmem:[%s1 + $0x378] sm:$0xff]
      %v579 = vld [vmem:[%s1 + $0x380] sm:$0xff]
      %v580 = vld [vmem:[%s1 + $0x388] sm:$0xff]
      %v581 = vld [vmem:[%s1 + $0x390] sm:$0xff]
      %v582 = vld [vmem:[%s1 + $0x398] sm:$0xff]
      %v583 = vld [vmem:[%s1 + $0x3a0] sm:$0xff]
      %v584 = vld [vmem:[%s1 + $0x3a8] sm:$0xff]
      %v585 = vld [vmem:[%s1 + $0x3b0] sm:$0xff]
      %v586 = vld [vmem:[%s1 + $0x3b8] sm:$0xff]
      %v587 = vld [vmem:[%s1 + $0x3c0] sm:$0xff]
      %v588 = vld [vmem:[%s1 + $0x3c8] sm:$0xff]
      %v589 = vld [vmem:[%s1 + $0x3d0] sm:$0xff]
      %v590 = vld [vmem:[%s1 + $0x3d8] sm:$0xff]
      %v591 = vld [vmem:[%s1 + $0x3e0] sm:$0xff]
      %v592 = vld [vmem:[%s1 + $0x3e8] sm:$0xff]
      %v593 = vld [vmem:[%s1 + $0x3f0] sm:$0xff]
      %v594 = vld [vmem:[%s1 + $0x3f8] sm:$0xff]
      %v595 = vld [vmem:[%s1 + $0x400] sm:$0xff]
      %v596 = vld [vmem:[%s1 + $0x408] sm:$0xff]
      %v597 = vld [vmem:[%s1 + $0x410] sm:$0xff]
      %v598 = vld [vmem:[%s1 + $0x418] sm:$0xff]
      %v599 = vld [vmem:[%s1 + $0x420] sm:$0xff]
      %v600 = vld [vmem:[%s1 + $0x428] sm:$0xff]
      %v601 = vld [vmem:[%s1 + $0x430] sm:$0xff]
      %v602 = vld [vmem:[%s1 + $0x438] sm:$0xff]
      %v603 = vld [vmem:[%s1 + $0x440] sm:$0xff]
      %v604 = vld [vmem:[%s1 + $0x448] sm:$0xff]
      %v605 = vld [vmem:[%s1 + $0x450] sm:$0xff]
      %v606 = vld [vmem:[%s1 + $0x458] sm:$0xff]
      %v607 = vld [vmem:[%s1 + $0x460] sm:$0xff]
      %v608 = vld [vmem:[%s1 + $0x468] sm:$0xff]
      %v609 = vld [vmem:[%s1 + $0x470] sm:$0xff]
      %v610 = vld [vmem:[%s1 + $0x478] sm:$0xff]
      %v611 = vld [vmem:[%s2] sm:$0x3]
      %v613 = vlaneseq
      %v614 = vshrl.u32 %v613, 7
      %v615 = vsub.s32 0, %v614
      %v616 = vrot.slane %v611, %v615
      %v617 = vlaneseq
      %v618 = vshrl.u32 %v617, 7
      %v619 = vsub.s32 1, %v618
      %v620 = vrot.slane %v611, %v619
      %vm623 = vcmask 523264
      %v625 = vsel %vm623, %v391, 0
      %v628 = vsel %vm623, %v396, 0
      %v631 = vsel %vm623, %v401, 0
      %v634 = vsel %vm623, %v406, 0
      %v637 = vsel %vm623, %v411, 0
      %v640 = vsel %vm623, %v416, 0
      %v643 = vsel %vm623, %v421, 0
      %v646 = vsel %vm623, %v426, 0
      %v649 = vsel %vm623, %v431, 0
      %v652 = vsel %vm623, %v436, 0
      %v655 = vsel %vm623, %v441, 0
      %v658 = vsel %vm623, %v446, 0
      %v661 = vsel %vm623, %v451, 0
      %v664 = vsel %vm623, %v456, 0
      %v667 = vsel %vm623, %v461, 0
      %v670 = vsel %vm623, %v466, 0
      %672 = vmatprep.subr.mxu0 %v498
      %673 = vmatpush1.msra.mxu0 %v497
      %674 = vmatprep.subr.mxu0 %v496
      %675 = vmatpush1.msra.mxu0 %v495
      %676 = vmatprep.subr.mxu0 %v494
      %677 = vmatpush1.msra.mxu0 %v493
      %678 = vmatprep.subr.mxu0 %v492
      %679 = vmatpush1.msra.mxu0 %v491
      %680 = vmatprep.subr.mxu0 %v490
      %681 = vmatpush1.msra.mxu0 %v489
      %682 = vmatprep.subr.mxu0 %v488
      %683 = vmatpush1.msra.mxu0 %v487
      %684 = vmatprep.subr.mxu0 %v486
      %685 = vmatpush1.msra.mxu0 %v485
      %686 = vmatprep.subr.mxu0 %v484
      %687 = vmatpush1.msra.mxu0 %v483
      %688 = vmatprep.subr.mxu0 %v482
      %689 = vmatpush1.msra.mxu0 %v481
      %690 = vmatprep.subr.mxu0 %v480
      %691 = vmatpush1.msra.mxu0 %v479
      %692 = vmatprep.subr.mxu0 %v478
      %693 = vmatpush1.msra.mxu0 %v477
      %694 = vmatprep.subr.mxu0 %v476
      %695 = vmatpush1.msra.mxu0 %v475
      %696 = vmatprep.subr.mxu0 %v474
      %697 = vmatpush1.msra.mxu0 %v473
      %698 = vmatprep.subr.mxu0 %v472
      %699 = vmatpush1.msra.mxu0 %v471
      %700 = vmatprep.subr.mxu0 %v470
      %701 = vmatpush1.msra.mxu0 %v469
      %702 = vmatprep.subr.mxu0 %v468
      %703 = vmatpush1.msra.mxu0 %v467
      %704 = vmatprep.subr.mxu0 %v530
      %705 = vmatpush2.msra.mxu0 %v529
      %706 = vmatprep.subr.mxu0 %v528
      %707 = vmatpush2.msra.mxu0 %v527
      %708 = vmatprep.subr.mxu0 %v526
      %709 = vmatpush2.msra.mxu0 %v525
      %710 = vmatprep.subr.mxu0 %v524
      %711 = vmatpush2.msra.mxu0 %v523
      %712 = vmatprep.subr.mxu0 %v522
      %713 = vmatpush2.msra.mxu0 %v521
      %714 = vmatprep.subr.mxu0 %v520
      %715 = vmatpush2.msra.mxu0 %v519
      %716 = vmatprep.subr.mxu0 %v518
      %717 = vmatpush2.msra.mxu0 %v517
      %718 = vmatprep.subr.mxu0 %v516
      %719 = vmatpush2.msra.mxu0 %v515
      %720 = vmatprep.subr.mxu0 %v514
      %721 = vmatpush2.msra.mxu0 %v513
      %722 = vmatprep.subr.mxu0 %v512
      %723 = vmatpush2.msra.mxu0 %v511
      %724 = vmatprep.subr.mxu0 %v510
      %725 = vmatpush2.msra.mxu0 %v509
      %726 = vmatprep.subr.mxu0 %v508
      %727 = vmatpush2.msra.mxu0 %v507
      %728 = vmatprep.subr.mxu0 %v506
      %729 = vmatpush2.msra.mxu0 %v505
      %730 = vmatprep.subr.mxu0 %v504
      %731 = vmatpush2.msra.mxu0 %v503
      %732 = vmatprep.subr.mxu0 %v502
      %733 = vmatpush2.msra.mxu0 %v501
      %734 = vmatprep.subr.mxu0 %v500
      %735 = vmatpush2.msra.mxu0 %v499
      %736 = vmatprep.mubr.f32.mxu0 %v388
      %737 = vmatmul.mubr.f32.gmra.mxu0 %v387
      %v738 = vpop.f32.mrf.mxu0
      %v739 = vadd.f32 %v616, %v738
      %v740 = vpop.f32.mrf.mxu0
      %v741 = vadd.f32 %v620, %v740
      %742 = vmatprep.mubr.f32.mxu0 %v393
      %743 = vmatmul.mubr.f32.gmra.mxu0 %v392
      %v744 = vpop.f32.mrf.mxu0
      %v745 = vadd.f32 %v616, %v744
      %v746 = vpop.f32.mrf.mxu0
      %v747 = vadd.f32 %v620, %v746
      %748 = vmatprep.mubr.f32.mxu0 %v398
      %749 = vmatmul.mubr.f32.gmra.mxu0 %v397
      %v750 = vpop.f32.mrf.mxu0
      %v751 = vadd.f32 %v616, %v750
      %v752 = vpop.f32.mrf.mxu0
      %v753 = vadd.f32 %v620, %v752
      %754 = vmatprep.mubr.f32.mxu0 %v403
      %755 = vmatmul.mubr.f32.gmra.mxu0 %v402
      %v756 = vpop.f32.mrf.mxu0
      %v757 = vadd.f32 %v616, %v756
      %v758 = vpop.f32.mrf.mxu0
      %v759 = vadd.f32 %v620, %v758
      %760 = vmatprep.mubr.f32.mxu0 %v408
      %761 = vmatmul.mubr.f32.gmra.mxu0 %v407
      %v762 = vpop.f32.mrf.mxu0
      %v763 = vadd.f32 %v616, %v762
      %v764 = vpop.f32.mrf.mxu0
      %v765 = vadd.f32 %v620, %v764
      %766 = vmatprep.mubr.f32.mxu0 %v413
      %767 = vmatmul.mubr.f32.gmra.mxu0 %v412
      %v768 = vpop.f32.mrf.mxu0
      %v769 = vadd.f32 %v616, %v768
      %v770 = vpop.f32.mrf.mxu0
      %v771 = vadd.f32 %v620, %v770
      %772 = vmatprep.mubr.f32.mxu0 %v418
      %773 = vmatmul.mubr.f32.gmra.mxu0 %v417
      %v774 = vpop.f32.mrf.mxu0
      %v775 = vadd.f32 %v616, %v774
      %v776 = vpop.f32.mrf.mxu0
      %v777 = vadd.f32 %v620, %v776
      %778 = vmatprep.mubr.f32.mxu0 %v423
      %779 = vmatmul.mubr.f32.gmra.mxu0 %v422
      %v780 = vpop.f32.mrf.mxu0
      %v781 = vadd.f32 %v616, %v780
      %v782 = vpop.f32.mrf.mxu0
      %v783 = vadd.f32 %v620, %v782
      %784 = vmatprep.mubr.f32.mxu0 %v428
      %785 = vmatmul.mubr.f32.gmra.mxu0 %v427
      %v786 = vpop.f32.mrf.mxu0
      %v787 = vadd.f32 %v616, %v786
      %v788 = vpop.f32.mrf.mxu0
      %v789 = vadd.f32 %v620, %v788
      %790 = vmatprep.mubr.f32.mxu0 %v433
      %791 = vmatmul.mubr.f32.gmra.mxu0 %v432
      %v792 = vpop.f32.mrf.mxu0
      %v793 = vadd.f32 %v616, %v792
      %v794 = vpop.f32.mrf.mxu0
      %v795 = vadd.f32 %v620, %v794
      %796 = vmatprep.mubr.f32.mxu0 %v438
      %797 = vmatmul.mubr.f32.gmra.mxu0 %v437
      %v798 = vpop.f32.mrf.mxu0
      %v799 = vadd.f32 %v616, %v798
      %v800 = vpop.f32.mrf.mxu0
      %v801 = vadd.f32 %v620, %v800
      %802 = vmatprep.mubr.f32.mxu0 %v443
      %803 = vmatmul.mubr.f32.gmra.mxu0 %v442
      %v804 = vpop.f32.mrf.mxu0
      %v805 = vadd.f32 %v616, %v804
      %v806 = vpop.f32.mrf.mxu0
      %v807 = vadd.f32 %v620, %v806
      %808 = vmatprep.mubr.f32.mxu0 %v448
      %809 = vmatmul.mubr.f32.gmra.mxu0 %v447
      %v810 = vpop.f32.mrf.mxu0
      %v811 = vadd.f32 %v616, %v810
      %v812 = vpop.f32.mrf.mxu0
      %v813 = vadd.f32 %v620, %v812
      %814 = vmatprep.mubr.f32.mxu0 %v453
      %815 = vmatmul.mubr.f32.gmra.mxu0 %v452
      %v816 = vpop.f32.mrf.mxu0
      %v817 = vadd.f32 %v616, %v816
      %v818 = vpop.f32.mrf.mxu0
      %v819 = vadd.f32 %v620, %v818
      %820 = vmatprep.mubr.f32.mxu0 %v458
      %821 = vmatmul.mubr.f32.gmra.mxu0 %v457
      %v822 = vpop.f32.mrf.mxu0
      %v823 = vadd.f32 %v616, %v822
      %v824 = vpop.f32.mrf.mxu0
      %v825 = vadd.f32 %v620, %v824
      %826 = vmatprep.mubr.f32.mxu0 %v463
      %827 = vmatmul.mubr.f32.gmra.mxu0 %v462
      %v828 = vpop.f32.mrf.mxu0
      %v829 = vadd.f32 %v616, %v828
      %v830 = vpop.f32.mrf.mxu0
      %v831 = vadd.f32 %v620, %v830
      %832 = vdwg.mxu0
      %833 = vmatprep.subr.mxu0 %v562
      %834 = vmatpush1.msra.mxu0 %v561
      %835 = vmatprep.subr.mxu0 %v560
      %836 = vmatpush1.msra.mxu0 %v559
      %837 = vmatprep.subr.mxu0 %v558
      %838 = vmatpush1.msra.mxu0 %v557
      %839 = vmatprep.subr.mxu0 %v556
      %840 = vmatpush1.msra.mxu0 %v555
      %841 = vmatprep.subr.mxu0 %v554
      %842 = vmatpush1.msra.mxu0 %v553
      %843 = vmatprep.subr.mxu0 %v552
      %844 = vmatpush1.msra.mxu0 %v551
      %845 = vmatprep.subr.mxu0 %v550
      %846 = vmatpush1.msra.mxu0 %v549
      %847 = vmatprep.subr.mxu0 %v548
      %848 = vmatpush1.msra.mxu0 %v547
      %849 = vmatprep.subr.mxu0 %v546
      %850 = vmatpush1.msra.mxu0 %v545
      %851 = vmatprep.subr.mxu0 %v544
      %852 = vmatpush1.msra.mxu0 %v543
      %853 = vmatprep.subr.mxu0 %v542
      %854 = vmatpush1.msra.mxu0 %v541
      %855 = vmatprep.subr.mxu0 %v540
      %856 = vmatpush1.msra.mxu0 %v539
      %857 = vmatprep.subr.mxu0 %v538
      %858 = vmatpush1.msra.mxu0 %v537
      %859 = vmatprep.subr.mxu0 %v536
      %860 = vmatpush1.msra.mxu0 %v535
      %861 = vmatprep.subr.mxu0 %v534
      %862 = vmatpush1.msra.mxu0 %v533
      %863 = vmatprep.subr.mxu0 %v532
      %864 = vmatpush1.msra.mxu0 %v531
      %865 = vmatprep.subr.mxu0 %v594
      %866 = vmatpush2.msra.mxu0 %v593
      %867 = vmatprep.subr.mxu0 %v592
      %868 = vmatpush2.msra.mxu0 %v591
      %869 = vmatprep.subr.mxu0 %v590
      %870 = vmatpush2.msra.mxu0 %v589
      %871 = vmatprep.subr.mxu0 %v588
      %872 = vmatpush2.msra.mxu0 %v587
      %873 = vmatprep.subr.mxu0 %v586
      %874 = vmatpush2.msra.mxu0 %v585
      %875 = vmatprep.subr.mxu0 %v584
      %876 = vmatpush2.msra.mxu0 %v583
      %877 = vmatprep.subr.mxu0 %v582
      %878 = vmatpush2.msra.mxu0 %v581
      %879 = vmatprep.subr.mxu0 %v580
      %880 = vmatpush2.msra.mxu0 %v579
      %881 = vmatprep.subr.mxu0 %v578
      %882 = vmatpush2.msra.mxu0 %v577
      %883 = vmatprep.subr.mxu0 %v576
      %884 = vmatpush2.msra.mxu0 %v575
      %885 = vmatprep.subr.mxu0 %v574
      %886 = vmatpush2.msra.mxu0 %v573
      %887 = vmatprep.subr.mxu0 %v572
      %888 = vmatpush2.msra.mxu0 %v571
      %889 = vmatprep.subr.mxu0 %v570
      %890 = vmatpush2.msra.mxu0 %v569
      %891 = vmatprep.subr.mxu0 %v568
      %892 = vmatpush2.msra.mxu0 %v567
      %893 = vmatprep.subr.mxu0 %v566
      %894 = vmatpush2.msra.mxu0 %v565
      %895 = vmatprep.subr.mxu0 %v564
      %896 = vmatpush2.msra.mxu0 %v563
      %897 = vmatprep.mubr.f32.mxu0 %v390
      %898 = vmatmul.mubr.f32.gmra.mxu0 %v389
      %v899 = vpop.f32.mrf.mxu0
      %v900 = vadd.f32 %v739, %v899
      %v901 = vpop.f32.mrf.mxu0
      %v902 = vadd.f32 %v741, %v901
      %903 = vmatprep.mubr.f32.mxu0 %v395
      %904 = vmatmul.mubr.f32.gmra.mxu0 %v394
      %v905 = vpop.f32.mrf.mxu0
      %v906 = vadd.f32 %v745, %v905
      %v907 = vpop.f32.mrf.mxu0
      %v908 = vadd.f32 %v747, %v907
      %909 = vmatprep.mubr.f32.mxu0 %v400
      %910 = vmatmul.mubr.f32.gmra.mxu0 %v399
      %v911 = vpop.f32.mrf.mxu0
      %v912 = vadd.f32 %v751, %v911
      %v913 = vpop.f32.mrf.mxu0
      %v914 = vadd.f32 %v753, %v913
      %915 = vmatprep.mubr.f32.mxu0 %v405
      %916 = vmatmul.mubr.f32.gmra.mxu0 %v404
      %v917 = vpop.f32.mrf.mxu0
      %v918 = vadd.f32 %v757, %v917
      %v919 = vpop.f32.mrf.mxu0
      %v920 = vadd.f32 %v759, %v919
      %921 = vmatprep.mubr.f32.mxu0 %v410
      %922 = vmatmul.mubr.f32.gmra.mxu0 %v409
      %v923 = vpop.f32.mrf.mxu0
      %v924 = vadd.f32 %v763, %v923
      %v925 = vpop.f32.mrf.mxu0
      %v926 = vadd.f32 %v765, %v925
      %927 = vmatprep.mubr.f32.mxu0 %v415
      %928 = vmatmul.mubr.f32.gmra.mxu0 %v414
      %v929 = vpop.f32.mrf.mxu0
      %v930 = vadd.f32 %v769, %v929
      %v931 = vpop.f32.mrf.mxu0
      %v932 = vadd.f32 %v771, %v931
      %933 = vmatprep.mubr.f32.mxu0 %v420
      %934 = vmatmul.mubr.f32.gmra.mxu0 %v419
      %v935 = vpop.f32.mrf.mxu0
      %v936 = vadd.f32 %v775, %v935
      %v937 = vpop.f32.mrf.mxu0
      %v938 = vadd.f32 %v777, %v937
      %939 = vmatprep.mubr.f32.mxu0 %v425
      %940 = vmatmul.mubr.f32.gmra.mxu0 %v424
      %v941 = vpop.f32.mrf.mxu0
      %v942 = vadd.f32 %v781, %v941
      %v943 = vpop.f32.mrf.mxu0
      %v944 = vadd.f32 %v783, %v943
      %945 = vmatprep.mubr.f32.mxu0 %v430
      %946 = vmatmul.mubr.f32.gmra.mxu0 %v429
      %v947 = vpop.f32.mrf.mxu0
      %v948 = vadd.f32 %v787, %v947
      %v949 = vpop.f32.mrf.mxu0
      %v950 = vadd.f32 %v789, %v949
      %951 = vmatprep.mubr.f32.mxu0 %v435
      %952 = vmatmul.mubr.f32.gmra.mxu0 %v434
      %v953 = vpop.f32.mrf.mxu0
      %v954 = vadd.f32 %v793, %v953
      %v955 = vpop.f32.mrf.mxu0
      %v956 = vadd.f32 %v795, %v955
      %957 = vmatprep.mubr.f32.mxu0 %v440
      %958 = vmatmul.mubr.f32.gmra.mxu0 %v439
      %v959 = vpop.f32.mrf.mxu0
      %v960 = vadd.f32 %v799, %v959
      %v961 = vpop.f32.mrf.mxu0
      %v962 = vadd.f32 %v801, %v961
      %963 = vmatprep.mubr.f32.mxu0 %v445
      %964 = vmatmul.mubr.f32.gmra.mxu0 %v444
      %v965 = vpop.f32.mrf.mxu0
      %v966 = vadd.f32 %v805, %v965
      %v967 = vpop.f32.mrf.mxu0
      %v968 = vadd.f32 %v807, %v967
      %969 = vmatprep.mubr.f32.mxu0 %v450
      %970 = vmatmul.mubr.f32.gmra.mxu0 %v449
      %v971 = vpop.f32.mrf.mxu0
      %v972 = vadd.f32 %v811, %v971
      %v973 = vpop.f32.mrf.mxu0
      %v974 = vadd.f32 %v813, %v973
      %975 = vmatprep.mubr.f32.mxu0 %v455
      %976 = vmatmul.mubr.f32.gmra.mxu0 %v454
      %v977 = vpop.f32.mrf.mxu0
      %v978 = vadd.f32 %v817, %v977
      %v979 = vpop.f32.mrf.mxu0
      %v980 = vadd.f32 %v819, %v979
      %981 = vmatprep.mubr.f32.mxu0 %v460
      %982 = vmatmul.mubr.f32.gmra.mxu0 %v459
      %v983 = vpop.f32.mrf.mxu0
      %v984 = vadd.f32 %v823, %v983
      %v985 = vpop.f32.mrf.mxu0
      %v986 = vadd.f32 %v825, %v985
      %987 = vmatprep.mubr.f32.mxu0 %v465
      %988 = vmatmul.mubr.f32.gmra.mxu0 %v464
      %v989 = vpop.f32.mrf.mxu0
      %v990 = vadd.f32 %v829, %v989
      %v991 = vpop.f32.mrf.mxu0
      %v992 = vadd.f32 %v831, %v991
      %993 = vdwg.mxu0
      %994 = vmatprep.subr.mxu0 0.0
      %995 = vmatpush1.msra.mxu0 0.0
      %996 = vmatprep.subr.mxu0 0.0
      %997 = vmatpush1.msra.mxu0 0.0
      %998 = vmatprep.subr.mxu0 0.0
      %999 = vmatpush1.msra.mxu0 0.0
      %1000 = vmatprep.subr.mxu0 0.0
      %1001 = vmatpush1.msra.mxu0 0.0
      %1002 = vmatprep.subr.mxu0 0.0
      %1003 = vmatpush1.msra.mxu0 0.0
      %1004 = vmatprep.subr.mxu0 0.0
      %1005 = vmatpush1.msra.mxu0 0.0
      %1006 = vmatprep.subr.mxu0 0.0
      %1007 = vmatpush1.msra.mxu0 0.0
      %1008 = vmatprep.subr.mxu0 0.0
      %1009 = vmatpush1.msra.mxu0 0.0
      %1010 = vmatprep.subr.mxu0 %v610
      %1011 = vmatpush1.msra.mxu0 %v609
      %1012 = vmatprep.subr.mxu0 %v608
      %1013 = vmatpush1.msra.mxu0 %v607
      %1014 = vmatprep.subr.mxu0 %v606
      %1015 = vmatpush1.msra.mxu0 %v605
      %1016 = vmatprep.subr.mxu0 %v604
      %1017 = vmatpush1.msra.mxu0 %v603
      %1018 = vmatprep.subr.mxu0 %v602
      %1019 = vmatpush1.msra.mxu0 %v601
      %1020 = vmatprep.subr.mxu0 %v600
      %1021 = vmatpush1.msra.mxu0 %v599
      %1022 = vmatprep.subr.mxu0 %v598
      %1023 = vmatpush1.msra.mxu0 %v597
      %1024 = vmatprep.subr.mxu0 %v596
      %1025 = vmatpush1.msra.mxu0 %v595
      %1026 = vmatprep.subr.mxu0 0.0
      %1027 = vmatpush2.msra.mxu0 0.0
      %1028 = vmatprep.subr.mxu0 0.0
      %1029 = vmatpush2.msra.mxu0 0.0
      %1030 = vmatprep.subr.mxu0 0.0
      %1031 = vmatpush2.msra.mxu0 0.0
      %1032 = vmatprep.subr.mxu0 0.0
      %1033 = vmatpush2.msra.mxu0 0.0
      %1034 = vmatprep.subr.mxu0 0.0
      %1035 = vmatpush2.msra.mxu0 0.0
      %1036 = vmatprep.subr.mxu0 0.0
      %1037 = vmatpush2.msra.mxu0 0.0
      %1038 = vmatprep.subr.mxu0 0.0
      %1039 = vmatpush2.msra.mxu0 0.0
      %1040 = vmatprep.subr.mxu0 0.0
      %1041 = vmatpush2.msra.mxu0 0.0
      %1042 = vmatprep.subr.mxu0 0.0
      %1043 = vmatpush2.msra.mxu0 0.0
      %1044 = vmatprep.subr.mxu0 0.0
      %1045 = vmatpush2.msra.mxu0 0.0
      %1046 = vmatprep.subr.mxu0 0.0
      %1047 = vmatpush2.msra.mxu0 0.0
      %1048 = vmatprep.subr.mxu0 0.0
      %1049 = vmatpush2.msra.mxu0 0.0
      %1050 = vmatprep.subr.mxu0 0.0
      %1051 = vmatpush2.msra.mxu0 0.0
      %1052 = vmatprep.subr.mxu0 0.0
      %1053 = vmatpush2.msra.mxu0 0.0
      %1054 = vmatprep.subr.mxu0 0.0
      %1055 = vmatpush2.msra.mxu0 0.0
      %1056 = vmatprep.subr.mxu0 0.0
      %1057 = vmatpush2.msra.mxu0 0.0
      %1058 = vmatprep.mubr.f32.mxu0 0.0
      %1059 = vmatmul.mubr.f32.gmra.mxu0 %v625
      %v1060 = vpop.f32.mrf.mxu0
      %v1061 = vadd.f32 %v900, %v1060
      %v1062 = vpop.f32.mrf.mxu0
      %v1063 = vadd.f32 %v902, %v1062
      %1064 = vmatprep.mubr.f32.mxu0 0.0
      %1065 = vmatmul.mubr.f32.gmra.mxu0 %v628
      %v1066 = vpop.f32.mrf.mxu0
      %v1067 = vadd.f32 %v906, %v1066
      %v1068 = vpop.f32.mrf.mxu0
      %v1069 = vadd.f32 %v908, %v1068
      %1070 = vmatprep.mubr.f32.mxu0 0.0
      %1071 = vmatmul.mubr.f32.gmra.mxu0 %v631
      %v1072 = vpop.f32.mrf.mxu0
      %v1073 = vadd.f32 %v912, %v1072
      %v1074 = vpop.f32.mrf.mxu0
      %v1075 = vadd.f32 %v914, %v1074
      %1076 = vmatprep.mubr.f32.mxu0 0.0
      %1077 = vmatmul.mubr.f32.gmra.mxu0 %v634
      %v1078 = vpop.f32.mrf.mxu0
      %v1079 = vadd.f32 %v918, %v1078
      %v1080 = vpop.f32.mrf.mxu0
      %v1081 = vadd.f32 %v920, %v1080
      %1082 = vmatprep.mubr.f32.mxu0 0.0
      %1083 = vmatmul.mubr.f32.gmra.mxu0 %v637
      %v1084 = vpop.f32.mrf.mxu0
      %v1085 = vadd.f32 %v924, %v1084
      %v1086 = vpop.f32.mrf.mxu0
      %v1087 = vadd.f32 %v926, %v1086
      %1088 = vmatprep.mubr.f32.mxu0 0.0
      %1089 = vmatmul.mubr.f32.gmra.mxu0 %v640
      %v1090 = vpop.f32.mrf.mxu0
      %v1091 = vadd.f32 %v930, %v1090
      %v1092 = vpop.f32.mrf.mxu0
      %v1093 = vadd.f32 %v932, %v1092
      %1094 = vmatprep.mubr.f32.mxu0 0.0
      %1095 = vmatmul.mubr.f32.gmra.mxu0 %v643
      %v1096 = vpop.f32.mrf.mxu0
      %v1097 = vadd.f32 %v936, %v1096
      %v1098 = vpop.f32.mrf.mxu0
      %v1099 = vadd.f32 %v938, %v1098
      %1100 = vmatprep.mubr.f32.mxu0 0.0
      %1101 = vmatmul.mubr.f32.gmra.mxu0 %v646
      %v1102 = vpop.f32.mrf.mxu0
      %v1103 = vadd.f32 %v942, %v1102
      %v1104 = vpop.f32.mrf.mxu0
      %v1105 = vadd.f32 %v944, %v1104
      %1106 = vmatprep.mubr.f32.mxu0 0.0
      %1107 = vmatmul.mubr.f32.gmra.mxu0 %v649
      %v1108 = vpop.f32.mrf.mxu0
      %v1109 = vadd.f32 %v948, %v1108
      %v1110 = vpop.f32.mrf.mxu0
      %v1111 = vadd.f32 %v950, %v1110
      %1112 = vmatprep.mubr.f32.mxu0 0.0
      %1113 = vmatmul.mubr.f32.gmra.mxu0 %v652
      %v1114 = vpop.f32.mrf.mxu0
      %v1115 = vadd.f32 %v954, %v1114
      %v1116 = vpop.f32.mrf.mxu0
      %v1117 = vadd.f32 %v956, %v1116
      %1118 = vmatprep.mubr.f32.mxu0 0.0
      %1119 = vmatmul.mubr.f32.gmra.mxu0 %v655
      %v1120 = vpop.f32.mrf.mxu0
      %v1121 = vadd.f32 %v960, %v1120
      %v1122 = vpop.f32.mrf.mxu0
      %v1123 = vadd.f32 %v962, %v1122
      %1124 = vmatprep.mubr.f32.mxu0 0.0
      %1125 = vmatmul.mubr.f32.gmra.mxu0 %v658
      %v1126 = vpop.f32.mrf.mxu0
      %v1127 = vadd.f32 %v966, %v1126
      %v1128 = vpop.f32.mrf.mxu0
      %v1129 = vadd.f32 %v968, %v1128
      %1130 = vmatprep.mubr.f32.mxu0 0.0
      %1131 = vmatmul.mubr.f32.gmra.mxu0 %v661
      %v1132 = vpop.f32.mrf.mxu0
      %v1133 = vadd.f32 %v972, %v1132
      %v1134 = vpop.f32.mrf.mxu0
      %v1135 = vadd.f32 %v974, %v1134
      %1136 = vmatprep.mubr.f32.mxu0 0.0
      %1137 = vmatmul.mubr.f32.gmra.mxu0 %v664
      %v1138 = vpop.f32.mrf.mxu0
      %v1139 = vadd.f32 %v978, %v1138
      %v1140 = vpop.f32.mrf.mxu0
      %v1141 = vadd.f32 %v980, %v1140
      %1142 = vmatprep.mubr.f32.mxu0 0.0
      %1143 = vmatmul.mubr.f32.gmra.mxu0 %v667
      %v1144 = vpop.f32.mrf.mxu0
      %v1145 = vadd.f32 %v984, %v1144
      %v1146 = vpop.f32.mrf.mxu0
      %v1147 = vadd.f32 %v986, %v1146
      %1148 = vmatprep.mubr.f32.mxu0 0.0
      %1149 = vmatmul.mubr.f32.gmra.mxu0 %v670
      %v1150 = vpop.f32.mrf.mxu0
      %v1151 = vadd.f32 %v990, %v1150
      %v1152 = vpop.f32.mrf.mxu0
      %v1153 = vadd.f32 %v992, %v1152
      %1154 = vdwg.mxu0
      %v1155 = vld [vmem:[%s5] sm:$0xff]
      %v1156 = vld [vmem:[%s5 + $0x8] sm:$0xff]
      %v1157 = vld [vmem:[%s5 + $0x10] sm:$0xff]
      %v1158 = vld [vmem:[%s5 + $0x18] sm:$0xff]
      %v1159 = vld [vmem:[%s5 + $0x20] sm:$0xff]
      %v1160 = vld [vmem:[%s5 + $0x28] sm:$0xff]
      %v1161 = vld [vmem:[%s5 + $0x30] sm:$0xff]
      %v1162 = vld [vmem:[%s5 + $0x38] sm:$0xff]
      %v1163 = vld [vmem:[%s5 + $0x40] sm:$0xff]
      %v1164 = vld [vmem:[%s5 + $0x48] sm:$0xff]
      %v1165 = vld [vmem:[%s5 + $0x50] sm:$0xff]
      %v1166 = vld [vmem:[%s5 + $0x58] sm:$0xff]
      %v1167 = vld [vmem:[%s5 + $0x60] sm:$0xff]
      %v1168 = vld [vmem:[%s5 + $0x68] sm:$0xff]
      %v1169 = vld [vmem:[%s5 + $0x70] sm:$0xff]
      %v1170 = vld [vmem:[%s5 + $0x78] sm:$0xff]
      %v1171 = vld [vmem:[%s6] sm:$0xff]
      %v1172 = vld [vmem:[%s6 + $0x8] sm:$0xff]
      %v1173 = vld [vmem:[%s6 + $0x10] sm:$0xff]
      %v1174 = vld [vmem:[%s6 + $0x18] sm:$0xff]
      %v1175 = vld [vmem:[%s7] sm:$0xff]
      %v1176 = vld [vmem:[%s7 + $0x8] sm:$0xff]
      %v1177 = vld [vmem:[%s7 + $0x10] sm:$0xff]
      %v1178 = vld [vmem:[%s7 + $0x18] sm:$0xff]
      %v1179 = vld [vmem:[%s8] sm:$0xff]
      %v1180 = vld [vmem:[%s8 + $0x8] sm:$0xff]
      %v1181 = vld [vmem:[%s8 + $0x10] sm:$0xff]
      %v1182 = vld [vmem:[%s8 + $0x18] sm:$0xff]
      %v1183 = vld [vmem:[%s3] sm:$0xff]
      %v1184 = vld [vmem:[%s3 + $0x8] sm:$0xff]
      %v1185 = vld [vmem:[%s3 + $0x10] sm:$0xff]
      %v1186 = vld [vmem:[%s3 + $0x18] sm:$0xff]
      %v1187 = vld [vmem:[%s4] sm:$0x1]
      %v1189 = vlaneseq
      %v1190 = vshrl.u32 %v1189, 7
      %v1191 = vsub.s32 0, %v1190
      %v1192 = vrot.slane %v1187, %v1191
      %vm1194 = vcmask 261120
      %v1196 = vsel %vm1194, %v1063, 0
      %v1199 = vsel %vm1194, %v1069, 0
      %v1202 = vsel %vm1194, %v1075, 0
      %v1205 = vsel %vm1194, %v1081, 0
      %v1208 = vsel %vm1194, %v1087, 0
      %v1211 = vsel %vm1194, %v1093, 0
      %v1214 = vsel %vm1194, %v1099, 0
      %v1217 = vsel %vm1194, %v1105, 0
      %v1220 = vsel %vm1194, %v1111, 0
      %v1223 = vsel %vm1194, %v1117, 0
      %v1226 = vsel %vm1194, %v1123, 0
      %v1229 = vsel %vm1194, %v1129, 0
      %v1232 = vsel %vm1194, %v1135, 0
      %v1235 = vsel %vm1194, %v1141, 0
      %v1238 = vsel %vm1194, %v1147, 0
      %v1241 = vsel %vm1194, %v1153, 0
      %1243 = vmatprep.subr.mxu0 0.0
      %1244 = vmatpush1.msra.mxu0 0.0
      %1245 = vmatprep.subr.mxu0 0.0
      %1246 = vmatpush1.msra.mxu0 0.0
      %1247 = vmatprep.subr.mxu0 0.0
      %1248 = vmatpush1.msra.mxu0 0.0
      %1249 = vmatprep.subr.mxu0 0.0
      %1250 = vmatpush1.msra.mxu0 0.0
      %1251 = vmatprep.subr.mxu0 0.0
      %1252 = vmatpush1.msra.mxu0 0.0
      %1253 = vmatprep.subr.mxu0 0.0
      %1254 = vmatpush1.msra.mxu0 0.0
      %1255 = vmatprep.subr.mxu0 0.0
      %1256 = vmatpush1.msra.mxu0 0.0
      %1257 = vmatprep.subr.mxu0 0.0
      %1258 = vmatpush1.msra.mxu0 0.0
      %1259 = vmatprep.subr.mxu0 0.0
      %1260 = vmatpush1.msra.mxu0 0.0
      %1261 = vmatprep.subr.mxu0 0.0
      %1262 = vmatpush1.msra.mxu0 0.0
      %1263 = vmatprep.subr.mxu0 0.0
      %1264 = vmatpush1.msra.mxu0 0.0
      %1265 = vmatprep.subr.mxu0 0.0
      %1266 = vmatpush1.msra.mxu0 0.0
      %1267 = vmatprep.subr.mxu0 0.0
      %1268 = vmatpush1.msra.mxu0 %v1186
      %1269 = vmatprep.subr.mxu0 0.0
      %1270 = vmatpush1.msra.mxu0 %v1185
      %1271 = vmatprep.subr.mxu0 0.0
      %1272 = vmatpush1.msra.mxu0 %v1184
      %1273 = vmatprep.subr.mxu0 0.0
      %1274 = vmatpush1.msra.mxu0 %v1183
      %1275 = vmatprep.subr.mxu0 0.0
      %1276 = vmatpush2.msra.mxu0 0.0
      %1277 = vmatprep.subr.mxu0 0.0
      %1278 = vmatpush2.msra.mxu0 0.0
      %1279 = vmatprep.subr.mxu0 0.0
      %1280 = vmatpush2.msra.mxu0 0.0
      %1281 = vmatprep.subr.mxu0 0.0
      %1282 = vmatpush2.msra.mxu0 0.0
      %1283 = vmatprep.subr.mxu0 0.0
      %1284 = vmatpush2.msra.mxu0 0.0
      %1285 = vmatprep.subr.mxu0 0.0
      %1286 = vmatpush2.msra.mxu0 0.0
      %1287 = vmatprep.subr.mxu0 0.0
      %1288 = vmatpush2.msra.mxu0 0.0
      %1289 = vmatprep.subr.mxu0 0.0
      %1290 = vmatpush2.msra.mxu0 0.0
      %1291 = vmatprep.subr.mxu0 0.0
      %1292 = vmatpush2.msra.mxu0 0.0
      %1293 = vmatprep.subr.mxu0 0.0
      %1294 = vmatpush2.msra.mxu0 0.0
      %1295 = vmatprep.subr.mxu0 0.0
      %1296 = vmatpush2.msra.mxu0 0.0
      %1297 = vmatprep.subr.mxu0 0.0
      %1298 = vmatpush2.msra.mxu0 0.0
      %1299 = vmatprep.subr.mxu0 0.0
      %1300 = vmatpush2.msra.mxu0 0.0
      %1301 = vmatprep.subr.mxu0 0.0
      %1302 = vmatpush2.msra.mxu0 0.0
      %1303 = vmatprep.subr.mxu0 0.0
      %1304 = vmatpush2.msra.mxu0 0.0
      %1305 = vmatprep.subr.mxu0 0.0
      %1306 = vmatpush2.msra.mxu0 0.0
      %1307 = vmatprep.mubr.f32.mxu0 0.0
      %1308 = vmatmul.mubr.f32.gmra.mxu0 %v1196
      %v1309 = vpop.f32.mrf.mxu0
      %v1310 = vadd.f32 %v1192, %v1309
      %v1311 = vpop.f32.mrf.mxu0
      %1312 = vmatprep.mubr.f32.mxu0 0.0
      %1313 = vmatmul.mubr.f32.gmra.mxu0 %v1199
      %v1314 = vpop.f32.mrf.mxu0
      %v1315 = vadd.f32 %v1192, %v1314
      %v1316 = vpop.f32.mrf.mxu0
      %1317 = vmatprep.mubr.f32.mxu0 0.0
      %1318 = vmatmul.mubr.f32.gmra.mxu0 %v1202
      %v1319 = vpop.f32.mrf.mxu0
      %v1320 = vadd.f32 %v1192, %v1319
      %v1321 = vpop.f32.mrf.mxu0
      %1322 = vmatprep.mubr.f32.mxu0 0.0
      %1323 = vmatmul.mubr.f32.gmra.mxu0 %v1205
      %v1324 = vpop.f32.mrf.mxu0
      %v1325 = vadd.f32 %v1192, %v1324
      %v1326 = vpop.f32.mrf.mxu0
      %1327 = vmatprep.mubr.f32.mxu0 0.0
      %1328 = vmatmul.mubr.f32.gmra.mxu0 %v1208
      %v1329 = vpop.f32.mrf.mxu0
      %v1330 = vadd.f32 %v1192, %v1329
      %v1331 = vpop.f32.mrf.mxu0
      %1332 = vmatprep.mubr.f32.mxu0 0.0
      %1333 = vmatmul.mubr.f32.gmra.mxu0 %v1211
      %v1334 = vpop.f32.mrf.mxu0
      %v1335 = vadd.f32 %v1192, %v1334
      %v1336 = vpop.f32.mrf.mxu0
      %1337 = vmatprep.mubr.f32.mxu0 0.0
      %1338 = vmatmul.mubr.f32.gmra.mxu0 %v1214
      %v1339 = vpop.f32.mrf.mxu0
      %v1340 = vadd.f32 %v1192, %v1339
      %v1341 = vpop.f32.mrf.mxu0
      %1342 = vmatprep.mubr.f32.mxu0 0.0
      %1343 = vmatmul.mubr.f32.gmra.mxu0 %v1217
      %v1344 = vpop.f32.mrf.mxu0
      %v1345 = vadd.f32 %v1192, %v1344
      %v1346 = vpop.f32.mrf.mxu0
      %1347 = vmatprep.mubr.f32.mxu0 0.0
      %1348 = vmatmul.mubr.f32.gmra.mxu0 %v1220
      %v1349 = vpop.f32.mrf.mxu0
      %v1350 = vadd.f32 %v1192, %v1349
      %v1351 = vpop.f32.mrf.mxu0
      %1352 = vmatprep.mubr.f32.mxu0 0.0
      %1353 = vmatmul.mubr.f32.gmra.mxu0 %v1223
      %v1354 = vpop.f32.mrf.mxu0
      %v1355 = vadd.f32 %v1192, %v1354
      %v1356 = vpop.f32.mrf.mxu0
      %1357 = vmatprep.mubr.f32.mxu0 0.0
      %1358 = vmatmul.mubr.f32.gmra.mxu0 %v1226
      %v1359 = vpop.f32.mrf.mxu0
      %v1360 = vadd.f32 %v1192, %v1359
      %v1361 = vpop.f32.mrf.mxu0
      %1362 = vmatprep.mubr.f32.mxu0 0.0
      %1363 = vmatmul.mubr.f32.gmra.mxu0 %v1229
      %v1364 = vpop.f32.mrf.mxu0
      %v1365 = vadd.f32 %v1192, %v1364
      %v1366 = vpop.f32.mrf.mxu0
      %1367 = vmatprep.mubr.f32.mxu0 0.0
      %1368 = vmatmul.mubr.f32.gmra.mxu0 %v1232
      %v1369 = vpop.f32.mrf.mxu0
      %v1370 = vadd.f32 %v1192, %v1369
      %v1371 = vpop.f32.mrf.mxu0
      %1372 = vmatprep.mubr.f32.mxu0 0.0
      %1373 = vmatmul.mubr.f32.gmra.mxu0 %v1235
      %v1374 = vpop.f32.mrf.mxu0
      %v1375 = vadd.f32 %v1192, %v1374
      %v1376 = vpop.f32.mrf.mxu0
      %1377 = vmatprep.mubr.f32.mxu0 0.0
      %1378 = vmatmul.mubr.f32.gmra.mxu0 %v1238
      %v1379 = vpop.f32.mrf.mxu0
      %v1380 = vadd.f32 %v1192, %v1379
      %v1381 = vpop.f32.mrf.mxu0
      %1382 = vmatprep.mubr.f32.mxu0 0.0
      %1383 = vmatmul.mubr.f32.gmra.mxu0 %v1241
      %v1384 = vpop.f32.mrf.mxu0
      %v1385 = vadd.f32 %v1192, %v1384
      %v1386 = vpop.f32.mrf.mxu0
      %1387 = vdwg.mxu0
      %v1388 = vsel %vm1194, %v1310, -inf
      %1389 = vmax.xlane.f32.xlu0 %v1388
      %v1390 = vpop.xlane.xlu0 %1389
      %v1391 = vsel %vm1194, %v1315, -inf
      %1392 = vmax.xlane.f32.xlu0 %v1391
      %v1393 = vpop.xlane.xlu0 %1392
      %v1394 = vsel %vm1194, %v1320, -inf
      %1395 = vmax.xlane.f32.xlu0 %v1394
      %v1396 = vpop.xlane.xlu0 %1395
      %v1397 = vsel %vm1194, %v1325, -inf
      %1398 = vmax.xlane.f32.xlu0 %v1397
      %v1399 = vpop.xlane.xlu0 %1398
      %v1400 = vsel %vm1194, %v1330, -inf
      %1401 = vmax.xlane.f32.xlu0 %v1400
      %v1402 = vpop.xlane.xlu0 %1401
      %v1403 = vsel %vm1194, %v1335, -inf
      %1404 = vmax.xlane.f32.xlu0 %v1403
      %v1405 = vpop.xlane.xlu0 %1404
      %v1406 = vsel %vm1194, %v1340, -inf
      %1407 = vmax.xlane.f32.xlu0 %v1406
      %v1408 = vpop.xlane.xlu0 %1407
      %v1409 = vsel %vm1194, %v1345, -inf
      %1410 = vmax.xlane.f32.xlu0 %v1409
      %v1411 = vpop.xlane.xlu0 %1410
      %v1412 = vsel %vm1194, %v1350, -inf
      %1413 = vmax.xlane.f32.xlu0 %v1412
      %v1414 = vpop.xlane.xlu0 %1413
      %v1415 = vsel %vm1194, %v1355, -inf
      %1416 = vmax.xlane.f32.xlu0 %v1415
      %v1417 = vpop.xlane.xlu0 %1416
      %v1418 = vsel %vm1194, %v1360, -inf
      %1419 = vmax.xlane.f32.xlu0 %v1418
      %v1420 = vpop.xlane.xlu0 %1419
      %v1421 = vsel %vm1194, %v1365, -inf
      %1422 = vmax.xlane.f32.xlu0 %v1421
      %v1423 = vpop.xlane.xlu0 %1422
      %v1424 = vsel %vm1194, %v1370, -inf
      %1425 = vmax.xlane.f32.xlu0 %v1424
      %v1426 = vpop.xlane.xlu0 %1425
      %v1427 = vsel %vm1194, %v1375, -inf
      %1428 = vmax.xlane.f32.xlu0 %v1427
      %v1429 = vpop.xlane.xlu0 %1428
      %v1430 = vsel %vm1194, %v1380, -inf
      %1431 = vmax.xlane.f32.xlu0 %v1430
      %v1432 = vpop.xlane.xlu0 %1431
      %v1433 = vsel %vm1194, %v1385, -inf
      %1434 = vmax.xlane.f32.xlu0 %v1433
      %v1435 = vpop.xlane.xlu0 %1434
      %v1436 = vsub.f32 %v1310, %v1390
      %v1437 = vsub.f32 %v1315, %v1393
      %v1438 = vsub.f32 %v1320, %v1396
      %v1439 = vsub.f32 %v1325, %v1399
      %v1440 = vsub.f32 %v1330, %v1402
      %v1441 = vsub.f32 %v1335, %v1405
      %v1442 = vsub.f32 %v1340, %v1408
      %v1443 = vsub.f32 %v1345, %v1411
      %v1444 = vsub.f32 %v1350, %v1414
      %v1445 = vsub.f32 %v1355, %v1417
      %v1446 = vsub.f32 %v1360, %v1420
      %v1447 = vsub.f32 %v1365, %v1423
      %v1448 = vsub.f32 %v1370, %v1426
      %v1449 = vsub.f32 %v1375, %v1429
      %v1450 = vsub.f32 %v1380, %v1432
      %v1451 = vsub.f32 %v1385, %v1435
      %v1452 = vmul.f32 %v1436, 1.442695
      %v1453 = vpow.pop %v1452
      %v1454 = vmul.f32 %v1437, 1.442695
      %v1455 = vpow.pop %v1454
      %v1456 = vmul.f32 %v1438, 1.442695
      %v1457 = vpow.pop %v1456
      %v1458 = vmul.f32 %v1439, 1.442695
      %v1459 = vpow.pop %v1458
      %v1460 = vmul.f32 %v1440, 1.442695
      %v1461 = vpow.pop %v1460
      %v1462 = vmul.f32 %v1441, 1.442695
      %v1463 = vpow.pop %v1462
      %v1464 = vmul.f32 %v1442, 1.442695
      %v1465 = vpow.pop %v1464
      %v1466 = vmul.f32 %v1443, 1.442695
      %v1467 = vpow.pop %v1466
      %v1468 = vmul.f32 %v1444, 1.442695
      %v1469 = vpow.pop %v1468
      %v1470 = vmul.f32 %v1445, 1.442695
      %v1471 = vpow.pop %v1470
      %v1472 = vmul.f32 %v1446, 1.442695
      %v1473 = vpow.pop %v1472
      %v1474 = vmul.f32 %v1447, 1.442695
      %v1475 = vpow.pop %v1474
      %v1476 = vmul.f32 %v1448, 1.442695
      %v1477 = vpow.pop %v1476
      %v1478 = vmul.f32 %v1449, 1.442695
      %v1479 = vpow.pop %v1478
      %v1480 = vmul.f32 %v1450, 1.442695
      %v1481 = vpow.pop %v1480
      %v1482 = vmul.f32 %v1451, 1.442695
      %v1483 = vpow.pop %v1482
      %v1484 = vsel %vm1194, %v1453, 0.0
      %1485 = vadd.xlane.f32.xlu0 %v1484
      %v1486 = vpop.xlane.xlu0 %1485
      %v1487 = vsel %vm1194, %v1455, 0.0
      %1488 = vadd.xlane.f32.xlu0 %v1487
      %v1489 = vpop.xlane.xlu0 %1488
      %v1490 = vsel %vm1194, %v1457, 0.0
      %1491 = vadd.xlane.f32.xlu0 %v1490
      %v1492 = vpop.xlane.xlu0 %1491
      %v1493 = vsel %vm1194, %v1459, 0.0
      %1494 = vadd.xlane.f32.xlu0 %v1493
      %v1495 = vpop.xlane.xlu0 %1494
      %v1496 = vsel %vm1194, %v1461, 0.0
      %1497 = vadd.xlane.f32.xlu0 %v1496
      %v1498 = vpop.xlane.xlu0 %1497
      %v1499 = vsel %vm1194, %v1463, 0.0
      %1500 = vadd.xlane.f32.xlu0 %v1499
      %v1501 = vpop.xlane.xlu0 %1500
      %v1502 = vsel %vm1194, %v1465, 0.0
      %1503 = vadd.xlane.f32.xlu0 %v1502
      %v1504 = vpop.xlane.xlu0 %1503
      %v1505 = vsel %vm1194, %v1467, 0.0
      %1506 = vadd.xlane.f32.xlu0 %v1505
      %v1507 = vpop.xlane.xlu0 %1506
      %v1508 = vsel %vm1194, %v1469, 0.0
      %1509 = vadd.xlane.f32.xlu0 %v1508
      %v1510 = vpop.xlane.xlu0 %1509
      %v1511 = vsel %vm1194, %v1471, 0.0
      %1512 = vadd.xlane.f32.xlu0 %v1511
      %v1513 = vpop.xlane.xlu0 %1512
      %v1514 = vsel %vm1194, %v1473, 0.0
      %1515 = vadd.xlane.f32.xlu0 %v1514
      %v1516 = vpop.xlane.xlu0 %1515
      %v1517 = vsel %vm1194, %v1475, 0.0
      %1518 = vadd.xlane.f32.xlu0 %v1517
      %v1519 = vpop.xlane.xlu0 %1518
      %v1520 = vsel %vm1194, %v1477, 0.0
      %1521 = vadd.xlane.f32.xlu0 %v1520
      %v1522 = vpop.xlane.xlu0 %1521
      %v1523 = vsel %vm1194, %v1479, 0.0
      %1524 = vadd.xlane.f32.xlu0 %v1523
      %v1525 = vpop.xlane.xlu0 %1524
      %v1526 = vsel %vm1194, %v1481, 0.0
      %1527 = vadd.xlane.f32.xlu0 %v1526
      %v1528 = vpop.xlane.xlu0 %1527
      %v1529 = vsel %vm1194, %v1483, 0.0
      %1530 = vadd.xlane.f32.xlu0 %v1529
      %v1531 = vpop.xlane.xlu0 %1530
      %v1532 = vrcp.pop %v1486
      %v1533 = vrcp.pop %v1489
      %v1534 = vrcp.pop %v1492
      %v1535 = vrcp.pop %v1495
      %v1536 = vrcp.pop %v1498
      %v1537 = vrcp.pop %v1501
      %v1538 = vrcp.pop %v1504
      %v1539 = vrcp.pop %v1507
      %v1540 = vrcp.pop %v1510
      %v1541 = vrcp.pop %v1513
      %v1542 = vrcp.pop %v1516
      %v1543 = vrcp.pop %v1519
      %v1544 = vrcp.pop %v1522
      %v1545 = vrcp.pop %v1525
      %v1546 = vrcp.pop %v1528
      %v1547 = vrcp.pop %v1531
      %v1548 = vmul.f32 %v1453, %v1532
      %v1549 = vmul.f32 %v1455, %v1533
      %v1550 = vmul.f32 %v1457, %v1534
      %v1551 = vmul.f32 %v1459, %v1535
      %v1552 = vmul.f32 %v1461, %v1536
      %v1553 = vmul.f32 %v1463, %v1537
      %v1554 = vmul.f32 %v1465, %v1538
      %v1555 = vmul.f32 %v1467, %v1539
      %v1556 = vmul.f32 %v1469, %v1540
      %v1557 = vmul.f32 %v1471, %v1541
      %v1558 = vmul.f32 %v1473, %v1542
      %v1559 = vmul.f32 %v1475, %v1543
      %v1560 = vmul.f32 %v1477, %v1544
      %v1561 = vmul.f32 %v1479, %v1545
      %v1562 = vmul.f32 %v1481, %v1546
      %v1563 = vmul.f32 %v1483, %v1547
      %v1564 = vmul.f32 %v1548, %v1155
      %v1565 = vmul.f32 %v1549, %v1156
      %v1566 = vmul.f32 %v1550, %v1157
      %v1567 = vmul.f32 %v1551, %v1158
      %v1568 = vmul.f32 %v1552, %v1159
      %v1569 = vmul.f32 %v1553, %v1160
      %v1570 = vmul.f32 %v1554, %v1161
      %v1571 = vmul.f32 %v1555, %v1162
      %v1572 = vmul.f32 %v1556, %v1163
      %v1573 = vmul.f32 %v1557, %v1164
      %v1574 = vmul.f32 %v1558, %v1165
      %v1575 = vmul.f32 %v1559, %v1166
      %v1576 = vmul.f32 %v1560, %v1167
      %v1577 = vmul.f32 %v1561, %v1168
      %v1578 = vmul.f32 %v1562, %v1169
      %v1579 = vmul.f32 %v1563, %v1170
      %1580 = vxpose.xlu0.b32.start [1/16] %v1564, 128
      %1581 = vxpose.xlu0.b32.cont [2/16] %v1565, 128
      %1582 = vxpose.xlu0.b32.cont [3/16] %v1566, 128
      %1583 = vxpose.xlu0.b32.cont [4/16] %v1567, 128
      %1584 = vxpose.xlu0.b32.cont [5/16] %v1568, 128
      %1585 = vxpose.xlu0.b32.cont [6/16] %v1569, 128
      %1586 = vxpose.xlu0.b32.cont [7/16] %v1570, 128
      %1587 = vxpose.xlu0.b32.cont [8/16] %v1571, 128
      %1588 = vxpose.xlu0.b32.cont [9/16] %v1572, 128
      %1589 = vxpose.xlu0.b32.cont [10/16] %v1573, 128
      %1590 = vxpose.xlu0.b32.cont [11/16] %v1574, 128
      %1591 = vxpose.xlu0.b32.cont [12/16] %v1575, 128
      %1592 = vxpose.xlu0.b32.cont [13/16] %v1576, 128
      %1593 = vxpose.xlu0.b32.cont [14/16] %v1577, 128
      %1594 = vxpose.xlu0.b32.cont [15/16] %v1578, 128
      %1595 = vxpose.xlu0.b32.end [16/16] %v1579, 128
      %v1596 = vpop.trf.xlu0
      %v1597 = vpop.trf.xlu0
      %v1598 = vpop.trf.xlu0
      %v1599 = vpop.trf.xlu0
      %v1600 = vpop.trf.xlu0
      %v1601 = vpop.trf.xlu0
      %v1602 = vpop.trf.xlu0
      %v1603 = vpop.trf.xlu0
      %v1604 = vpop.trf.xlu0
      %v1605 = vpop.trf.xlu0
      %v1606 = vpop.trf.xlu0
      %v1607 = vpop.trf.xlu0
      %v1608 = vpop.trf.xlu0
      %v1609 = vpop.trf.xlu0
      %v1610 = vpop.trf.xlu0
      %v1611 = vpop.trf.xlu0
      %1612 = vmatprep.subr.mxu0 0.0
      %1613 = vmatpush1.msra.mxu0 %v1151
      %1614 = vmatprep.subr.mxu0 0.0
      %1615 = vmatpush1.msra.mxu0 %v1145
      %1616 = vmatprep.subr.mxu0 0.0
      %1617 = vmatpush1.msra.mxu0 %v1139
      %1618 = vmatprep.subr.mxu0 0.0
      %1619 = vmatpush1.msra.mxu0 %v1133
      %1620 = vmatprep.subr.mxu0 0.0
      %1621 = vmatpush1.msra.mxu0 %v1127
      %1622 = vmatprep.subr.mxu0 0.0
      %1623 = vmatpush1.msra.mxu0 %v1121
      %1624 = vmatprep.subr.mxu0 0.0
      %1625 = vmatpush1.msra.mxu0 %v1115
      %1626 = vmatprep.subr.mxu0 0.0
      %1627 = vmatpush1.msra.mxu0 %v1109
      %1628 = vmatprep.subr.mxu0 0.0
      %1629 = vmatpush1.msra.mxu0 %v1103
      %1630 = vmatprep.subr.mxu0 0.0
      %1631 = vmatpush1.msra.mxu0 %v1097
      %1632 = vmatprep.subr.mxu0 0.0
      %1633 = vmatpush1.msra.mxu0 %v1091
      %1634 = vmatprep.subr.mxu0 0.0
      %1635 = vmatpush1.msra.mxu0 %v1085
      %1636 = vmatprep.subr.mxu0 0.0
      %1637 = vmatpush1.msra.mxu0 %v1079
      %1638 = vmatprep.subr.mxu0 0.0
      %1639 = vmatpush1.msra.mxu0 %v1073
      %1640 = vmatprep.subr.mxu0 0.0
      %1641 = vmatpush1.msra.mxu0 %v1067
      %1642 = vmatprep.subr.mxu0 0.0
      %1643 = vmatpush1.msra.mxu0 %v1061
      %1644 = vmatprep.subr.mxu0 0.0
      %1645 = vmatpush2.msra.mxu0 0.0
      %1646 = vmatprep.subr.mxu0 0.0
      %1647 = vmatpush2.msra.mxu0 0.0
      %1648 = vmatprep.subr.mxu0 0.0
      %1649 = vmatpush2.msra.mxu0 0.0
      %1650 = vmatprep.subr.mxu0 0.0
      %1651 = vmatpush2.msra.mxu0 0.0
      %1652 = vmatprep.subr.mxu0 0.0
      %1653 = vmatpush2.msra.mxu0 0.0
      %1654 = vmatprep.subr.mxu0 0.0
      %1655 = vmatpush2.msra.mxu0 0.0
      %1656 = vmatprep.subr.mxu0 0.0
      %1657 = vmatpush2.msra.mxu0 0.0
      %1658 = vmatprep.subr.mxu0 0.0
      %1659 = vmatpush2.msra.mxu0 0.0
      %1660 = vmatprep.subr.mxu0 0.0
      %1661 = vmatpush2.msra.mxu0 0.0
      %1662 = vmatprep.subr.mxu0 0.0
      %1663 = vmatpush2.msra.mxu0 0.0
      %1664 = vmatprep.subr.mxu0 0.0
      %1665 = vmatpush2.msra.mxu0 0.0
      %1666 = vmatprep.subr.mxu0 0.0
      %1667 = vmatpush2.msra.mxu0 0.0
      %1668 = vmatprep.subr.mxu0 0.0
      %1669 = vmatpush2.msra.mxu0 0.0
      %1670 = vmatprep.subr.mxu0 0.0
      %1671 = vmatpush2.msra.mxu0 0.0
      %1672 = vmatprep.subr.mxu0 0.0
      %1673 = vmatpush2.msra.mxu0 0.0
      %1674 = vmatprep.subr.mxu0 0.0
      %1675 = vmatpush2.msra.mxu0 0.0
      %1676 = vmatprep.mubr.f32.mxu0 0.0
      %1677 = vmatmul.mubr.f32.gmra.mxu0 %v1596
      %v1678 = vpop.f32.mrf.mxu0
      %v1679 = vadd.f32 0.0, %v1678
      %v1680 = vpop.f32.mrf.mxu0
      %1681 = vmatprep.mubr.f32.mxu0 0.0
      %1682 = vmatmul.mubr.f32.gmra.mxu0 %v1597
      %v1683 = vpop.f32.mrf.mxu0
      %v1684 = vadd.f32 0.0, %v1683
      %v1685 = vpop.f32.mrf.mxu0
      %1686 = vmatprep.mubr.f32.mxu0 0.0
      %1687 = vmatmul.mubr.f32.gmra.mxu0 %v1598
      %v1688 = vpop.f32.mrf.mxu0
      %v1689 = vadd.f32 0.0, %v1688
      %v1690 = vpop.f32.mrf.mxu0
      %1691 = vmatprep.mubr.f32.mxu0 0.0
      %1692 = vmatmul.mubr.f32.gmra.mxu0 %v1599
      %v1693 = vpop.f32.mrf.mxu0
      %v1694 = vadd.f32 0.0, %v1693
      %v1695 = vpop.f32.mrf.mxu0
      %1696 = vdwg.mxu0
      %v1697 = vsel %vm1194, %v1679, 0.0
      %1698 = vadd.xlane.f32.xlu0 %v1697
      %v1699 = vpop.xlane.xlu0 %1698
      %v1700 = vsel %vm1194, %v1684, 0.0
      %1701 = vadd.xlane.f32.xlu0 %v1700
      %v1702 = vpop.xlane.xlu0 %1701
      %v1703 = vsel %vm1194, %v1689, 0.0
      %1704 = vadd.xlane.f32.xlu0 %v1703
      %v1705 = vpop.xlane.xlu0 %1704
      %v1706 = vsel %vm1194, %v1694, 0.0
      %1707 = vadd.xlane.f32.xlu0 %v1706
      %v1708 = vpop.xlane.xlu0 %1707
      %v1709 = vadd.f32 %v1699, %v1702
      %v1710 = vadd.f32 %v1709, %v1705
      %v1711 = vadd.f32 %v1710, %v1708
      %v1712 = vrot.slane %v1711, 4
      %v1713 = vadd.f32 %v1711, %v1712
      %v1714 = vrot.slane %v1713, 2
      %v1715 = vadd.f32 %v1713, %v1714
      %v1716 = vrot.slane %v1715, 1
      %v1717 = vadd.f32 %v1715, %v1716
      %v1718 = vrcp.pop 1024.0
      %v1719 = vmul.f32 %v1717, %v1718
      %v1720 = vsub.f32 %v1679, %v1719
      %v1721 = vsub.f32 %v1684, %v1719
      %v1722 = vsub.f32 %v1689, %v1719
      %v1723 = vsub.f32 %v1694, %v1719
      %v1724 = vmul.f32 %v1720, %v1720
      %v1725 = vmul.f32 %v1721, %v1721
      %v1726 = vmul.f32 %v1722, %v1722
      %v1727 = vmul.f32 %v1723, %v1723
      %v1728 = vsel %vm1194, %v1724, 0.0
      %1729 = vadd.xlane.f32.xlu0 %v1728
      %v1730 = vpop.xlane.xlu0 %1729
      %v1731 = vsel %vm1194, %v1725, 0.0
      %1732 = vadd.xlane.f32.xlu0 %v1731
      %v1733 = vpop.xlane.xlu0 %1732
      %v1734 = vsel %vm1194, %v1726, 0.0
      %1735 = vadd.xlane.f32.xlu0 %v1734
      %v1736 = vpop.xlane.xlu0 %1735
      %v1737 = vsel %vm1194, %v1727, 0.0
      %1738 = vadd.xlane.f32.xlu0 %v1737
      %v1739 = vpop.xlane.xlu0 %1738
      %v1740 = vadd.f32 %v1730, %v1733
      %v1741 = vadd.f32 %v1740, %v1736
      %v1742 = vadd.f32 %v1741, %v1739
      %v1743 = vrot.slane %v1742, 4
      %v1744 = vadd.f32 %v1742, %v1743
      %v1745 = vrot.slane %v1744, 2
      %v1746 = vadd.f32 %v1744, %v1745
      %v1747 = vrot.slane %v1746, 1
      %v1748 = vadd.f32 %v1746, %v1747
      %v1749 = vmul.f32 %v1748, %v1718
      %v1750 = vadd.f32 %v1749, 1e-05
      %v1751 = vrsqrt.pop %v1750
      %v1752 = vmul.f32 %v1720, %v1751
      %v1753 = vmul.f32 %v1721, %v1751
      %v1754 = vmul.f32 %v1722, %v1751
      %v1755 = vmul.f32 %v1723, %v1751
      %v1756 = vmul.f32 %v1752, %v1171
      %v1757 = vmul.f32 %v1753, %v1172
      %v1758 = vmul.f32 %v1754, %v1173
      %v1759 = vmul.f32 %v1755, %v1174
      %v1760 = vadd.f32 %v1756, %v1175
      %v1761 = vadd.f32 %v1757, %v1176
      %v1762 = vadd.f32 %v1758, %v1177
      %v1763 = vadd.f32 %v1759, %v1178
      %v1765 = vsel %vm1194, %v1760, 0
      %v1768 = vsel %vm1194, %v1761, 0
      %v1771 = vsel %vm1194, %v1762, 0
      %v1774 = vsel %vm1194, %v1763, 0
      %1776 = vmatprep.subr.mxu0 0.0
      %1777 = vmatpush1.msra.mxu0 0.0
      %1778 = vmatprep.subr.mxu0 0.0
      %1779 = vmatpush1.msra.mxu0 0.0
      %1780 = vmatprep.subr.mxu0 0.0
      %1781 = vmatpush1.msra.mxu0 0.0
      %1782 = vmatprep.subr.mxu0 0.0
      %1783 = vmatpush1.msra.mxu0 0.0
      %1784 = vmatprep.subr.mxu0 0.0
      %1785 = vmatpush1.msra.mxu0 0.0
      %1786 = vmatprep.subr.mxu0 0.0
      %1787 = vmatpush1.msra.mxu0 0.0
      %1788 = vmatprep.subr.mxu0 0.0
      %1789 = vmatpush1.msra.mxu0 0.0
      %1790 = vmatprep.subr.mxu0 0.0
      %1791 = vmatpush1.msra.mxu0 0.0
      %1792 = vmatprep.subr.mxu0 0.0
      %1793 = vmatpush1.msra.mxu0 0.0
      %1794 = vmatprep.subr.mxu0 0.0
      %1795 = vmatpush1.msra.mxu0 0.0
      %1796 = vmatprep.subr.mxu0 0.0
      %1797 = vmatpush1.msra.mxu0 0.0
      %1798 = vmatprep.subr.mxu0 0.0
      %1799 = vmatpush1.msra.mxu0 0.0
      %1800 = vmatprep.subr.mxu0 0.0
      %1801 = vmatpush1.msra.mxu0 %v1182
      %1802 = vmatprep.subr.mxu0 0.0
      %1803 = vmatpush1.msra.mxu0 %v1181
      %1804 = vmatprep.subr.mxu0 0.0
      %1805 = vmatpush1.msra.mxu0 %v1180
      %1806 = vmatprep.subr.mxu0 0.0
      %1807 = vmatpush1.msra.mxu0 %v1179
      %1808 = vmatprep.subr.mxu0 0.0
      %1809 = vmatpush2.msra.mxu0 0.0
      %1810 = vmatprep.subr.mxu0 0.0
      %1811 = vmatpush2.msra.mxu0 0.0
      %1812 = vmatprep.subr.mxu0 0.0
      %1813 = vmatpush2.msra.mxu0 0.0
      %1814 = vmatprep.subr.mxu0 0.0
      %1815 = vmatpush2.msra.mxu0 0.0
      %1816 = vmatprep.subr.mxu0 0.0
      %1817 = vmatpush2.msra.mxu0 0.0
      %1818 = vmatprep.subr.mxu0 0.0
      %1819 = vmatpush2.msra.mxu0 0.0
      %1820 = vmatprep.subr.mxu0 0.0
      %1821 = vmatpush2.msra.mxu0 0.0
      %1822 = vmatprep.subr.mxu0 0.0
      %1823 = vmatpush2.msra.mxu0 0.0
      %1824 = vmatprep.subr.mxu0 0.0
      %1825 = vmatpush2.msra.mxu0 0.0
      %1826 = vmatprep.subr.mxu0 0.0
      %1827 = vmatpush2.msra.mxu0 0.0
      %1828 = vmatprep.subr.mxu0 0.0
      %1829 = vmatpush2.msra.mxu0 0.0
      %1830 = vmatprep.subr.mxu0 0.0
      %1831 = vmatpush2.msra.mxu0 0.0
      %1832 = vmatprep.subr.mxu0 0.0
      %1833 = vmatpush2.msra.mxu0 0.0
      %1834 = vmatprep.subr.mxu0 0.0
      %1835 = vmatpush2.msra.mxu0 0.0
      %1836 = vmatprep.subr.mxu0 0.0
      %1837 = vmatpush2.msra.mxu0 0.0
      %1838 = vmatprep.subr.mxu0 0.0
      %1839 = vmatpush2.msra.mxu0 0.0
      %1840 = vmatprep.mubr.f32.mxu0 0.0
      %1841 = vmatmul.mubr.f32.gmra.mxu0 %v1765
      %v1842 = vpop.f32.mrf.mxu0
      %v1843 = vadd.f32 0.0, %v1842
      %v1844 = vpop.f32.mrf.mxu0
      %1845 = vmatprep.mubr.f32.mxu0 0.0
      %1846 = vmatmul.mubr.f32.gmra.mxu0 %v1768
      %v1847 = vpop.f32.mrf.mxu0
      %v1848 = vadd.f32 0.0, %v1847
      %v1849 = vpop.f32.mrf.mxu0
      %1850 = vmatprep.mubr.f32.mxu0 0.0
      %1851 = vmatmul.mubr.f32.gmra.mxu0 %v1771
      %v1852 = vpop.f32.mrf.mxu0
      %v1853 = vadd.f32 0.0, %v1852
      %v1854 = vpop.f32.mrf.mxu0
      %1855 = vmatprep.mubr.f32.mxu0 0.0
      %1856 = vmatmul.mubr.f32.gmra.mxu0 %v1774
      %v1857 = vpop.f32.mrf.mxu0
      %v1858 = vadd.f32 0.0, %v1857
      %v1859 = vpop.f32.mrf.mxu0
      %1860 = vdwg.mxu0
      %v1862 = vsel %vm1194, %v1564, 0
      %v1865 = vsel %vm1194, %v1565, 0
      %v1868 = vsel %vm1194, %v1566, 0
      %v1871 = vsel %vm1194, %v1567, 0
      %v1874 = vsel %vm1194, %v1568, 0
      %v1877 = vsel %vm1194, %v1569, 0
      %v1880 = vsel %vm1194, %v1570, 0
      %v1883 = vsel %vm1194, %v1571, 0
      %v1886 = vsel %vm1194, %v1572, 0
      %v1889 = vsel %vm1194, %v1573, 0
      %v1892 = vsel %vm1194, %v1574, 0
      %v1895 = vsel %vm1194, %v1575, 0
      %v1898 = vsel %vm1194, %v1576, 0
      %v1901 = vsel %vm1194, %v1577, 0
      %v1904 = vsel %vm1194, %v1578, 0
      %v1907 = vsel %vm1194, %v1579, 0
      %1909 = vmatprep.subr.mxu0 0.0
      %1910 = vmatpush1.msra.mxu0 0.0
      %1911 = vmatprep.subr.mxu0 0.0
      %1912 = vmatpush1.msra.mxu0 0.0
      %1913 = vmatprep.subr.mxu0 0.0
      %1914 = vmatpush1.msra.mxu0 0.0
      %1915 = vmatprep.subr.mxu0 0.0
      %1916 = vmatpush1.msra.mxu0 0.0
      %1917 = vmatprep.subr.mxu0 0.0
      %1918 = vmatpush1.msra.mxu0 0.0
      %1919 = vmatprep.subr.mxu0 0.0
      %1920 = vmatpush1.msra.mxu0 0.0
      %1921 = vmatprep.subr.mxu0 0.0
      %1922 = vmatpush1.msra.mxu0 0.0
      %1923 = vmatprep.subr.mxu0 0.0
      %1924 = vmatpush1.msra.mxu0 0.0
      %1925 = vmatprep.subr.mxu0 0.0
      %1926 = vmatpush1.msra.mxu0 0.0
      %1927 = vmatprep.subr.mxu0 0.0
      %1928 = vmatpush1.msra.mxu0 0.0
      %1929 = vmatprep.subr.mxu0 0.0
      %1930 = vmatpush1.msra.mxu0 0.0
      %1931 = vmatprep.subr.mxu0 0.0
      %1932 = vmatpush1.msra.mxu0 0.0
      %1933 = vmatprep.subr.mxu0 0.0
      %1934 = vmatpush1.msra.mxu0 %v1858
      %1935 = vmatprep.subr.mxu0 0.0
      %1936 = vmatpush1.msra.mxu0 %v1853
      %1937 = vmatprep.subr.mxu0 0.0
      %1938 = vmatpush1.msra.mxu0 %v1848
      %1939 = vmatprep.subr.mxu0 0.0
      %1940 = vmatpush1.msra.mxu0 %v1843
      %1941 = vmatprep.subr.mxu0 0.0
      %1942 = vmatpush2.msra.mxu0 0.0
      %1943 = vmatprep.subr.mxu0 0.0
      %1944 = vmatpush2.msra.mxu0 0.0
      %1945 = vmatprep.subr.mxu0 0.0
      %1946 = vmatpush2.msra.mxu0 0.0
      %1947 = vmatprep.subr.mxu0 0.0
      %1948 = vmatpush2.msra.mxu0 0.0
      %1949 = vmatprep.subr.mxu0 0.0
      %1950 = vmatpush2.msra.mxu0 0.0
      %1951 = vmatprep.subr.mxu0 0.0
      %1952 = vmatpush2.msra.mxu0 0.0
      %1953 = vmatprep.subr.mxu0 0.0
      %1954 = vmatpush2.msra.mxu0 0.0
      %1955 = vmatprep.subr.mxu0 0.0
      %1956 = vmatpush2.msra.mxu0 0.0
      %1957 = vmatprep.subr.mxu0 0.0
      %1958 = vmatpush2.msra.mxu0 0.0
      %1959 = vmatprep.subr.mxu0 0.0
      %1960 = vmatpush2.msra.mxu0 0.0
      %1961 = vmatprep.subr.mxu0 0.0
      %1962 = vmatpush2.msra.mxu0 0.0
      %1963 = vmatprep.subr.mxu0 0.0
      %1964 = vmatpush2.msra.mxu0 0.0
      %1965 = vmatprep.subr.mxu0 0.0
      %1966 = vmatpush2.msra.mxu0 0.0
      %1967 = vmatprep.subr.mxu0 0.0
      %1968 = vmatpush2.msra.mxu0 0.0
      %1969 = vmatprep.subr.mxu0 0.0
      %1970 = vmatpush2.msra.mxu0 0.0
      %1971 = vmatprep.subr.mxu0 0.0
      %1972 = vmatpush2.msra.mxu0 0.0
      %1973 = vmatprep.mubr.f32.mxu0 0.0
      %1974 = vmatmul.mubr.f32.gmra.mxu0 %v1862
      %v1975 = vpop.f32.mrf.mxu0
      %v1976 = vadd.f32 0.0, %v1975
      %v1977 = vpop.f32.mrf.mxu0
      %1978 = vmatprep.mubr.f32.mxu0 0.0
      %1979 = vmatmul.mubr.f32.gmra.mxu0 %v1865
      %v1980 = vpop.f32.mrf.mxu0
      %v1981 = vadd.f32 0.0, %v1980
      %v1982 = vpop.f32.mrf.mxu0
      %1983 = vmatprep.mubr.f32.mxu0 0.0
      %1984 = vmatmul.mubr.f32.gmra.mxu0 %v1868
      %v1985 = vpop.f32.mrf.mxu0
      %v1986 = vadd.f32 0.0, %v1985
      %v1987 = vpop.f32.mrf.mxu0
      %1988 = vmatprep.mubr.f32.mxu0 0.0
      %1989 = vmatmul.mubr.f32.gmra.mxu0 %v1871
      %v1990 = vpop.f32.mrf.mxu0
      %v1991 = vadd.f32 0.0, %v1990
      %v1992 = vpop.f32.mrf.mxu0
      %1993 = vmatprep.mubr.f32.mxu0 0.0
      %1994 = vmatmul.mubr.f32.gmra.mxu0 %v1874
      %v1995 = vpop.f32.mrf.mxu0
      %v1996 = vadd.f32 0.0, %v1995
      %v1997 = vpop.f32.mrf.mxu0
      %1998 = vmatprep.mubr.f32.mxu0 0.0
      %1999 = vmatmul.mubr.f32.gmra.mxu0 %v1877
      %v2000 = vpop.f32.mrf.mxu0
      %v2001 = vadd.f32 0.0, %v2000
      %v2002 = vpop.f32.mrf.mxu0
      %2003 = vmatprep.mubr.f32.mxu0 0.0
      %2004 = vmatmul.mubr.f32.gmra.mxu0 %v1880
      %v2005 = vpop.f32.mrf.mxu0
      %v2006 = vadd.f32 0.0, %v2005
      %v2007 = vpop.f32.mrf.mxu0
      %2008 = vmatprep.mubr.f32.mxu0 0.0
      %2009 = vmatmul.mubr.f32.gmra.mxu0 %v1883
      %v2010 = vpop.f32.mrf.mxu0
      %v2011 = vadd.f32 0.0, %v2010
      %v2012 = vpop.f32.mrf.mxu0
      %2013 = vmatprep.mubr.f32.mxu0 0.0
      %2014 = vmatmul.mubr.f32.gmra.mxu0 %v1886
      %v2015 = vpop.f32.mrf.mxu0
      %v2016 = vadd.f32 0.0, %v2015
      %v2017 = vpop.f32.mrf.mxu0
      %2018 = vmatprep.mubr.f32.mxu0 0.0
      %2019 = vmatmul.mubr.f32.gmra.mxu0 %v1889
      %v2020 = vpop.f32.mrf.mxu0
      %v2021 = vadd.f32 0.0, %v2020
      %v2022 = vpop.f32.mrf.mxu0
      %2023 = vmatprep.mubr.f32.mxu0 0.0
      %2024 = vmatmul.mubr.f32.gmra.mxu0 %v1892
      %v2025 = vpop.f32.mrf.mxu0
      %v2026 = vadd.f32 0.0, %v2025
      %v2027 = vpop.f32.mrf.mxu0
      %2028 = vmatprep.mubr.f32.mxu0 0.0
      %2029 = vmatmul.mubr.f32.gmra.mxu0 %v1895
      %v2030 = vpop.f32.mrf.mxu0
      %v2031 = vadd.f32 0.0, %v2030
      %v2032 = vpop.f32.mrf.mxu0
      %2033 = vmatprep.mubr.f32.mxu0 0.0
      %2034 = vmatmul.mubr.f32.gmra.mxu0 %v1898
      %v2035 = vpop.f32.mrf.mxu0
      %v2036 = vadd.f32 0.0, %v2035
      %v2037 = vpop.f32.mrf.mxu0
      %2038 = vmatprep.mubr.f32.mxu0 0.0
      %2039 = vmatmul.mubr.f32.gmra.mxu0 %v1901
      %v2040 = vpop.f32.mrf.mxu0
      %v2041 = vadd.f32 0.0, %v2040
      %v2042 = vpop.f32.mrf.mxu0
      %2043 = vmatprep.mubr.f32.mxu0 0.0
      %2044 = vmatmul.mubr.f32.gmra.mxu0 %v1904
      %v2045 = vpop.f32.mrf.mxu0
      %v2046 = vadd.f32 0.0, %v2045
      %v2047 = vpop.f32.mrf.mxu0
      %2048 = vmatprep.mubr.f32.mxu0 0.0
      %2049 = vmatmul.mubr.f32.gmra.mxu0 %v1907
      %v2050 = vpop.f32.mrf.mxu0
      %v2051 = vadd.f32 0.0, %v2050
      %v2052 = vpop.f32.mrf.mxu0
      %2053 = vdwg.mxu0
      %s2054 = scalar_lea.vmem %s3, 32
      %v2055 = vld [vmem:[%s2054] sm:$0xff]
      %v2056 = vld [vmem:[%s2054 + $0x8] sm:$0xff]
      %v2057 = vld [vmem:[%s2054 + $0x10] sm:$0xff]
      %v2058 = vld [vmem:[%s2054 + $0x18] sm:$0xff]
      %s2059 = scalar_lea.vmem %s4, 1
      %v2060 = vld [vmem:[%s2059] sm:$0x1]
      %v2062 = vlaneseq
      %v2063 = vshrl.u32 %v2062, 7
      %v2064 = vsub.s32 0, %v2063
      %v2065 = vrot.slane %v2060, %v2064
      %2067 = vrot.lane.b32.xlu0 %v1063, 96
      %v2068 = vpop.permute.xlu0 %2067
      %2069 = vrot.lane.b32.xlu0 %v1069, 96
      %v2070 = vpop.permute.xlu0 %2069
      %2071 = vrot.lane.b32.xlu0 %v1075, 96
      %v2072 = vpop.permute.xlu0 %2071
      %2073 = vrot.lane.b32.xlu0 %v1081, 96
      %v2074 = vpop.permute.xlu0 %2073
      %2075 = vrot.lane.b32.xlu0 %v1087, 96
      %v2076 = vpop.permute.xlu0 %2075
      %2077 = vrot.lane.b32.xlu0 %v1093, 96
      %v2078 = vpop.permute.xlu0 %2077
      %2079 = vrot.lane.b32.xlu0 %v1099, 96
      %v2080 = vpop.permute.xlu0 %2079
      %2081 = vrot.lane.b32.xlu0 %v1105, 96
      %v2082 = vpop.permute.xlu0 %2081
      %2083 = vrot.lane.b32.xlu0 %v1111, 96
      %v2084 = vpop.permute.xlu0 %2083
      %2085 = vrot.lane.b32.xlu0 %v1117, 96
      %v2086 = vpop.permute.xlu0 %2085
      %2087 = vrot.lane.b32.xlu0 %v1123, 96
      %v2088 = vpop.permute.xlu0 %2087
      %2089 = vrot.lane.b32.xlu0 %v1129, 96
      %v2090 = vpop.permute.xlu0 %2089
      %2091 = vrot.lane.b32.xlu0 %v1135, 96
      %v2092 = vpop.permute.xlu0 %2091
      %2093 = vrot.lane.b32.xlu0 %v1141, 96
      %v2094 = vpop.permute.xlu0 %2093
      %2095 = vrot.lane.b32.xlu0 %v1147, 96
      %v2096 = vpop.permute.xlu0 %2095
      %2097 = vrot.lane.b32.xlu0 %v1153, 96
      %v2098 = vpop.permute.xlu0 %2097
      %v2099 = vsel %vm1194, %v2068, 0
      %v2101 = vsel %vm1194, %v2070, 0
      %v2103 = vsel %vm1194, %v2072, 0
      %v2105 = vsel %vm1194, %v2074, 0
      %v2107 = vsel %vm1194, %v2076, 0
      %v2109 = vsel %vm1194, %v2078, 0
      %v2111 = vsel %vm1194, %v2080, 0
      %v2113 = vsel %vm1194, %v2082, 0
      %v2115 = vsel %vm1194, %v2084, 0
      %v2117 = vsel %vm1194, %v2086, 0
      %v2119 = vsel %vm1194, %v2088, 0
      %v2121 = vsel %vm1194, %v2090, 0
      %v2123 = vsel %vm1194, %v2092, 0
      %v2125 = vsel %vm1194, %v2094, 0
      %v2127 = vsel %vm1194, %v2096, 0
      %v2129 = vsel %vm1194, %v2098, 0
      %2131 = vmatprep.subr.mxu0 0.0
      %2132 = vmatpush1.msra.mxu0 0.0
      %2133 = vmatprep.subr.mxu0 0.0
      %2134 = vmatpush1.msra.mxu0 0.0
      %2135 = vmatprep.subr.mxu0 0.0
      %2136 = vmatpush1.msra.mxu0 0.0
      %2137 = vmatprep.subr.mxu0 0.0
      %2138 = vmatpush1.msra.mxu0 0.0
      %2139 = vmatprep.subr.mxu0 0.0
      %2140 = vmatpush1.msra.mxu0 0.0
      %2141 = vmatprep.subr.mxu0 0.0
      %2142 = vmatpush1.msra.mxu0 0.0
      %2143 = vmatprep.subr.mxu0 0.0
      %2144 = vmatpush1.msra.mxu0 0.0
      %2145 = vmatprep.subr.mxu0 0.0
      %2146 = vmatpush1.msra.mxu0 0.0
      %2147 = vmatprep.subr.mxu0 0.0
      %2148 = vmatpush1.msra.mxu0 0.0
      %2149 = vmatprep.subr.mxu0 0.0
      %2150 = vmatpush1.msra.mxu0 0.0
      %2151 = vmatprep.subr.mxu0 0.0
      %2152 = vmatpush1.msra.mxu0 0.0
      %2153 = vmatprep.subr.mxu0 0.0
      %2154 = vmatpush1.msra.mxu0 0.0
      %2155 = vmatprep.subr.mxu0 0.0
      %2156 = vmatpush1.msra.mxu0 %v2058
      %2157 = vmatprep.subr.mxu0 0.0
      %2158 = vmatpush1.msra.mxu0 %v2057
      %2159 = vmatprep.subr.mxu0 0.0
      %2160 = vmatpush1.msra.mxu0 %v2056
      %2161 = vmatprep.subr.mxu0 0.0
      %2162 = vmatpush1.msra.mxu0 %v2055
      %2163 = vmatprep.subr.mxu0 0.0
      %2164 = vmatpush2.msra.mxu0 0.0
      %2165 = vmatprep.subr.mxu0 0.0
      %2166 = vmatpush2.msra.mxu0 0.0
      %2167 = vmatprep.subr.mxu0 0.0
      %2168 = vmatpush2.msra.mxu0 0.0
      %2169 = vmatprep.subr.mxu0 0.0
      %2170 = vmatpush2.msra.mxu0 0.0
      %2171 = vmatprep.subr.mxu0 0.0
      %2172 = vmatpush2.msra.mxu0 0.0
      %2173 = vmatprep.subr.mxu0 0.0
      %2174 = vmatpush2.msra.mxu0 0.0
      %2175 = vmatprep.subr.mxu0 0.0
      %2176 = vmatpush2.msra.mxu0 0.0
      %2177 = vmatprep.subr.mxu0 0.0
      %2178 = vmatpush2.msra.mxu0 0.0
      %2179 = vmatprep.subr.mxu0 0.0
      %2180 = vmatpush2.msra.mxu0 0.0
      %2181 = vmatprep.subr.mxu0 0.0
      %2182 = vmatpush2.msra.mxu0 0.0
      %2183 = vmatprep.subr.mxu0 0.0
      %2184 = vmatpush2.msra.mxu0 0.0
      %2185 = vmatprep.subr.mxu0 0.0
      %2186 = vmatpush2.msra.mxu0 0.0
      %2187 = vmatprep.subr.mxu0 0.0
      %2188 = vmatpush2.msra.mxu0 0.0
      %2189 = vmatprep.subr.mxu0 0.0
      %2190 = vmatpush2.msra.mxu0 0.0
      %2191 = vmatprep.subr.mxu0 0.0
      %2192 = vmatpush2.msra.mxu0 0.0
      %2193 = vmatprep.subr.mxu0 0.0
      %2194 = vmatpush2.msra.mxu0 0.0
      %2195 = vmatprep.mubr.f32.mxu0 0.0
      %2196 = vmatmul.mubr.f32.gmra.mxu0 %v2099
      %v2197 = vpop.f32.mrf.mxu0
      %v2198 = vadd.f32 %v2065, %v2197
      %v2199 = vpop.f32.mrf.mxu0
      %2200 = vmatprep.mubr.f32.mxu0 0.0
      %2201 = vmatmul.mubr.f32.gmra.mxu0 %v2101
      %v2202 = vpop.f32.mrf.mxu0
      %v2203 = vadd.f32 %v2065, %v2202
      %v2204 = vpop.f32.mrf.mxu0
      %2205 = vmatprep.mubr.f32.mxu0 0.0
      %2206 = vmatmul.mubr.f32.gmra.mxu0 %v2103
      %v2207 = vpop.f32.mrf.mxu0
      %v2208 = vadd.f32 %v2065, %v2207
      %v2209 = vpop.f32.mrf.mxu0
      %2210 = vmatprep.mubr.f32.mxu0 0.0
      %2211 = vmatmul.mubr.f32.gmra.mxu0 %v2105
      %v2212 = vpop.f32.mrf.mxu0
      %v2213 = vadd.f32 %v2065, %v2212
      %v2214 = vpop.f32.mrf.mxu0
      %2215 = vmatprep.mubr.f32.mxu0 0.0
      %2216 = vmatmul.mubr.f32.gmra.mxu0 %v2107
      %v2217 = vpop.f32.mrf.mxu0
      %v2218 = vadd.f32 %v2065, %v2217
      %v2219 = vpop.f32.mrf.mxu0
      %2220 = vmatprep.mubr.f32.mxu0 0.0
      %2221 = vmatmul.mubr.f32.gmra.mxu0 %v2109
      %v2222 = vpop.f32.mrf.mxu0
      %v2223 = vadd.f32 %v2065, %v2222
      %v2224 = vpop.f32.mrf.mxu0
      %2225 = vmatprep.mubr.f32.mxu0 0.0
      %2226 = vmatmul.mubr.f32.gmra.mxu0 %v2111
      %v2227 = vpop.f32.mrf.mxu0
      %v2228 = vadd.f32 %v2065, %v2227
      %v2229 = vpop.f32.mrf.mxu0
      %2230 = vmatprep.mubr.f32.mxu0 0.0
      %2231 = vmatmul.mubr.f32.gmra.mxu0 %v2113
      %v2232 = vpop.f32.mrf.mxu0
      %v2233 = vadd.f32 %v2065, %v2232
      %v2234 = vpop.f32.mrf.mxu0
      %2235 = vmatprep.mubr.f32.mxu0 0.0
      %2236 = vmatmul.mubr.f32.gmra.mxu0 %v2115
      %v2237 = vpop.f32.mrf.mxu0
      %v2238 = vadd.f32 %v2065, %v2237
      %v2239 = vpop.f32.mrf.mxu0
      %2240 = vmatprep.mubr.f32.mxu0 0.0
      %2241 = vmatmul.mubr.f32.gmra.mxu0 %v2117
      %v2242 = vpop.f32.mrf.mxu0
      %v2243 = vadd.f32 %v2065, %v2242
      %v2244 = vpop.f32.mrf.mxu0
      %2245 = vmatprep.mubr.f32.mxu0 0.0
      %2246 = vmatmul.mubr.f32.gmra.mxu0 %v2119
      %v2247 = vpop.f32.mrf.mxu0
      %v2248 = vadd.f32 %v2065, %v2247
      %v2249 = vpop.f32.mrf.mxu0
      %2250 = vmatprep.mubr.f32.mxu0 0.0
      %2251 = vmatmul.mubr.f32.gmra.mxu0 %v2121
      %v2252 = vpop.f32.mrf.mxu0
      %v2253 = vadd.f32 %v2065, %v2252
      %v2254 = vpop.f32.mrf.mxu0
      %2255 = vmatprep.mubr.f32.mxu0 0.0
      %2256 = vmatmul.mubr.f32.gmra.mxu0 %v2123
      %v2257 = vpop.f32.mrf.mxu0
      %v2258 = vadd.f32 %v2065, %v2257
      %v2259 = vpop.f32.mrf.mxu0
      %2260 = vmatprep.mubr.f32.mxu0 0.0
      %2261 = vmatmul.mubr.f32.gmra.mxu0 %v2125
      %v2262 = vpop.f32.mrf.mxu0
      %v2263 = vadd.f32 %v2065, %v2262
      %v2264 = vpop.f32.mrf.mxu0
      %2265 = vmatprep.mubr.f32.mxu0 0.0
      %2266 = vmatmul.mubr.f32.gmra.mxu0 %v2127
      %v2267 = vpop.f32.mrf.mxu0
      %v2268 = vadd.f32 %v2065, %v2267
      %v2269 = vpop.f32.mrf.mxu0
      %2270 = vmatprep.mubr.f32.mxu0 0.0
      %2271 = vmatmul.mubr.f32.gmra.mxu0 %v2129
      %v2272 = vpop.f32.mrf.mxu0
      %v2273 = vadd.f32 %v2065, %v2272
      %v2274 = vpop.f32.mrf.mxu0
      %2275 = vdwg.mxu0
      %v2276 = vsel %vm1194, %v2198, -inf
      %2277 = vmax.xlane.f32.xlu0 %v2276
      %v2278 = vpop.xlane.xlu0 %2277
      %v2279 = vsel %vm1194, %v2203, -inf
      %2280 = vmax.xlane.f32.xlu0 %v2279
      %v2281 = vpop.xlane.xlu0 %2280
      %v2282 = vsel %vm1194, %v2208, -inf
      %2283 = vmax.xlane.f32.xlu0 %v2282
      %v2284 = vpop.xlane.xlu0 %2283
      %v2285 = vsel %vm1194, %v2213, -inf
      %2286 = vmax.xlane.f32.xlu0 %v2285
      %v2287 = vpop.xlane.xlu0 %2286
      %v2288 = vsel %vm1194, %v2218, -inf
      %2289 = vmax.xlane.f32.xlu0 %v2288
      %v2290 = vpop.xlane.xlu0 %2289
      %v2291 = vsel %vm1194, %v2223, -inf
      %2292 = vmax.xlane.f32.xlu0 %v2291
      %v2293 = vpop.xlane.xlu0 %2292
      %v2294 = vsel %vm1194, %v2228, -inf
      %2295 = vmax.xlane.f32.xlu0 %v2294
      %v2296 = vpop.xlane.xlu0 %2295
      %v2297 = vsel %vm1194, %v2233, -inf
      %2298 = vmax.xlane.f32.xlu0 %v2297
      %v2299 = vpop.xlane.xlu0 %2298
      %v2300 = vsel %vm1194, %v2238, -inf
      %2301 = vmax.xlane.f32.xlu0 %v2300
      %v2302 = vpop.xlane.xlu0 %2301
      %v2303 = vsel %vm1194, %v2243, -inf
      %2304 = vmax.xlane.f32.xlu0 %v2303
      %v2305 = vpop.xlane.xlu0 %2304
      %v2306 = vsel %vm1194, %v2248, -inf
      %2307 = vmax.xlane.f32.xlu0 %v2306
      %v2308 = vpop.xlane.xlu0 %2307
      %v2309 = vsel %vm1194, %v2253, -inf
      %2310 = vmax.xlane.f32.xlu0 %v2309
      %v2311 = vpop.xlane.xlu0 %2310
      %v2312 = vsel %vm1194, %v2258, -inf
      %2313 = vmax.xlane.f32.xlu0 %v2312
      %v2314 = vpop.xlane.xlu0 %2313
      %v2315 = vsel %vm1194, %v2263, -inf
      %2316 = vmax.xlane.f32.xlu0 %v2315
      %v2317 = vpop.xlane.xlu0 %2316
      %v2318 = vsel %vm1194, %v2268, -inf
      %2319 = vmax.xlane.f32.xlu0 %v2318
      %v2320 = vpop.xlane.xlu0 %2319
      %v2321 = vsel %vm1194, %v2273, -inf
      %2322 = vmax.xlane.f32.xlu0 %v2321
      %v2323 = vpop.xlane.xlu0 %2322
      %v2324 = vsub.f32 %v2198, %v2278
      %v2325 = vsub.f32 %v2203, %v2281
      %v2326 = vsub.f32 %v2208, %v2284
      %v2327 = vsub.f32 %v2213, %v2287
      %v2328 = vsub.f32 %v2218, %v2290
      %v2329 = vsub.f32 %v2223, %v2293
      %v2330 = vsub.f32 %v2228, %v2296
      %v2331 = vsub.f32 %v2233, %v2299
      %v2332 = vsub.f32 %v2238, %v2302
      %v2333 = vsub.f32 %v2243, %v2305
      %v2334 = vsub.f32 %v2248, %v2308
      %v2335 = vsub.f32 %v2253, %v2311
      %v2336 = vsub.f32 %v2258, %v2314
      %v2337 = vsub.f32 %v2263, %v2317
      %v2338 = vsub.f32 %v2268, %v2320
      %v2339 = vsub.f32 %v2273, %v2323
      %v2340 = vmul.f32 %v2324, 1.442695
      %v2341 = vpow.pop %v2340
      %v2342 = vmul.f32 %v2325, 1.442695
      %v2343 = vpow.pop %v2342
      %v2344 = vmul.f32 %v2326, 1.442695
      %v2345 = vpow.pop %v2344
      %v2346 = vmul.f32 %v2327, 1.442695
      %v2347 = vpow.pop %v2346
      %v2348 = vmul.f32 %v2328, 1.442695
      %v2349 = vpow.pop %v2348
      %v2350 = vmul.f32 %v2329, 1.442695
      %v2351 = vpow.pop %v2350
      %v2352 = vmul.f32 %v2330, 1.442695
      %v2353 = vpow.pop %v2352
      %v2354 = vmul.f32 %v2331, 1.442695
      %v2355 = vpow.pop %v2354
      %v2356 = vmul.f32 %v2332, 1.442695
      %v2357 = vpow.pop %v2356
      %v2358 = vmul.f32 %v2333, 1.442695
      %v2359 = vpow.pop %v2358
      %v2360 = vmul.f32 %v2334, 1.442695
      %v2361 = vpow.pop %v2360
      %v2362 = vmul.f32 %v2335, 1.442695
      %v2363 = vpow.pop %v2362
      %v2364 = vmul.f32 %v2336, 1.442695
      %v2365 = vpow.pop %v2364
      %v2366 = vmul.f32 %v2337, 1.442695
      %v2367 = vpow.pop %v2366
      %v2368 = vmul.f32 %v2338, 1.442695
      %v2369 = vpow.pop %v2368
      %v2370 = vmul.f32 %v2339, 1.442695
      %v2371 = vpow.pop %v2370
      %v2372 = vsel %vm1194, %v2341, 0.0
      %2373 = vadd.xlane.f32.xlu0 %v2372
      %v2374 = vpop.xlane.xlu0 %2373
      %v2375 = vsel %vm1194, %v2343, 0.0
      %2376 = vadd.xlane.f32.xlu0 %v2375
      %v2377 = vpop.xlane.xlu0 %2376
      %v2378 = vsel %vm1194, %v2345, 0.0
      %2379 = vadd.xlane.f32.xlu0 %v2378
      %v2380 = vpop.xlane.xlu0 %2379
      %v2381 = vsel %vm1194, %v2347, 0.0
      %2382 = vadd.xlane.f32.xlu0 %v2381
      %v2383 = vpop.xlane.xlu0 %2382
      %v2384 = vsel %vm1194, %v2349, 0.0
      %2385 = vadd.xlane.f32.xlu0 %v2384
      %v2386 = vpop.xlane.xlu0 %2385
      %v2387 = vsel %vm1194, %v2351, 0.0
      %2388 = vadd.xlane.f32.xlu0 %v2387
      %v2389 = vpop.xlane.xlu0 %2388
      %v2390 = vsel %vm1194, %v2353, 0.0
      %2391 = vadd.xlane.f32.xlu0 %v2390
      %v2392 = vpop.xlane.xlu0 %2391
      %v2393 = vsel %vm1194, %v2355, 0.0
      %2394 = vadd.xlane.f32.xlu0 %v2393
      %v2395 = vpop.xlane.xlu0 %2394
      %v2396 = vsel %vm1194, %v2357, 0.0
      %2397 = vadd.xlane.f32.xlu0 %v2396
      %v2398 = vpop.xlane.xlu0 %2397
      %v2399 = vsel %vm1194, %v2359, 0.0
      %2400 = vadd.xlane.f32.xlu0 %v2399
      %v2401 = vpop.xlane.xlu0 %2400
      %v2402 = vsel %vm1194, %v2361, 0.0
      %2403 = vadd.xlane.f32.xlu0 %v2402
      %v2404 = vpop.xlane.xlu0 %2403
      %v2405 = vsel %vm1194, %v2363, 0.0
      %2406 = vadd.xlane.f32.xlu0 %v2405
      %v2407 = vpop.xlane.xlu0 %2406
      %v2408 = vsel %vm1194, %v2365, 0.0
      %2409 = vadd.xlane.f32.xlu0 %v2408
      %v2410 = vpop.xlane.xlu0 %2409
      %v2411 = vsel %vm1194, %v2367, 0.0
      %2412 = vadd.xlane.f32.xlu0 %v2411
      %v2413 = vpop.xlane.xlu0 %2412
      %v2414 = vsel %vm1194, %v2369, 0.0
      %2415 = vadd.xlane.f32.xlu0 %v2414
      %v2416 = vpop.xlane.xlu0 %2415
      %v2417 = vsel %vm1194, %v2371, 0.0
      %2418 = vadd.xlane.f32.xlu0 %v2417
      %v2419 = vpop.xlane.xlu0 %2418
      %v2420 = vrcp.pop %v2374
      %v2421 = vrcp.pop %v2377
      %v2422 = vrcp.pop %v2380
      %v2423 = vrcp.pop %v2383
      %v2424 = vrcp.pop %v2386
      %v2425 = vrcp.pop %v2389
      %v2426 = vrcp.pop %v2392
      %v2427 = vrcp.pop %v2395
      %v2428 = vrcp.pop %v2398
      %v2429 = vrcp.pop %v2401
      %v2430 = vrcp.pop %v2404
      %v2431 = vrcp.pop %v2407
      %v2432 = vrcp.pop %v2410
      %v2433 = vrcp.pop %v2413
      %v2434 = vrcp.pop %v2416
      %v2435 = vrcp.pop %v2419
      %v2436 = vmul.f32 %v2341, %v2420
      %v2437 = vmul.f32 %v2343, %v2421
      %v2438 = vmul.f32 %v2345, %v2422
      %v2439 = vmul.f32 %v2347, %v2423
      %v2440 = vmul.f32 %v2349, %v2424
      %v2441 = vmul.f32 %v2351, %v2425
      %v2442 = vmul.f32 %v2353, %v2426
      %v2443 = vmul.f32 %v2355, %v2427
      %v2444 = vmul.f32 %v2357, %v2428
      %v2445 = vmul.f32 %v2359, %v2429
      %v2446 = vmul.f32 %v2361, %v2430
      %v2447 = vmul.f32 %v2363, %v2431
      %v2448 = vmul.f32 %v2365, %v2432
      %v2449 = vmul.f32 %v2367, %v2433
      %v2450 = vmul.f32 %v2369, %v2434
      %v2451 = vmul.f32 %v2371, %v2435
      %v2452 = vmul.f32 %v2436, %v1155
      %v2453 = vmul.f32 %v2437, %v1156
      %v2454 = vmul.f32 %v2438, %v1157
      %v2455 = vmul.f32 %v2439, %v1158
      %v2456 = vmul.f32 %v2440, %v1159
      %v2457 = vmul.f32 %v2441, %v1160
      %v2458 = vmul.f32 %v2442, %v1161
      %v2459 = vmul.f32 %v2443, %v1162
      %v2460 = vmul.f32 %v2444, %v1163
      %v2461 = vmul.f32 %v2445, %v1164
      %v2462 = vmul.f32 %v2446, %v1165
      %v2463 = vmul.f32 %v2447, %v1166
      %v2464 = vmul.f32 %v2448, %v1167
      %v2465 = vmul.f32 %v2449, %v1168
      %v2466 = vmul.f32 %v2450, %v1169
      %v2467 = vmul.f32 %v2451, %v1170
      %2468 = vxpose.xlu0.b32.start [1/16] %v2452, 128
      %2469 = vxpose.xlu0.b32.cont [2/16] %v2453, 128
      %2470 = vxpose.xlu0.b32.cont [3/16] %v2454, 128
      %2471 = vxpose.xlu0.b32.cont [4/16] %v2455, 128
      %2472 = vxpose.xlu0.b32.cont [5/16] %v2456, 128
      %2473 = vxpose.xlu0.b32.cont [6/16] %v2457, 128
      %2474 = vxpose.xlu0.b32.cont [7/16] %v2458, 128
      %2475 = vxpose.xlu0.b32.cont [8/16] %v2459, 128
      %2476 = vxpose.xlu0.b32.cont [9/16] %v2460, 128
      %2477 = vxpose.xlu0.b32.cont [10/16] %v2461, 128
      %2478 = vxpose.xlu0.b32.cont [11/16] %v2462, 128
      %2479 = vxpose.xlu0.b32.cont [12/16] %v2463, 128
      %2480 = vxpose.xlu0.b32.cont [13/16] %v2464, 128
      %2481 = vxpose.xlu0.b32.cont [14/16] %v2465, 128
      %2482 = vxpose.xlu0.b32.cont [15/16] %v2466, 128
      %2483 = vxpose.xlu0.b32.end [16/16] %v2467, 128
      %v2484 = vpop.trf.xlu0
      %v2485 = vpop.trf.xlu0
      %v2486 = vpop.trf.xlu0
      %v2487 = vpop.trf.xlu0
      %v2488 = vpop.trf.xlu0
      %v2489 = vpop.trf.xlu0
      %v2490 = vpop.trf.xlu0
      %v2491 = vpop.trf.xlu0
      %v2492 = vpop.trf.xlu0
      %v2493 = vpop.trf.xlu0
      %v2494 = vpop.trf.xlu0
      %v2495 = vpop.trf.xlu0
      %v2496 = vpop.trf.xlu0
      %v2497 = vpop.trf.xlu0
      %v2498 = vpop.trf.xlu0
      %v2499 = vpop.trf.xlu0
      %2516 = vrot.lane.b32.xlu0 %v1061, 96
      %v2517 = vpop.permute.xlu0 %2516
      %2518 = vrot.lane.b32.xlu0 %v1067, 96
      %v2519 = vpop.permute.xlu0 %2518
      %2520 = vrot.lane.b32.xlu0 %v1073, 96
      %v2521 = vpop.permute.xlu0 %2520
      %2522 = vrot.lane.b32.xlu0 %v1079, 96
      %v2523 = vpop.permute.xlu0 %2522
      %2524 = vrot.lane.b32.xlu0 %v1085, 96
      %v2525 = vpop.permute.xlu0 %2524
      %2526 = vrot.lane.b32.xlu0 %v1091, 96
      %v2527 = vpop.permute.xlu0 %2526
      %2528 = vrot.lane.b32.xlu0 %v1097, 96
      %v2529 = vpop.permute.xlu0 %2528
      %2530 = vrot.lane.b32.xlu0 %v1103, 96
      %v2531 = vpop.permute.xlu0 %2530
      %2532 = vrot.lane.b32.xlu0 %v1109, 96
      %v2533 = vpop.permute.xlu0 %2532
      %2534 = vrot.lane.b32.xlu0 %v1115, 96
      %v2535 = vpop.permute.xlu0 %2534
      %2536 = vrot.lane.b32.xlu0 %v1121, 96
      %v2537 = vpop.permute.xlu0 %2536
      %2538 = vrot.lane.b32.xlu0 %v1127, 96
      %v2539 = vpop.permute.xlu0 %2538
      %2540 = vrot.lane.b32.xlu0 %v1133, 96
      %v2541 = vpop.permute.xlu0 %2540
      %2542 = vrot.lane.b32.xlu0 %v1139, 96
      %v2543 = vpop.permute.xlu0 %2542
      %2544 = vrot.lane.b32.xlu0 %v1145, 96
      %v2545 = vpop.permute.xlu0 %2544
      %2546 = vrot.lane.b32.xlu0 %v1151, 96
      %v2547 = vpop.permute.xlu0 %2546
      %2564 = vmatprep.subr.mxu0 0.0
      %2565 = vmatpush1.msra.mxu0 %v2547
      %2566 = vmatprep.subr.mxu0 0.0
      %2567 = vmatpush1.msra.mxu0 %v2545
      %2568 = vmatprep.subr.mxu0 0.0
      %2569 = vmatpush1.msra.mxu0 %v2543
      %2570 = vmatprep.subr.mxu0 0.0
      %2571 = vmatpush1.msra.mxu0 %v2541
      %2572 = vmatprep.subr.mxu0 0.0
      %2573 = vmatpush1.msra.mxu0 %v2539
      %2574 = vmatprep.subr.mxu0 0.0
      %2575 = vmatpush1.msra.mxu0 %v2537
      %2576 = vmatprep.subr.mxu0 0.0
      %2577 = vmatpush1.msra.mxu0 %v2535
      %2578 = vmatprep.subr.mxu0 0.0
      %2579 = vmatpush1.msra.mxu0 %v2533
      %2580 = vmatprep.subr.mxu0 0.0
      %2581 = vmatpush1.msra.mxu0 %v2531
      %2582 = vmatprep.subr.mxu0 0.0
      %2583 = vmatpush1.msra.mxu0 %v2529
      %2584 = vmatprep.subr.mxu0 0.0
      %2585 = vmatpush1.msra.mxu0 %v2527
      %2586 = vmatprep.subr.mxu0 0.0
      %2587 = vmatpush1.msra.mxu0 %v2525
      %2588 = vmatprep.subr.mxu0 0.0
      %2589 = vmatpush1.msra.mxu0 %v2523
      %2590 = vmatprep.subr.mxu0 0.0
      %2591 = vmatpush1.msra.mxu0 %v2521
      %2592 = vmatprep.subr.mxu0 0.0
      %2593 = vmatpush1.msra.mxu0 %v2519
      %2594 = vmatprep.subr.mxu0 0.0
      %2595 = vmatpush1.msra.mxu0 %v2517
      %2596 = vmatprep.subr.mxu0 0.0
      %2597 = vmatpush2.msra.mxu0 0.0
      %2598 = vmatprep.subr.mxu0 0.0
      %2599 = vmatpush2.msra.mxu0 0.0
      %2600 = vmatprep.subr.mxu0 0.0
      %2601 = vmatpush2.msra.mxu0 0.0
      %2602 = vmatprep.subr.mxu0 0.0
      %2603 = vmatpush2.msra.mxu0 0.0
      %2604 = vmatprep.subr.mxu0 0.0
      %2605 = vmatpush2.msra.mxu0 0.0
      %2606 = vmatprep.subr.mxu0 0.0
      %2607 = vmatpush2.msra.mxu0 0.0
      %2608 = vmatprep.subr.mxu0 0.0
      %2609 = vmatpush2.msra.mxu0 0.0
      %2610 = vmatprep.subr.mxu0 0.0
      %2611 = vmatpush2.msra.mxu0 0.0
      %2612 = vmatprep.subr.mxu0 0.0
      %2613 = vmatpush2.msra.mxu0 0.0
      %2614 = vmatprep.subr.mxu0 0.0
      %2615 = vmatpush2.msra.mxu0 0.0
      %2616 = vmatprep.subr.mxu0 0.0
      %2617 = vmatpush2.msra.mxu0 0.0
      %2618 = vmatprep.subr.mxu0 0.0
      %2619 = vmatpush2.msra.mxu0 0.0
      %2620 = vmatprep.subr.mxu0 0.0
      %2621 = vmatpush2.msra.mxu0 0.0
      %2622 = vmatprep.subr.mxu0 0.0
      %2623 = vmatpush2.msra.mxu0 0.0
      %2624 = vmatprep.subr.mxu0 0.0
      %2625 = vmatpush2.msra.mxu0 0.0
      %2626 = vmatprep.subr.mxu0 0.0
      %2627 = vmatpush2.msra.mxu0 0.0
      %2628 = vmatprep.mubr.f32.mxu0 0.0
      %2629 = vmatmul.mubr.f32.gmra.mxu0 %v2484
      %v2630 = vpop.f32.mrf.mxu0
      %v2631 = vadd.f32 0.0, %v2630
      %v2632 = vpop.f32.mrf.mxu0
      %2633 = vmatprep.mubr.f32.mxu0 0.0
      %2634 = vmatmul.mubr.f32.gmra.mxu0 %v2485
      %v2635 = vpop.f32.mrf.mxu0
      %v2636 = vadd.f32 0.0, %v2635
      %v2637 = vpop.f32.mrf.mxu0
      %2638 = vmatprep.mubr.f32.mxu0 0.0
      %2639 = vmatmul.mubr.f32.gmra.mxu0 %v2486
      %v2640 = vpop.f32.mrf.mxu0
      %v2641 = vadd.f32 0.0, %v2640
      %v2642 = vpop.f32.mrf.mxu0
      %2643 = vmatprep.mubr.f32.mxu0 0.0
      %2644 = vmatmul.mubr.f32.gmra.mxu0 %v2487
      %v2645 = vpop.f32.mrf.mxu0
      %v2646 = vadd.f32 0.0, %v2645
      %v2647 = vpop.f32.mrf.mxu0
      %2648 = vdwg.mxu0
      %v2649 = vsel %vm1194, %v2631, 0.0
      %2650 = vadd.xlane.f32.xlu0 %v2649
      %v2651 = vpop.xlane.xlu0 %2650
      %v2652 = vsel %vm1194, %v2636, 0.0
      %2653 = vadd.xlane.f32.xlu0 %v2652
      %v2654 = vpop.xlane.xlu0 %2653
      %v2655 = vsel %vm1194, %v2641, 0.0
      %2656 = vadd.xlane.f32.xlu0 %v2655
      %v2657 = vpop.xlane.xlu0 %2656
      %v2658 = vsel %vm1194, %v2646, 0.0
      %2659 = vadd.xlane.f32.xlu0 %v2658
      %v2660 = vpop.xlane.xlu0 %2659
      %v2661 = vadd.f32 %v2651, %v2654
      %v2662 = vadd.f32 %v2661, %v2657
      %v2663 = vadd.f32 %v2662, %v2660
      %v2664 = vrot.slane %v2663, 4
      %v2665 = vadd.f32 %v2663, %v2664
      %v2666 = vrot.slane %v2665, 2
      %v2667 = vadd.f32 %v2665, %v2666
      %v2668 = vrot.slane %v2667, 1
      %v2669 = vadd.f32 %v2667, %v2668
      %v2670 = vmul.f32 %v2669, %v1718
      %v2671 = vsub.f32 %v2631, %v2670
      %v2672 = vsub.f32 %v2636, %v2670
      %v2673 = vsub.f32 %v2641, %v2670
      %v2674 = vsub.f32 %v2646, %v2670
      %v2675 = vmul.f32 %v2671, %v2671
      %v2676 = vmul.f32 %v2672, %v2672
      %v2677 = vmul.f32 %v2673, %v2673
      %v2678 = vmul.f32 %v2674, %v2674
      %v2679 = vsel %vm1194, %v2675, 0.0
      %2680 = vadd.xlane.f32.xlu0 %v2679
      %v2681 = vpop.xlane.xlu0 %2680
      %v2682 = vsel %vm1194, %v2676, 0.0
      %2683 = vadd.xlane.f32.xlu0 %v2682
      %v2684 = vpop.xlane.xlu0 %2683
      %v2685 = vsel %vm1194, %v2677, 0.0
      %2686 = vadd.xlane.f32.xlu0 %v2685
      %v2687 = vpop.xlane.xlu0 %2686
      %v2688 = vsel %vm1194, %v2678, 0.0
      %2689 = vadd.xlane.f32.xlu0 %v2688
      %v2690 = vpop.xlane.xlu0 %2689
      %v2691 = vadd.f32 %v2681, %v2684
      %v2692 = vadd.f32 %v2691, %v2687
      %v2693 = vadd.f32 %v2692, %v2690
      %v2694 = vrot.slane %v2693, 4
      %v2695 = vadd.f32 %v2693, %v2694
      %v2696 = vrot.slane %v2695, 2
      %v2697 = vadd.f32 %v2695, %v2696
      %v2698 = vrot.slane %v2697, 1
      %v2699 = vadd.f32 %v2697, %v2698
      %v2700 = vmul.f32 %v2699, %v1718
      %v2701 = vadd.f32 %v2700, 1e-05
      %v2702 = vrsqrt.pop %v2701
      %v2703 = vmul.f32 %v2671, %v2702
      %v2704 = vmul.f32 %v2672, %v2702
      %v2705 = vmul.f32 %v2673, %v2702
      %v2706 = vmul.f32 %v2674, %v2702
      %v2707 = vmul.f32 %v2703, %v1171
      %v2708 = vmul.f32 %v2704, %v1172
      %v2709 = vmul.f32 %v2705, %v1173
      %v2710 = vmul.f32 %v2706, %v1174
      %v2711 = vadd.f32 %v2707, %v1175
      %v2712 = vadd.f32 %v2708, %v1176
      %v2713 = vadd.f32 %v2709, %v1177
      %v2714 = vadd.f32 %v2710, %v1178
      %v2716 = vsel %vm1194, %v2711, 0
      %v2719 = vsel %vm1194, %v2712, 0
      %v2722 = vsel %vm1194, %v2713, 0
      %v2725 = vsel %vm1194, %v2714, 0
      %2727 = vmatprep.subr.mxu0 0.0
      %2728 = vmatpush1.msra.mxu0 0.0
      %2729 = vmatprep.subr.mxu0 0.0
      %2730 = vmatpush1.msra.mxu0 0.0
      %2731 = vmatprep.subr.mxu0 0.0
      %2732 = vmatpush1.msra.mxu0 0.0
      %2733 = vmatprep.subr.mxu0 0.0
      %2734 = vmatpush1.msra.mxu0 0.0
      %2735 = vmatprep.subr.mxu0 0.0
      %2736 = vmatpush1.msra.mxu0 0.0
      %2737 = vmatprep.subr.mxu0 0.0
      %2738 = vmatpush1.msra.mxu0 0.0
      %2739 = vmatprep.subr.mxu0 0.0
      %2740 = vmatpush1.msra.mxu0 0.0
      %2741 = vmatprep.subr.mxu0 0.0
      %2742 = vmatpush1.msra.mxu0 0.0
      %2743 = vmatprep.subr.mxu0 0.0
      %2744 = vmatpush1.msra.mxu0 0.0
      %2745 = vmatprep.subr.mxu0 0.0
      %2746 = vmatpush1.msra.mxu0 0.0
      %2747 = vmatprep.subr.mxu0 0.0
      %2748 = vmatpush1.msra.mxu0 0.0
      %2749 = vmatprep.subr.mxu0 0.0
      %2750 = vmatpush1.msra.mxu0 0.0
      %2751 = vmatprep.subr.mxu0 0.0
      %2752 = vmatpush1.msra.mxu0 %v1182
      %2753 = vmatprep.subr.mxu0 0.0
      %2754 = vmatpush1.msra.mxu0 %v1181
      %2755 = vmatprep.subr.mxu0 0.0
      %2756 = vmatpush1.msra.mxu0 %v1180
      %2757 = vmatprep.subr.mxu0 0.0
      %2758 = vmatpush1.msra.mxu0 %v1179
      %2759 = vmatprep.subr.mxu0 0.0
      %2760 = vmatpush2.msra.mxu0 0.0
      %2761 = vmatprep.subr.mxu0 0.0
      %2762 = vmatpush2.msra.mxu0 0.0
      %2763 = vmatprep.subr.mxu0 0.0
      %2764 = vmatpush2.msra.mxu0 0.0
      %2765 = vmatprep.subr.mxu0 0.0
      %2766 = vmatpush2.msra.mxu0 0.0
      %2767 = vmatprep.subr.mxu0 0.0
      %2768 = vmatpush2.msra.mxu0 0.0
      %2769 = vmatprep.subr.mxu0 0.0
      %2770 = vmatpush2.msra.mxu0 0.0
      %2771 = vmatprep.subr.mxu0 0.0
      %2772 = vmatpush2.msra.mxu0 0.0
      %2773 = vmatprep.subr.mxu0 0.0
      %2774 = vmatpush2.msra.mxu0 0.0
      %2775 = vmatprep.subr.mxu0 0.0
      %2776 = vmatpush2.msra.mxu0 0.0
      %2777 = vmatprep.subr.mxu0 0.0
      %2778 = vmatpush2.msra.mxu0 0.0
      %2779 = vmatprep.subr.mxu0 0.0
      %2780 = vmatpush2.msra.mxu0 0.0
      %2781 = vmatprep.subr.mxu0 0.0
      %2782 = vmatpush2.msra.mxu0 0.0
      %2783 = vmatprep.subr.mxu0 0.0
      %2784 = vmatpush2.msra.mxu0 0.0
      %2785 = vmatprep.subr.mxu0 0.0
      %2786 = vmatpush2.msra.mxu0 0.0
      %2787 = vmatprep.subr.mxu0 0.0
      %2788 = vmatpush2.msra.mxu0 0.0
      %2789 = vmatprep.subr.mxu0 0.0
      %2790 = vmatpush2.msra.mxu0 0.0
      %2791 = vmatprep.mubr.f32.mxu0 0.0
      %2792 = vmatmul.mubr.f32.gmra.mxu0 %v2716
      %v2793 = vpop.f32.mrf.mxu0
      %v2794 = vadd.f32 0.0, %v2793
      %v2795 = vpop.f32.mrf.mxu0
      %2796 = vmatprep.mubr.f32.mxu0 0.0
      %2797 = vmatmul.mubr.f32.gmra.mxu0 %v2719
      %v2798 = vpop.f32.mrf.mxu0
      %v2799 = vadd.f32 0.0, %v2798
      %v2800 = vpop.f32.mrf.mxu0
      %2801 = vmatprep.mubr.f32.mxu0 0.0
      %2802 = vmatmul.mubr.f32.gmra.mxu0 %v2722
      %v2803 = vpop.f32.mrf.mxu0
      %v2804 = vadd.f32 0.0, %v2803
      %v2805 = vpop.f32.mrf.mxu0
      %2806 = vmatprep.mubr.f32.mxu0 0.0
      %2807 = vmatmul.mubr.f32.gmra.mxu0 %v2725
      %v2808 = vpop.f32.mrf.mxu0
      %v2809 = vadd.f32 0.0, %v2808
      %v2810 = vpop.f32.mrf.mxu0
      %2811 = vdwg.mxu0
      %v2813 = vsel %vm1194, %v2452, 0
      %v2816 = vsel %vm1194, %v2453, 0
      %v2819 = vsel %vm1194, %v2454, 0
      %v2822 = vsel %vm1194, %v2455, 0
      %v2825 = vsel %vm1194, %v2456, 0
      %v2828 = vsel %vm1194, %v2457, 0
      %v2831 = vsel %vm1194, %v2458, 0
      %v2834 = vsel %vm1194, %v2459, 0
      %v2837 = vsel %vm1194, %v2460, 0
      %v2840 = vsel %vm1194, %v2461, 0
      %v2843 = vsel %vm1194, %v2462, 0
      %v2846 = vsel %vm1194, %v2463, 0
      %v2849 = vsel %vm1194, %v2464, 0
      %v2852 = vsel %vm1194, %v2465, 0
      %v2855 = vsel %vm1194, %v2466, 0
      %v2858 = vsel %vm1194, %v2467, 0
      %2860 = vmatprep.subr.mxu0 0.0
      %2861 = vmatpush1.msra.mxu0 0.0
      %2862 = vmatprep.subr.mxu0 0.0
      %2863 = vmatpush1.msra.mxu0 0.0
      %2864 = vmatprep.subr.mxu0 0.0
      %2865 = vmatpush1.msra.mxu0 0.0
      %2866 = vmatprep.subr.mxu0 0.0
      %2867 = vmatpush1.msra.mxu0 0.0
      %2868 = vmatprep.subr.mxu0 0.0
      %2869 = vmatpush1.msra.mxu0 0.0
      %2870 = vmatprep.subr.mxu0 0.0
      %2871 = vmatpush1.msra.mxu0 0.0
      %2872 = vmatprep.subr.mxu0 0.0
      %2873 = vmatpush1.msra.mxu0 0.0
      %2874 = vmatprep.subr.mxu0 0.0
      %2875 = vmatpush1.msra.mxu0 0.0
      %2876 = vmatprep.subr.mxu0 0.0
      %2877 = vmatpush1.msra.mxu0 0.0
      %2878 = vmatprep.subr.mxu0 0.0
      %2879 = vmatpush1.msra.mxu0 0.0
      %2880 = vmatprep.subr.mxu0 0.0
      %2881 = vmatpush1.msra.mxu0 0.0
      %2882 = vmatprep.subr.mxu0 0.0
      %2883 = vmatpush1.msra.mxu0 0.0
      %2884 = vmatprep.subr.mxu0 0.0
      %2885 = vmatpush1.msra.mxu0 %v2809
      %2886 = vmatprep.subr.mxu0 0.0
      %2887 = vmatpush1.msra.mxu0 %v2804
      %2888 = vmatprep.subr.mxu0 0.0
      %2889 = vmatpush1.msra.mxu0 %v2799
      %2890 = vmatprep.subr.mxu0 0.0
      %2891 = vmatpush1.msra.mxu0 %v2794
      %2892 = vmatprep.subr.mxu0 0.0
      %2893 = vmatpush2.msra.mxu0 0.0
      %2894 = vmatprep.subr.mxu0 0.0
      %2895 = vmatpush2.msra.mxu0 0.0
      %2896 = vmatprep.subr.mxu0 0.0
      %2897 = vmatpush2.msra.mxu0 0.0
      %2898 = vmatprep.subr.mxu0 0.0
      %2899 = vmatpush2.msra.mxu0 0.0
      %2900 = vmatprep.subr.mxu0 0.0
      %2901 = vmatpush2.msra.mxu0 0.0
      %2902 = vmatprep.subr.mxu0 0.0
      %2903 = vmatpush2.msra.mxu0 0.0
      %2904 = vmatprep.subr.mxu0 0.0
      %2905 = vmatpush2.msra.mxu0 0.0
      %2906 = vmatprep.subr.mxu0 0.0
      %2907 = vmatpush2.msra.mxu0 0.0
      %2908 = vmatprep.subr.mxu0 0.0
      %2909 = vmatpush2.msra.mxu0 0.0
      %2910 = vmatprep.subr.mxu0 0.0
      %2911 = vmatpush2.msra.mxu0 0.0
      %2912 = vmatprep.subr.mxu0 0.0
      %2913 = vmatpush2.msra.mxu0 0.0
      %2914 = vmatprep.subr.mxu0 0.0
      %2915 = vmatpush2.msra.mxu0 0.0
      %2916 = vmatprep.subr.mxu0 0.0
      %2917 = vmatpush2.msra.mxu0 0.0
      %2918 = vmatprep.subr.mxu0 0.0
      %2919 = vmatpush2.msra.mxu0 0.0
      %2920 = vmatprep.subr.mxu0 0.0
      %2921 = vmatpush2.msra.mxu0 0.0
      %2922 = vmatprep.subr.mxu0 0.0
      %2923 = vmatpush2.msra.mxu0 0.0
      %2924 = vmatprep.mubr.f32.mxu0 0.0
      %2925 = vmatmul.mubr.f32.gmra.mxu0 %v2813
      %v2926 = vpop.f32.mrf.mxu0
      %v2927 = vadd.f32 0.0, %v2926
      %v2928 = vpop.f32.mrf.mxu0
      %2929 = vmatprep.mubr.f32.mxu0 0.0
      %2930 = vmatmul.mubr.f32.gmra.mxu0 %v2816
      %v2931 = vpop.f32.mrf.mxu0
      %v2932 = vadd.f32 0.0, %v2931
      %v2933 = vpop.f32.mrf.mxu0
      %2934 = vmatprep.mubr.f32.mxu0 0.0
      %2935 = vmatmul.mubr.f32.gmra.mxu0 %v2819
      %v2936 = vpop.f32.mrf.mxu0
      %v2937 = vadd.f32 0.0, %v2936
      %v2938 = vpop.f32.mrf.mxu0
      %2939 = vmatprep.mubr.f32.mxu0 0.0
      %2940 = vmatmul.mubr.f32.gmra.mxu0 %v2822
      %v2941 = vpop.f32.mrf.mxu0
      %v2942 = vadd.f32 0.0, %v2941
      %v2943 = vpop.f32.mrf.mxu0
      %2944 = vmatprep.mubr.f32.mxu0 0.0
      %2945 = vmatmul.mubr.f32.gmra.mxu0 %v2825
      %v2946 = vpop.f32.mrf.mxu0
      %v2947 = vadd.f32 0.0, %v2946
      %v2948 = vpop.f32.mrf.mxu0
      %2949 = vmatprep.mubr.f32.mxu0 0.0
      %2950 = vmatmul.mubr.f32.gmra.mxu0 %v2828
      %v2951 = vpop.f32.mrf.mxu0
      %v2952 = vadd.f32 0.0, %v2951
      %v2953 = vpop.f32.mrf.mxu0
      %2954 = vmatprep.mubr.f32.mxu0 0.0
      %2955 = vmatmul.mubr.f32.gmra.mxu0 %v2831
      %v2956 = vpop.f32.mrf.mxu0
      %v2957 = vadd.f32 0.0, %v2956
      %v2958 = vpop.f32.mrf.mxu0
      %2959 = vmatprep.mubr.f32.mxu0 0.0
      %2960 = vmatmul.mubr.f32.gmra.mxu0 %v2834
      %v2961 = vpop.f32.mrf.mxu0
      %v2962 = vadd.f32 0.0, %v2961
      %v2963 = vpop.f32.mrf.mxu0
      %2964 = vmatprep.mubr.f32.mxu0 0.0
      %2965 = vmatmul.mubr.f32.gmra.mxu0 %v2837
      %v2966 = vpop.f32.mrf.mxu0
      %v2967 = vadd.f32 0.0, %v2966
      %v2968 = vpop.f32.mrf.mxu0
      %2969 = vmatprep.mubr.f32.mxu0 0.0
      %2970 = vmatmul.mubr.f32.gmra.mxu0 %v2840
      %v2971 = vpop.f32.mrf.mxu0
      %v2972 = vadd.f32 0.0, %v2971
      %v2973 = vpop.f32.mrf.mxu0
      %2974 = vmatprep.mubr.f32.mxu0 0.0
      %2975 = vmatmul.mubr.f32.gmra.mxu0 %v2843
      %v2976 = vpop.f32.mrf.mxu0
      %v2977 = vadd.f32 0.0, %v2976
      %v2978 = vpop.f32.mrf.mxu0
      %2979 = vmatprep.mubr.f32.mxu0 0.0
      %2980 = vmatmul.mubr.f32.gmra.mxu0 %v2846
      %v2981 = vpop.f32.mrf.mxu0
      %v2982 = vadd.f32 0.0, %v2981
      %v2983 = vpop.f32.mrf.mxu0
      %2984 = vmatprep.mubr.f32.mxu0 0.0
      %2985 = vmatmul.mubr.f32.gmra.mxu0 %v2849
      %v2986 = vpop.f32.mrf.mxu0
      %v2987 = vadd.f32 0.0, %v2986
      %v2988 = vpop.f32.mrf.mxu0
      %2989 = vmatprep.mubr.f32.mxu0 0.0
      %2990 = vmatmul.mubr.f32.gmra.mxu0 %v2852
      %v2991 = vpop.f32.mrf.mxu0
      %v2992 = vadd.f32 0.0, %v2991
      %v2993 = vpop.f32.mrf.mxu0
      %2994 = vmatprep.mubr.f32.mxu0 0.0
      %2995 = vmatmul.mubr.f32.gmra.mxu0 %v2855
      %v2996 = vpop.f32.mrf.mxu0
      %v2997 = vadd.f32 0.0, %v2996
      %v2998 = vpop.f32.mrf.mxu0
      %2999 = vmatprep.mubr.f32.mxu0 0.0
      %3000 = vmatmul.mubr.f32.gmra.mxu0 %v2858
      %v3001 = vpop.f32.mrf.mxu0
      %v3002 = vadd.f32 0.0, %v3001
      %v3003 = vpop.f32.mrf.mxu0
      %3004 = vdwg.mxu0
      %s3005 = scalar_lea.vmem %s3, 64
      %v3006 = vld [vmem:[%s3005] sm:$0xff]
      %v3007 = vld [vmem:[%s3005 + $0x8] sm:$0xff]
      %v3008 = vld [vmem:[%s3005 + $0x10] sm:$0xff]
      %v3009 = vld [vmem:[%s3005 + $0x18] sm:$0xff]
      %s3010 = scalar_lea.vmem %s4, 2
      %v3011 = vld [vmem:[%s3010] sm:$0x1]
      %v3013 = vlaneseq
      %v3014 = vshrl.u32 %v3013, 7
      %v3015 = vsub.s32 0, %v3014
      %v3016 = vrot.slane %v3011, %v3015
      %3018 = vrot.lane.b32.xlu0 %v1063, 64
      %v3019 = vpop.permute.xlu0 %3018
      %3020 = vrot.lane.b32.xlu0 %v1069, 64
      %v3021 = vpop.permute.xlu0 %3020
      %3022 = vrot.lane.b32.xlu0 %v1075, 64
      %v3023 = vpop.permute.xlu0 %3022
      %3024 = vrot.lane.b32.xlu0 %v1081, 64
      %v3025 = vpop.permute.xlu0 %3024
      %3026 = vrot.lane.b32.xlu0 %v1087, 64
      %v3027 = vpop.permute.xlu0 %3026
      %3028 = vrot.lane.b32.xlu0 %v1093, 64
      %v3029 = vpop.permute.xlu0 %3028
      %3030 = vrot.lane.b32.xlu0 %v1099, 64
      %v3031 = vpop.permute.xlu0 %3030
      %3032 = vrot.lane.b32.xlu0 %v1105, 64
      %v3033 = vpop.permute.xlu0 %3032
      %3034 = vrot.lane.b32.xlu0 %v1111, 64
      %v3035 = vpop.permute.xlu0 %3034
      %3036 = vrot.lane.b32.xlu0 %v1117, 64
      %v3037 = vpop.permute.xlu0 %3036
      %3038 = vrot.lane.b32.xlu0 %v1123, 64
      %v3039 = vpop.permute.xlu0 %3038
      %3040 = vrot.lane.b32.xlu0 %v1129, 64
      %v3041 = vpop.permute.xlu0 %3040
      %3042 = vrot.lane.b32.xlu0 %v1135, 64
      %v3043 = vpop.permute.xlu0 %3042
      %3044 = vrot.lane.b32.xlu0 %v1141, 64
      %v3045 = vpop.permute.xlu0 %3044
      %3046 = vrot.lane.b32.xlu0 %v1147, 64
      %v3047 = vpop.permute.xlu0 %3046
      %3048 = vrot.lane.b32.xlu0 %v1153, 64
      %v3049 = vpop.permute.xlu0 %3048
      %v3050 = vsel %vm1194, %v3019, 0
      %v3052 = vsel %vm1194, %v3021, 0
      %v3054 = vsel %vm1194, %v3023, 0
      %v3056 = vsel %vm1194, %v3025, 0
      %v3058 = vsel %vm1194, %v3027, 0
      %v3060 = vsel %vm1194, %v3029, 0
      %v3062 = vsel %vm1194, %v3031, 0
      %v3064 = vsel %vm1194, %v3033, 0
      %v3066 = vsel %vm1194, %v3035, 0
      %v3068 = vsel %vm1194, %v3037, 0
      %v3070 = vsel %vm1194, %v3039, 0
      %v3072 = vsel %vm1194, %v3041, 0
      %v3074 = vsel %vm1194, %v3043, 0
      %v3076 = vsel %vm1194, %v3045, 0
      %v3078 = vsel %vm1194, %v3047, 0
      %v3080 = vsel %vm1194, %v3049, 0
      %3082 = vmatprep.subr.mxu0 0.0
      %3083 = vmatpush1.msra.mxu0 0.0
      %3084 = vmatprep.subr.mxu0 0.0
      %3085 = vmatpush1.msra.mxu0 0.0
      %3086 = vmatprep.subr.mxu0 0.0
      %3087 = vmatpush1.msra.mxu0 0.0
      %3088 = vmatprep.subr.mxu0 0.0
      %3089 = vmatpush1.msra.mxu0 0.0
      %3090 = vmatprep.subr.mxu0 0.0
      %3091 = vmatpush1.msra.mxu0 0.0
      %3092 = vmatprep.subr.mxu0 0.0
      %3093 = vmatpush1.msra.mxu0 0.0
      %3094 = vmatprep.subr.mxu0 0.0
      %3095 = vmatpush1.msra.mxu0 0.0
      %3096 = vmatprep.subr.mxu0 0.0
      %3097 = vmatpush1.msra.mxu0 0.0
      %3098 = vmatprep.subr.mxu0 0.0
      %3099 = vmatpush1.msra.mxu0 0.0
      %3100 = vmatprep.subr.mxu0 0.0
      %3101 = vmatpush1.msra.mxu0 0.0
      %3102 = vmatprep.subr.mxu0 0.0
      %3103 = vmatpush1.msra.mxu0 0.0
      %3104 = vmatprep.subr.mxu0 0.0
      %3105 = vmatpush1.msra.mxu0 0.0
      %3106 = vmatprep.subr.mxu0 0.0
      %3107 = vmatpush1.msra.mxu0 %v3009
      %3108 = vmatprep.subr.mxu0 0.0
      %3109 = vmatpush1.msra.mxu0 %v3008
      %3110 = vmatprep.subr.mxu0 0.0
      %3111 = vmatpush1.msra.mxu0 %v3007
      %3112 = vmatprep.subr.mxu0 0.0
      %3113 = vmatpush1.msra.mxu0 %v3006
      %3114 = vmatprep.subr.mxu0 0.0
      %3115 = vmatpush2.msra.mxu0 0.0
      %3116 = vmatprep.subr.mxu0 0.0
      %3117 = vmatpush2.msra.mxu0 0.0
      %3118 = vmatprep.subr.mxu0 0.0
      %3119 = vmatpush2.msra.mxu0 0.0
      %3120 = vmatprep.subr.mxu0 0.0
      %3121 = vmatpush2.msra.mxu0 0.0
      %3122 = vmatprep.subr.mxu0 0.0
      %3123 = vmatpush2.msra.mxu0 0.0
      %3124 = vmatprep.subr.mxu0 0.0
      %3125 = vmatpush2.msra.mxu0 0.0
      %3126 = vmatprep.subr.mxu0 0.0
      %3127 = vmatpush2.msra.mxu0 0.0
      %3128 = vmatprep.subr.mxu0 0.0
      %3129 = vmatpush2.msra.mxu0 0.0
      %3130 = vmatprep.subr.mxu0 0.0
      %3131 = vmatpush2.msra.mxu0 0.0
      %3132 = vmatprep.subr.mxu0 0.0
      %3133 = vmatpush2.msra.mxu0 0.0
      %3134 = vmatprep.subr.mxu0 0.0
      %3135 = vmatpush2.msra.mxu0 0.0
      %3136 = vmatprep.subr.mxu0 0.0
      %3137 = vmatpush2.msra.mxu0 0.0
      %3138 = vmatprep.subr.mxu0 0.0
      %3139 = vmatpush2.msra.mxu0 0.0
      %3140 = vmatprep.subr.mxu0 0.0
      %3141 = vmatpush2.msra.mxu0 0.0
      %3142 = vmatprep.subr.mxu0 0.0
      %3143 = vmatpush2.msra.mxu0 0.0
      %3144 = vmatprep.subr.mxu0 0.0
      %3145 = vmatpush2.msra.mxu0 0.0
      %3146 = vmatprep.mubr.f32.mxu0 0.0
      %3147 = vmatmul.mubr.f32.gmra.mxu0 %v3050
      %v3148 = vpop.f32.mrf.mxu0
      %v3149 = vadd.f32 %v3016, %v3148
      %v3150 = vpop.f32.mrf.mxu0
      %3151 = vmatprep.mubr.f32.mxu0 0.0
      %3152 = vmatmul.mubr.f32.gmra.mxu0 %v3052
      %v3153 = vpop.f32.mrf.mxu0
      %v3154 = vadd.f32 %v3016, %v3153
      %v3155 = vpop.f32.mrf.mxu0
      %3156 = vmatprep.mubr.f32.mxu0 0.0
      %3157 = vmatmul.mubr.f32.gmra.mxu0 %v3054
      %v3158 = vpop.f32.mrf.mxu0
      %v3159 = vadd.f32 %v3016, %v3158
      %v3160 = vpop.f32.mrf.mxu0
      %3161 = vmatprep.mubr.f32.mxu0 0.0
      %3162 = vmatmul.mubr.f32.gmra.mxu0 %v3056
      %v3163 = vpop.f32.mrf.mxu0
      %v3164 = vadd.f32 %v3016, %v3163
      %v3165 = vpop.f32.mrf.mxu0
      %3166 = vmatprep.mubr.f32.mxu0 0.0
      %3167 = vmatmul.mubr.f32.gmra.mxu0 %v3058
      %v3168 = vpop.f32.mrf.mxu0
      %v3169 = vadd.f32 %v3016, %v3168
      %v3170 = vpop.f32.mrf.mxu0
      %3171 = vmatprep.mubr.f32.mxu0 0.0
      %3172 = vmatmul.mubr.f32.gmra.mxu0 %v3060
      %v3173 = vpop.f32.mrf.mxu0
      %v3174 = vadd.f32 %v3016, %v3173
      %v3175 = vpop.f32.mrf.mxu0
      %3176 = vmatprep.mubr.f32.mxu0 0.0
      %3177 = vmatmul.mubr.f32.gmra.mxu0 %v3062
      %v3178 = vpop.f32.mrf.mxu0
      %v3179 = vadd.f32 %v3016, %v3178
      %v3180 = vpop.f32.mrf.mxu0
      %3181 = vmatprep.mubr.f32.mxu0 0.0
      %3182 = vmatmul.mubr.f32.gmra.mxu0 %v3064
      %v3183 = vpop.f32.mrf.mxu0
      %v3184 = vadd.f32 %v3016, %v3183
      %v3185 = vpop.f32.mrf.mxu0
      %3186 = vmatprep.mubr.f32.mxu0 0.0
      %3187 = vmatmul.mubr.f32.gmra.mxu0 %v3066
      %v3188 = vpop.f32.mrf.mxu0
      %v3189 = vadd.f32 %v3016, %v3188
      %v3190 = vpop.f32.mrf.mxu0
      %3191 = vmatprep.mubr.f32.mxu0 0.0
      %3192 = vmatmul.mubr.f32.gmra.mxu0 %v3068
      %v3193 = vpop.f32.mrf.mxu0
      %v3194 = vadd.f32 %v3016, %v3193
      %v3195 = vpop.f32.mrf.mxu0
      %3196 = vmatprep.mubr.f32.mxu0 0.0
      %3197 = vmatmul.mubr.f32.gmra.mxu0 %v3070
      %v3198 = vpop.f32.mrf.mxu0
      %v3199 = vadd.f32 %v3016, %v3198
      %v3200 = vpop.f32.mrf.mxu0
      %3201 = vmatprep.mubr.f32.mxu0 0.0
      %3202 = vmatmul.mubr.f32.gmra.mxu0 %v3072
      %v3203 = vpop.f32.mrf.mxu0
      %v3204 = vadd.f32 %v3016, %v3203
      %v3205 = vpop.f32.mrf.mxu0
      %3206 = vmatprep.mubr.f32.mxu0 0.0
      %3207 = vmatmul.mubr.f32.gmra.mxu0 %v3074
      %v3208 = vpop.f32.mrf.mxu0
      %v3209 = vadd.f32 %v3016, %v3208
      %v3210 = vpop.f32.mrf.mxu0
      %3211 = vmatprep.mubr.f32.mxu0 0.0
      %3212 = vmatmul.mubr.f32.gmra.mxu0 %v3076
      %v3213 = vpop.f32.mrf.mxu0
      %v3214 = vadd.f32 %v3016, %v3213
      %v3215 = vpop.f32.mrf.mxu0
      %3216 = vmatprep.mubr.f32.mxu0 0.0
      %3217 = vmatmul.mubr.f32.gmra.mxu0 %v3078
      %v3218 = vpop.f32.mrf.mxu0
      %v3219 = vadd.f32 %v3016, %v3218
      %v3220 = vpop.f32.mrf.mxu0
      %3221 = vmatprep.mubr.f32.mxu0 0.0
      %3222 = vmatmul.mubr.f32.gmra.mxu0 %v3080
      %v3223 = vpop.f32.mrf.mxu0
      %v3224 = vadd.f32 %v3016, %v3223
      %v3225 = vpop.f32.mrf.mxu0
      %3226 = vdwg.mxu0
      %v3227 = vsel %vm1194, %v3149, -inf
      %3228 = vmax.xlane.f32.xlu0 %v3227
      %v3229 = vpop.xlane.xlu0 %3228
      %v3230 = vsel %vm1194, %v3154, -inf
      %3231 = vmax.xlane.f32.xlu0 %v3230
      %v3232 = vpop.xlane.xlu0 %3231
      %v3233 = vsel %vm1194, %v3159, -inf
      %3234 = vmax.xlane.f32.xlu0 %v3233
      %v3235 = vpop.xlane.xlu0 %3234
      %v3236 = vsel %vm1194, %v3164, -inf
      %3237 = vmax.xlane.f32.xlu0 %v3236
      %v3238 = vpop.xlane.xlu0 %3237
      %v3239 = vsel %vm1194, %v3169, -inf
      %3240 = vmax.xlane.f32.xlu0 %v3239
      %v3241 = vpop.xlane.xlu0 %3240
      %v3242 = vsel %vm1194, %v3174, -inf
      %3243 = vmax.xlane.f32.xlu0 %v3242
      %v3244 = vpop.xlane.xlu0 %3243
      %v3245 = vsel %vm1194, %v3179, -inf
      %3246 = vmax.xlane.f32.xlu0 %v3245
      %v3247 = vpop.xlane.xlu0 %3246
      %v3248 = vsel %vm1194, %v3184, -inf
      %3249 = vmax.xlane.f32.xlu0 %v3248
      %v3250 = vpop.xlane.xlu0 %3249
      %v3251 = vsel %vm1194, %v3189, -inf
      %3252 = vmax.xlane.f32.xlu0 %v3251
      %v3253 = vpop.xlane.xlu0 %3252
      %v3254 = vsel %vm1194, %v3194, -inf
      %3255 = vmax.xlane.f32.xlu0 %v3254
      %v3256 = vpop.xlane.xlu0 %3255
      %v3257 = vsel %vm1194, %v3199, -inf
      %3258 = vmax.xlane.f32.xlu0 %v3257
      %v3259 = vpop.xlane.xlu0 %3258
      %v3260 = vsel %vm1194, %v3204, -inf
      %3261 = vmax.xlane.f32.xlu0 %v3260
      %v3262 = vpop.xlane.xlu0 %3261
      %v3263 = vsel %vm1194, %v3209, -inf
      %3264 = vmax.xlane.f32.xlu0 %v3263
      %v3265 = vpop.xlane.xlu0 %3264
      %v3266 = vsel %vm1194, %v3214, -inf
      %3267 = vmax.xlane.f32.xlu0 %v3266
      %v3268 = vpop.xlane.xlu0 %3267
      %v3269 = vsel %vm1194, %v3219, -inf
      %3270 = vmax.xlane.f32.xlu0 %v3269
      %v3271 = vpop.xlane.xlu0 %3270
      %v3272 = vsel %vm1194, %v3224, -inf
      %3273 = vmax.xlane.f32.xlu0 %v3272
      %v3274 = vpop.xlane.xlu0 %3273
      %v3275 = vsub.f32 %v3149, %v3229
      %v3276 = vsub.f32 %v3154, %v3232
      %v3277 = vsub.f32 %v3159, %v3235
      %v3278 = vsub.f32 %v3164, %v3238
      %v3279 = vsub.f32 %v3169, %v3241
      %v3280 = vsub.f32 %v3174, %v3244
      %v3281 = vsub.f32 %v3179, %v3247
      %v3282 = vsub.f32 %v3184, %v3250
      %v3283 = vsub.f32 %v3189, %v3253
      %v3284 = vsub.f32 %v3194, %v3256
      %v3285 = vsub.f32 %v3199, %v3259
      %v3286 = vsub.f32 %v3204, %v3262
      %v3287 = vsub.f32 %v3209, %v3265
      %v3288 = vsub.f32 %v3214, %v3268
      %v3289 = vsub.f32 %v3219, %v3271
      %v3290 = vsub.f32 %v3224, %v3274
      %v3291 = vmul.f32 %v3275, 1.442695
      %v3292 = vpow.pop %v3291
      %v3293 = vmul.f32 %v3276, 1.442695
      %v3294 = vpow.pop %v3293
      %v3295 = vmul.f32 %v3277, 1.442695
      %v3296 = vpow.pop %v3295
      %v3297 = vmul.f32 %v3278, 1.442695
      %v3298 = vpow.pop %v3297
      %v3299 = vmul.f32 %v3279, 1.442695
      %v3300 = vpow.pop %v3299
      %v3301 = vmul.f32 %v3280, 1.442695
      %v3302 = vpow.pop %v3301
      %v3303 = vmul.f32 %v3281, 1.442695
      %v3304 = vpow.pop %v3303
      %v3305 = vmul.f32 %v3282, 1.442695
      %v3306 = vpow.pop %v3305
      %v3307 = vmul.f32 %v3283, 1.442695
      %v3308 = vpow.pop %v3307
      %v3309 = vmul.f32 %v3284, 1.442695
      %v3310 = vpow.pop %v3309
      %v3311 = vmul.f32 %v3285, 1.442695
      %v3312 = vpow.pop %v3311
      %v3313 = vmul.f32 %v3286, 1.442695
      %v3314 = vpow.pop %v3313
      %v3315 = vmul.f32 %v3287, 1.442695
      %v3316 = vpow.pop %v3315
      %v3317 = vmul.f32 %v3288, 1.442695
      %v3318 = vpow.pop %v3317
      %v3319 = vmul.f32 %v3289, 1.442695
      %v3320 = vpow.pop %v3319
      %v3321 = vmul.f32 %v3290, 1.442695
      %v3322 = vpow.pop %v3321
      %v3323 = vsel %vm1194, %v3292, 0.0
      %3324 = vadd.xlane.f32.xlu0 %v3323
      %v3325 = vpop.xlane.xlu0 %3324
      %v3326 = vsel %vm1194, %v3294, 0.0
      %3327 = vadd.xlane.f32.xlu0 %v3326
      %v3328 = vpop.xlane.xlu0 %3327
      %v3329 = vsel %vm1194, %v3296, 0.0
      %3330 = vadd.xlane.f32.xlu0 %v3329
      %v3331 = vpop.xlane.xlu0 %3330
      %v3332 = vsel %vm1194, %v3298, 0.0
      %3333 = vadd.xlane.f32.xlu0 %v3332
      %v3334 = vpop.xlane.xlu0 %3333
      %v3335 = vsel %vm1194, %v3300, 0.0
      %3336 = vadd.xlane.f32.xlu0 %v3335
      %v3337 = vpop.xlane.xlu0 %3336
      %v3338 = vsel %vm1194, %v3302, 0.0
      %3339 = vadd.xlane.f32.xlu0 %v3338
      %v3340 = vpop.xlane.xlu0 %3339
      %v3341 = vsel %vm1194, %v3304, 0.0
      %3342 = vadd.xlane.f32.xlu0 %v3341
      %v3343 = vpop.xlane.xlu0 %3342
      %v3344 = vsel %vm1194, %v3306, 0.0
      %3345 = vadd.xlane.f32.xlu0 %v3344
      %v3346 = vpop.xlane.xlu0 %3345
      %v3347 = vsel %vm1194, %v3308, 0.0
      %3348 = vadd.xlane.f32.xlu0 %v3347
      %v3349 = vpop.xlane.xlu0 %3348
      %v3350 = vsel %vm1194, %v3310, 0.0
      %3351 = vadd.xlane.f32.xlu0 %v3350
      %v3352 = vpop.xlane.xlu0 %3351
      %v3353 = vsel %vm1194, %v3312, 0.0
      %3354 = vadd.xlane.f32.xlu0 %v3353
      %v3355 = vpop.xlane.xlu0 %3354
      %v3356 = vsel %vm1194, %v3314, 0.0
      %3357 = vadd.xlane.f32.xlu0 %v3356
      %v3358 = vpop.xlane.xlu0 %3357
      %v3359 = vsel %vm1194, %v3316, 0.0
      %3360 = vadd.xlane.f32.xlu0 %v3359
      %v3361 = vpop.xlane.xlu0 %3360
      %v3362 = vsel %vm1194, %v3318, 0.0
      %3363 = vadd.xlane.f32.xlu0 %v3362
      %v3364 = vpop.xlane.xlu0 %3363
      %v3365 = vsel %vm1194, %v3320, 0.0
      %3366 = vadd.xlane.f32.xlu0 %v3365
      %v3367 = vpop.xlane.xlu0 %3366
      %v3368 = vsel %vm1194, %v3322, 0.0
      %3369 = vadd.xlane.f32.xlu0 %v3368
      %v3370 = vpop.xlane.xlu0 %3369
      %v3371 = vrcp.pop %v3325
      %v3372 = vrcp.pop %v3328
      %v3373 = vrcp.pop %v3331
      %v3374 = vrcp.pop %v3334
      %v3375 = vrcp.pop %v3337
      %v3376 = vrcp.pop %v3340
      %v3377 = vrcp.pop %v3343
      %v3378 = vrcp.pop %v3346
      %v3379 = vrcp.pop %v3349
      %v3380 = vrcp.pop %v3352
      %v3381 = vrcp.pop %v3355
      %v3382 = vrcp.pop %v3358
      %v3383 = vrcp.pop %v3361
      %v3384 = vrcp.pop %v3364
      %v3385 = vrcp.pop %v3367
      %v3386 = vrcp.pop %v3370
      %v3387 = vmul.f32 %v3292, %v3371
      %v3388 = vmul.f32 %v3294, %v3372
      %v3389 = vmul.f32 %v3296, %v3373
      %v3390 = vmul.f32 %v3298, %v3374
      %v3391 = vmul.f32 %v3300, %v3375
      %v3392 = vmul.f32 %v3302, %v3376
      %v3393 = vmul.f32 %v3304, %v3377
      %v3394 = vmul.f32 %v3306, %v3378
      %v3395 = vmul.f32 %v3308, %v3379
      %v3396 = vmul.f32 %v3310, %v3380
      %v3397 = vmul.f32 %v3312, %v3381
      %v3398 = vmul.f32 %v3314, %v3382
      %v3399 = vmul.f32 %v3316, %v3383
      %v3400 = vmul.f32 %v3318, %v3384
      %v3401 = vmul.f32 %v3320, %v3385
      %v3402 = vmul.f32 %v3322, %v3386
      %v3403 = vmul.f32 %v3387, %v1155
      %v3404 = vmul.f32 %v3388, %v1156
      %v3405 = vmul.f32 %v3389, %v1157
      %v3406 = vmul.f32 %v3390, %v1158
      %v3407 = vmul.f32 %v3391, %v1159
      %v3408 = vmul.f32 %v3392, %v1160
      %v3409 = vmul.f32 %v3393, %v1161
      %v3410 = vmul.f32 %v3394, %v1162
      %v3411 = vmul.f32 %v3395, %v1163
      %v3412 = vmul.f32 %v3396, %v1164
      %v3413 = vmul.f32 %v3397, %v1165
      %v3414 = vmul.f32 %v3398, %v1166
      %v3415 = vmul.f32 %v3399, %v1167
      %v3416 = vmul.f32 %v3400, %v1168
      %v3417 = vmul.f32 %v3401, %v1169
      %v3418 = vmul.f32 %v3402, %v1170
      %3419 = vxpose.xlu0.b32.start [1/16] %v3403, 128
      %3420 = vxpose.xlu0.b32.cont [2/16] %v3404, 128
      %3421 = vxpose.xlu0.b32.cont [3/16] %v3405, 128
      %3422 = vxpose.xlu0.b32.cont [4/16] %v3406, 128
      %3423 = vxpose.xlu0.b32.cont [5/16] %v3407, 128
      %3424 = vxpose.xlu0.b32.cont [6/16] %v3408, 128
      %3425 = vxpose.xlu0.b32.cont [7/16] %v3409, 128
      %3426 = vxpose.xlu0.b32.cont [8/16] %v3410, 128
      %3427 = vxpose.xlu0.b32.cont [9/16] %v3411, 128
      %3428 = vxpose.xlu0.b32.cont [10/16] %v3412, 128
      %3429 = vxpose.xlu0.b32.cont [11/16] %v3413, 128
      %3430 = vxpose.xlu0.b32.cont [12/16] %v3414, 128
      %3431 = vxpose.xlu0.b32.cont [13/16] %v3415, 128
      %3432 = vxpose.xlu0.b32.cont [14/16] %v3416, 128
      %3433 = vxpose.xlu0.b32.cont [15/16] %v3417, 128
      %3434 = vxpose.xlu0.b32.end [16/16] %v3418, 128
      %v3435 = vpop.trf.xlu0
      %v3436 = vpop.trf.xlu0
      %v3437 = vpop.trf.xlu0
      %v3438 = vpop.trf.xlu0
      %v3439 = vpop.trf.xlu0
      %v3440 = vpop.trf.xlu0
      %v3441 = vpop.trf.xlu0
      %v3442 = vpop.trf.xlu0
      %v3443 = vpop.trf.xlu0
      %v3444 = vpop.trf.xlu0
      %v3445 = vpop.trf.xlu0
      %v3446 = vpop.trf.xlu0
      %v3447 = vpop.trf.xlu0
      %v3448 = vpop.trf.xlu0
      %v3449 = vpop.trf.xlu0
      %v3450 = vpop.trf.xlu0
      %3451 = vrot.lane.b32.xlu0 %v1061, 64
      %v3452 = vpop.permute.xlu0 %3451
      %3453 = vrot.lane.b32.xlu0 %v1067, 64
      %v3454 = vpop.permute.xlu0 %3453
      %3455 = vrot.lane.b32.xlu0 %v1073, 64
      %v3456 = vpop.permute.xlu0 %3455
      %3457 = vrot.lane.b32.xlu0 %v1079, 64
      %v3458 = vpop.permute.xlu0 %3457
      %3459 = vrot.lane.b32.xlu0 %v1085, 64
      %v3460 = vpop.permute.xlu0 %3459
      %3461 = vrot.lane.b32.xlu0 %v1091, 64
      %v3462 = vpop.permute.xlu0 %3461
      %3463 = vrot.lane.b32.xlu0 %v1097, 64
      %v3464 = vpop.permute.xlu0 %3463
      %3465 = vrot.lane.b32.xlu0 %v1103, 64
      %v3466 = vpop.permute.xlu0 %3465
      %3467 = vrot.lane.b32.xlu0 %v1109, 64
      %v3468 = vpop.permute.xlu0 %3467
      %3469 = vrot.lane.b32.xlu0 %v1115, 64
      %v3470 = vpop.permute.xlu0 %3469
      %3471 = vrot.lane.b32.xlu0 %v1121, 64
      %v3472 = vpop.permute.xlu0 %3471
      %3473 = vrot.lane.b32.xlu0 %v1127, 64
      %v3474 = vpop.permute.xlu0 %3473
      %3475 = vrot.lane.b32.xlu0 %v1133, 64
      %v3476 = vpop.permute.xlu0 %3475
      %3477 = vrot.lane.b32.xlu0 %v1139, 64
      %v3478 = vpop.permute.xlu0 %3477
      %3479 = vrot.lane.b32.xlu0 %v1145, 64
      %v3480 = vpop.permute.xlu0 %3479
      %3481 = vrot.lane.b32.xlu0 %v1151, 64
      %v3482 = vpop.permute.xlu0 %3481
      %3499 = vmatprep.subr.mxu0 0.0
      %3500 = vmatpush1.msra.mxu0 %v3482
      %3501 = vmatprep.subr.mxu0 0.0
      %3502 = vmatpush1.msra.mxu0 %v3480
      %3503 = vmatprep.subr.mxu0 0.0
      %3504 = vmatpush1.msra.mxu0 %v3478
      %3505 = vmatprep.subr.mxu0 0.0
      %3506 = vmatpush1.msra.mxu0 %v3476
      %3507 = vmatprep.subr.mxu0 0.0
      %3508 = vmatpush1.msra.mxu0 %v3474
      %3509 = vmatprep.subr.mxu0 0.0
      %3510 = vmatpush1.msra.mxu0 %v3472
      %3511 = vmatprep.subr.mxu0 0.0
      %3512 = vmatpush1.msra.mxu0 %v3470
      %3513 = vmatprep.subr.mxu0 0.0
      %3514 = vmatpush1.msra.mxu0 %v3468
      %3515 = vmatprep.subr.mxu0 0.0
      %3516 = vmatpush1.msra.mxu0 %v3466
      %3517 = vmatprep.subr.mxu0 0.0
      %3518 = vmatpush1.msra.mxu0 %v3464
      %3519 = vmatprep.subr.mxu0 0.0
      %3520 = vmatpush1.msra.mxu0 %v3462
      %3521 = vmatprep.subr.mxu0 0.0
      %3522 = vmatpush1.msra.mxu0 %v3460
      %3523 = vmatprep.subr.mxu0 0.0
      %3524 = vmatpush1.msra.mxu0 %v3458
      %3525 = vmatprep.subr.mxu0 0.0
      %3526 = vmatpush1.msra.mxu0 %v3456
      %3527 = vmatprep.subr.mxu0 0.0
      %3528 = vmatpush1.msra.mxu0 %v3454
      %3529 = vmatprep.subr.mxu0 0.0
      %3530 = vmatpush1.msra.mxu0 %v3452
      %3531 = vmatprep.subr.mxu0 0.0
      %3532 = vmatpush2.msra.mxu0 0.0
      %3533 = vmatprep.subr.mxu0 0.0
      %3534 = vmatpush2.msra.mxu0 0.0
      %3535 = vmatprep.subr.mxu0 0.0
      %3536 = vmatpush2.msra.mxu0 0.0
      %3537 = vmatprep.subr.mxu0 0.0
      %3538 = vmatpush2.msra.mxu0 0.0
      %3539 = vmatprep.subr.mxu0 0.0
      %3540 = vmatpush2.msra.mxu0 0.0
      %3541 = vmatprep.subr.mxu0 0.0
      %3542 = vmatpush2.msra.mxu0 0.0
      %3543 = vmatprep.subr.mxu0 0.0
      %3544 = vmatpush2.msra.mxu0 0.0
      %3545 = vmatprep.subr.mxu0 0.0
      %3546 = vmatpush2.msra.mxu0 0.0
      %3547 = vmatprep.subr.mxu0 0.0
      %3548 = vmatpush2.msra.mxu0 0.0
      %3549 = vmatprep.subr.mxu0 0.0
      %3550 = vmatpush2.msra.mxu0 0.0
      %3551 = vmatprep.subr.mxu0 0.0
      %3552 = vmatpush2.msra.mxu0 0.0
      %3553 = vmatprep.subr.mxu0 0.0
      %3554 = vmatpush2.msra.mxu0 0.0
      %3555 = vmatprep.subr.mxu0 0.0
      %3556 = vmatpush2.msra.mxu0 0.0
      %3557 = vmatprep.subr.mxu0 0.0
      %3558 = vmatpush2.msra.mxu0 0.0
      %3559 = vmatprep.subr.mxu0 0.0
      %3560 = vmatpush2.msra.mxu0 0.0
      %3561 = vmatprep.subr.mxu0 0.0
      %3562 = vmatpush2.msra.mxu0 0.0
      %3563 = vmatprep.mubr.f32.mxu0 0.0
      %3564 = vmatmul.mubr.f32.gmra.mxu0 %v3435
      %v3565 = vpop.f32.mrf.mxu0
      %v3566 = vadd.f32 0.0, %v3565
      %v3567 = vpop.f32.mrf.mxu0
      %3568 = vmatprep.mubr.f32.mxu0 0.0
      %3569 = vmatmul.mubr.f32.gmra.mxu0 %v3436
      %v3570 = vpop.f32.mrf.mxu0
      %v3571 = vadd.f32 0.0, %v3570
      %v3572 = vpop.f32.mrf.mxu0
      %3573 = vmatprep.mubr.f32.mxu0 0.0
      %3574 = vmatmul.mubr.f32.gmra.mxu0 %v3437
      %v3575 = vpop.f32.mrf.mxu0
      %v3576 = vadd.f32 0.0, %v3575
      %v3577 = vpop.f32.mrf.mxu0
      %3578 = vmatprep.mubr.f32.mxu0 0.0
      %3579 = vmatmul.mubr.f32.gmra.mxu0 %v3438
      %v3580 = vpop.f32.mrf.mxu0
      %v3581 = vadd.f32 0.0, %v3580
      %v3582 = vpop.f32.mrf.mxu0
      %3583 = vdwg.mxu0
      %v3584 = vsel %vm1194, %v3566, 0.0
      %3585 = vadd.xlane.f32.xlu0 %v3584
      %v3586 = vpop.xlane.xlu0 %3585
      %v3587 = vsel %vm1194, %v3571, 0.0
      %3588 = vadd.xlane.f32.xlu0 %v3587
      %v3589 = vpop.xlane.xlu0 %3588
      %v3590 = vsel %vm1194, %v3576, 0.0
      %3591 = vadd.xlane.f32.xlu0 %v3590
      %v3592 = vpop.xlane.xlu0 %3591
      %v3593 = vsel %vm1194, %v3581, 0.0
      %3594 = vadd.xlane.f32.xlu0 %v3593
      %v3595 = vpop.xlane.xlu0 %3594
      %v3596 = vadd.f32 %v3586, %v3589
      %v3597 = vadd.f32 %v3596, %v3592
      %v3598 = vadd.f32 %v3597, %v3595
      %v3599 = vrot.slane %v3598, 4
      %v3600 = vadd.f32 %v3598, %v3599
      %v3601 = vrot.slane %v3600, 2
      %v3602 = vadd.f32 %v3600, %v3601
      %v3603 = vrot.slane %v3602, 1
      %v3604 = vadd.f32 %v3602, %v3603
      %v3605 = vmul.f32 %v3604, %v1718
      %v3606 = vsub.f32 %v3566, %v3605
      %v3607 = vsub.f32 %v3571, %v3605
      %v3608 = vsub.f32 %v3576, %v3605
      %v3609 = vsub.f32 %v3581, %v3605
      %v3610 = vmul.f32 %v3606, %v3606
      %v3611 = vmul.f32 %v3607, %v3607
      %v3612 = vmul.f32 %v3608, %v3608
      %v3613 = vmul.f32 %v3609, %v3609
      %v3614 = vsel %vm1194, %v3610, 0.0
      %3615 = vadd.xlane.f32.xlu0 %v3614
      %v3616 = vpop.xlane.xlu0 %3615
      %v3617 = vsel %vm1194, %v3611, 0.0
      %3618 = vadd.xlane.f32.xlu0 %v3617
      %v3619 = vpop.xlane.xlu0 %3618
      %v3620 = vsel %vm1194, %v3612, 0.0
      %3621 = vadd.xlane.f32.xlu0 %v3620
      %v3622 = vpop.xlane.xlu0 %3621
      %v3623 = vsel %vm1194, %v3613, 0.0
      %3624 = vadd.xlane.f32.xlu0 %v3623
      %v3625 = vpop.xlane.xlu0 %3624
      %v3626 = vadd.f32 %v3616, %v3619
      %v3627 = vadd.f32 %v3626, %v3622
      %v3628 = vadd.f32 %v3627, %v3625
      %v3629 = vrot.slane %v3628, 4
      %v3630 = vadd.f32 %v3628, %v3629
      %v3631 = vrot.slane %v3630, 2
      %v3632 = vadd.f32 %v3630, %v3631
      %v3633 = vrot.slane %v3632, 1
      %v3634 = vadd.f32 %v3632, %v3633
      %v3635 = vmul.f32 %v3634, %v1718
      %v3636 = vadd.f32 %v3635, 1e-05
      %v3637 = vrsqrt.pop %v3636
      %v3638 = vmul.f32 %v3606, %v3637
      %v3639 = vmul.f32 %v3607, %v3637
      %v3640 = vmul.f32 %v3608, %v3637
      %v3641 = vmul.f32 %v3609, %v3637
      %v3642 = vmul.f32 %v3638, %v1171
      %v3643 = vmul.f32 %v3639, %v1172
      %v3644 = vmul.f32 %v3640, %v1173
      %v3645 = vmul.f32 %v3641, %v1174
      %v3646 = vadd.f32 %v3642, %v1175
      %v3647 = vadd.f32 %v3643, %v1176
      %v3648 = vadd.f32 %v3644, %v1177
      %v3649 = vadd.f32 %v3645, %v1178
      %v3651 = vsel %vm1194, %v3646, 0
      %v3654 = vsel %vm1194, %v3647, 0
      %v3657 = vsel %vm1194, %v3648, 0
      %v3660 = vsel %vm1194, %v3649, 0
      %3662 = vmatprep.subr.mxu0 0.0
      %3663 = vmatpush1.msra.mxu0 0.0
      %3664 = vmatprep.subr.mxu0 0.0
      %3665 = vmatpush1.msra.mxu0 0.0
      %3666 = vmatprep.subr.mxu0 0.0
      %3667 = vmatpush1.msra.mxu0 0.0
      %3668 = vmatprep.subr.mxu0 0.0
      %3669 = vmatpush1.msra.mxu0 0.0
      %3670 = vmatprep.subr.mxu0 0.0
      %3671 = vmatpush1.msra.mxu0 0.0
      %3672 = vmatprep.subr.mxu0 0.0
      %3673 = vmatpush1.msra.mxu0 0.0
      %3674 = vmatprep.subr.mxu0 0.0
      %3675 = vmatpush1.msra.mxu0 0.0
      %3676 = vmatprep.subr.mxu0 0.0
      %3677 = vmatpush1.msra.mxu0 0.0
      %3678 = vmatprep.subr.mxu0 0.0
      %3679 = vmatpush1.msra.mxu0 0.0
      %3680 = vmatprep.subr.mxu0 0.0
      %3681 = vmatpush1.msra.mxu0 0.0
      %3682 = vmatprep.subr.mxu0 0.0
      %3683 = vmatpush1.msra.mxu0 0.0
      %3684 = vmatprep.subr.mxu0 0.0
      %3685 = vmatpush1.msra.mxu0 0.0
      %3686 = vmatprep.subr.mxu0 0.0
      %3687 = vmatpush1.msra.mxu0 %v1182
      %3688 = vmatprep.subr.mxu0 0.0
      %3689 = vmatpush1.msra.mxu0 %v1181
      %3690 = vmatprep.subr.mxu0 0.0
      %3691 = vmatpush1.msra.mxu0 %v1180
      %3692 = vmatprep.subr.mxu0 0.0
      %3693 = vmatpush1.msra.mxu0 %v1179
      %3694 = vmatprep.subr.mxu0 0.0
      %3695 = vmatpush2.msra.mxu0 0.0
      %3696 = vmatprep.subr.mxu0 0.0
      %3697 = vmatpush2.msra.mxu0 0.0
      %3698 = vmatprep.subr.mxu0 0.0
      %3699 = vmatpush2.msra.mxu0 0.0
      %3700 = vmatprep.subr.mxu0 0.0
      %3701 = vmatpush2.msra.mxu0 0.0
      %3702 = vmatprep.subr.mxu0 0.0
      %3703 = vmatpush2.msra.mxu0 0.0
      %3704 = vmatprep.subr.mxu0 0.0
      %3705 = vmatpush2.msra.mxu0 0.0
      %3706 = vmatprep.subr.mxu0 0.0
      %3707 = vmatpush2.msra.mxu0 0.0
      %3708 = vmatprep.subr.mxu0 0.0
      %3709 = vmatpush2.msra.mxu0 0.0
      %3710 = vmatprep.subr.mxu0 0.0
      %3711 = vmatpush2.msra.mxu0 0.0
      %3712 = vmatprep.subr.mxu0 0.0
      %3713 = vmatpush2.msra.mxu0 0.0
      %3714 = vmatprep.subr.mxu0 0.0
      %3715 = vmatpush2.msra.mxu0 0.0
      %3716 = vmatprep.subr.mxu0 0.0
      %3717 = vmatpush2.msra.mxu0 0.0
      %3718 = vmatprep.subr.mxu0 0.0
      %3719 = vmatpush2.msra.mxu0 0.0
      %3720 = vmatprep.subr.mxu0 0.0
      %3721 = vmatpush2.msra.mxu0 0.0
      %3722 = vmatprep.subr.mxu0 0.0
      %3723 = vmatpush2.msra.mxu0 0.0
      %3724 = vmatprep.subr.mxu0 0.0
      %3725 = vmatpush2.msra.mxu0 0.0
      %3726 = vmatprep.mubr.f32.mxu0 0.0
      %3727 = vmatmul.mubr.f32.gmra.mxu0 %v3651
      %v3728 = vpop.f32.mrf.mxu0
      %v3729 = vadd.f32 0.0, %v3728
      %v3730 = vpop.f32.mrf.mxu0
      %3731 = vmatprep.mubr.f32.mxu0 0.0
      %3732 = vmatmul.mubr.f32.gmra.mxu0 %v3654
      %v3733 = vpop.f32.mrf.mxu0
      %v3734 = vadd.f32 0.0, %v3733
      %v3735 = vpop.f32.mrf.mxu0
      %3736 = vmatprep.mubr.f32.mxu0 0.0
      %3737 = vmatmul.mubr.f32.gmra.mxu0 %v3657
      %v3738 = vpop.f32.mrf.mxu0
      %v3739 = vadd.f32 0.0, %v3738
      %v3740 = vpop.f32.mrf.mxu0
      %3741 = vmatprep.mubr.f32.mxu0 0.0
      %3742 = vmatmul.mubr.f32.gmra.mxu0 %v3660
      %v3743 = vpop.f32.mrf.mxu0
      %v3744 = vadd.f32 0.0, %v3743
      %v3745 = vpop.f32.mrf.mxu0
      %3746 = vdwg.mxu0
      %v3748 = vsel %vm1194, %v3403, 0
      %v3751 = vsel %vm1194, %v3404, 0
      %v3754 = vsel %vm1194, %v3405, 0
      %v3757 = vsel %vm1194, %v3406, 0
      %v3760 = vsel %vm1194, %v3407, 0
      %v3763 = vsel %vm1194, %v3408, 0
      %v3766 = vsel %vm1194, %v3409, 0
      %v3769 = vsel %vm1194, %v3410, 0
      %v3772 = vsel %vm1194, %v3411, 0
      %v3775 = vsel %vm1194, %v3412, 0
      %v3778 = vsel %vm1194, %v3413, 0
      %v3781 = vsel %vm1194, %v3414, 0
      %v3784 = vsel %vm1194, %v3415, 0
      %v3787 = vsel %vm1194, %v3416, 0
      %v3790 = vsel %vm1194, %v3417, 0
      %v3793 = vsel %vm1194, %v3418, 0
      %3795 = vmatprep.subr.mxu0 0.0
      %3796 = vmatpush1.msra.mxu0 0.0
      %3797 = vmatprep.subr.mxu0 0.0
      %3798 = vmatpush1.msra.mxu0 0.0
      %3799 = vmatprep.subr.mxu0 0.0
      %3800 = vmatpush1.msra.mxu0 0.0
      %3801 = vmatprep.subr.mxu0 0.0
      %3802 = vmatpush1.msra.mxu0 0.0
      %3803 = vmatprep.subr.mxu0 0.0
      %3804 = vmatpush1.msra.mxu0 0.0
      %3805 = vmatprep.subr.mxu0 0.0
      %3806 = vmatpush1.msra.mxu0 0.0
      %3807 = vmatprep.subr.mxu0 0.0
      %3808 = vmatpush1.msra.mxu0 0.0
      %3809 = vmatprep.subr.mxu0 0.0
      %3810 = vmatpush1.msra.mxu0 0.0
      %3811 = vmatprep.subr.mxu0 0.0
      %3812 = vmatpush1.msra.mxu0 0.0
      %3813 = vmatprep.subr.mxu0 0.0
      %3814 = vmatpush1.msra.mxu0 0.0
      %3815 = vmatprep.subr.mxu0 0.0
      %3816 = vmatpush1.msra.mxu0 0.0
      %3817 = vmatprep.subr.mxu0 0.0
      %3818 = vmatpush1.msra.mxu0 0.0
      %3819 = vmatprep.subr.mxu0 0.0
      %3820 = vmatpush1.msra.mxu0 %v3744
      %3821 = vmatprep.subr.mxu0 0.0
      %3822 = vmatpush1.msra.mxu0 %v3739
      %3823 = vmatprep.subr.mxu0 0.0
      %3824 = vmatpush1.msra.mxu0 %v3734
      %3825 = vmatprep.subr.mxu0 0.0
      %3826 = vmatpush1.msra.mxu0 %v3729
      %3827 = vmatprep.subr.mxu0 0.0
      %3828 = vmatpush2.msra.mxu0 0.0
      %3829 = vmatprep.subr.mxu0 0.0
      %3830 = vmatpush2.msra.mxu0 0.0
      %3831 = vmatprep.subr.mxu0 0.0
      %3832 = vmatpush2.msra.mxu0 0.0
      %3833 = vmatprep.subr.mxu0 0.0
      %3834 = vmatpush2.msra.mxu0 0.0
      %3835 = vmatprep.subr.mxu0 0.0
      %3836 = vmatpush2.msra.mxu0 0.0
      %3837 = vmatprep.subr.mxu0 0.0
      %3838 = vmatpush2.msra.mxu0 0.0
      %3839 = vmatprep.subr.mxu0 0.0
      %3840 = vmatpush2.msra.mxu0 0.0
      %3841 = vmatprep.subr.mxu0 0.0
      %3842 = vmatpush2.msra.mxu0 0.0
      %3843 = vmatprep.subr.mxu0 0.0
      %3844 = vmatpush2.msra.mxu0 0.0
      %3845 = vmatprep.subr.mxu0 0.0
      %3846 = vmatpush2.msra.mxu0 0.0
      %3847 = vmatprep.subr.mxu0 0.0
      %3848 = vmatpush2.msra.mxu0 0.0
      %3849 = vmatprep.subr.mxu0 0.0
      %3850 = vmatpush2.msra.mxu0 0.0
      %3851 = vmatprep.subr.mxu0 0.0
      %3852 = vmatpush2.msra.mxu0 0.0
      %3853 = vmatprep.subr.mxu0 0.0
      %3854 = vmatpush2.msra.mxu0 0.0
      %3855 = vmatprep.subr.mxu0 0.0
      %3856 = vmatpush2.msra.mxu0 0.0
      %3857 = vmatprep.subr.mxu0 0.0
      %3858 = vmatpush2.msra.mxu0 0.0
      %3859 = vmatprep.mubr.f32.mxu0 0.0
      %3860 = vmatmul.mubr.f32.gmra.mxu0 %v3748
      %v3861 = vpop.f32.mrf.mxu0
      %v3862 = vadd.f32 0.0, %v3861
      %v3863 = vpop.f32.mrf.mxu0
      %3864 = vmatprep.mubr.f32.mxu0 0.0
      %3865 = vmatmul.mubr.f32.gmra.mxu0 %v3751
      %v3866 = vpop.f32.mrf.mxu0
      %v3867 = vadd.f32 0.0, %v3866
      %v3868 = vpop.f32.mrf.mxu0
      %3869 = vmatprep.mubr.f32.mxu0 0.0
      %3870 = vmatmul.mubr.f32.gmra.mxu0 %v3754
      %v3871 = vpop.f32.mrf.mxu0
      %v3872 = vadd.f32 0.0, %v3871
      %v3873 = vpop.f32.mrf.mxu0
      %3874 = vmatprep.mubr.f32.mxu0 0.0
      %3875 = vmatmul.mubr.f32.gmra.mxu0 %v3757
      %v3876 = vpop.f32.mrf.mxu0
      %v3877 = vadd.f32 0.0, %v3876
      %v3878 = vpop.f32.mrf.mxu0
      %3879 = vmatprep.mubr.f32.mxu0 0.0
      %3880 = vmatmul.mubr.f32.gmra.mxu0 %v3760
      %v3881 = vpop.f32.mrf.mxu0
      %v3882 = vadd.f32 0.0, %v3881
      %v3883 = vpop.f32.mrf.mxu0
      %3884 = vmatprep.mubr.f32.mxu0 0.0
      %3885 = vmatmul.mubr.f32.gmra.mxu0 %v3763
      %v3886 = vpop.f32.mrf.mxu0
      %v3887 = vadd.f32 0.0, %v3886
      %v3888 = vpop.f32.mrf.mxu0
      %3889 = vmatprep.mubr.f32.mxu0 0.0
      %3890 = vmatmul.mubr.f32.gmra.mxu0 %v3766
      %v3891 = vpop.f32.mrf.mxu0
      %v3892 = vadd.f32 0.0, %v3891
      %v3893 = vpop.f32.mrf.mxu0
      %3894 = vmatprep.mubr.f32.mxu0 0.0
      %3895 = vmatmul.mubr.f32.gmra.mxu0 %v3769
      %v3896 = vpop.f32.mrf.mxu0
      %v3897 = vadd.f32 0.0, %v3896
      %v3898 = vpop.f32.mrf.mxu0
      %3899 = vmatprep.mubr.f32.mxu0 0.0
      %3900 = vmatmul.mubr.f32.gmra.mxu0 %v3772
      %v3901 = vpop.f32.mrf.mxu0
      %v3902 = vadd.f32 0.0, %v3901
      %v3903 = vpop.f32.mrf.mxu0
      %3904 = vmatprep.mubr.f32.mxu0 0.0
      %3905 = vmatmul.mubr.f32.gmra.mxu0 %v3775
      %v3906 = vpop.f32.mrf.mxu0
      %v3907 = vadd.f32 0.0, %v3906
      %v3908 = vpop.f32.mrf.mxu0
      %3909 = vmatprep.mubr.f32.mxu0 0.0
      %3910 = vmatmul.mubr.f32.gmra.mxu0 %v3778
      %v3911 = vpop.f32.mrf.mxu0
      %v3912 = vadd.f32 0.0, %v3911
      %v3913 = vpop.f32.mrf.mxu0
      %3914 = vmatprep.mubr.f32.mxu0 0.0
      %3915 = vmatmul.mubr.f32.gmra.mxu0 %v3781
      %v3916 = vpop.f32.mrf.mxu0
      %v3917 = vadd.f32 0.0, %v3916
      %v3918 = vpop.f32.mrf.mxu0
      %3919 = vmatprep.mubr.f32.mxu0 0.0
      %3920 = vmatmul.mubr.f32.gmra.mxu0 %v3784
      %v3921 = vpop.f32.mrf.mxu0
      %v3922 = vadd.f32 0.0, %v3921
      %v3923 = vpop.f32.mrf.mxu0
      %3924 = vmatprep.mubr.f32.mxu0 0.0
      %3925 = vmatmul.mubr.f32.gmra.mxu0 %v3787
      %v3926 = vpop.f32.mrf.mxu0
      %v3927 = vadd.f32 0.0, %v3926
      %v3928 = vpop.f32.mrf.mxu0
      %3929 = vmatprep.mubr.f32.mxu0 0.0
      %3930 = vmatmul.mubr.f32.gmra.mxu0 %v3790
      %v3931 = vpop.f32.mrf.mxu0
      %v3932 = vadd.f32 0.0, %v3931
      %v3933 = vpop.f32.mrf.mxu0
      %3934 = vmatprep.mubr.f32.mxu0 0.0
      %3935 = vmatmul.mubr.f32.gmra.mxu0 %v3793
      %v3936 = vpop.f32.mrf.mxu0
      %v3937 = vadd.f32 0.0, %v3936
      %v3938 = vpop.f32.mrf.mxu0
      %3939 = vdwg.mxu0
      %s3940 = scalar_lea.vmem %s3, 96
      %v3941 = vld [vmem:[%s3940] sm:$0xff]
      %v3942 = vld [vmem:[%s3940 + $0x8] sm:$0xff]
      %v3943 = vld [vmem:[%s3940 + $0x10] sm:$0xff]
      %v3944 = vld [vmem:[%s3940 + $0x18] sm:$0xff]
      %s3945 = scalar_lea.vmem %s4, 3
      %v3946 = vld [vmem:[%s3945] sm:$0x1]
      %v3948 = vlaneseq
      %v3949 = vshrl.u32 %v3948, 7
      %v3950 = vsub.s32 0, %v3949
      %v3951 = vrot.slane %v3946, %v3950
      %3953 = vrot.lane.b32.xlu0 %v1063, 32
      %v3954 = vpop.permute.xlu0 %3953
      %3955 = vrot.lane.b32.xlu0 %v1069, 32
      %v3956 = vpop.permute.xlu0 %3955
      %3957 = vrot.lane.b32.xlu0 %v1075, 32
      %v3958 = vpop.permute.xlu0 %3957
      %3959 = vrot.lane.b32.xlu0 %v1081, 32
      %v3960 = vpop.permute.xlu0 %3959
      %3961 = vrot.lane.b32.xlu0 %v1087, 32
      %v3962 = vpop.permute.xlu0 %3961
      %3963 = vrot.lane.b32.xlu0 %v1093, 32
      %v3964 = vpop.permute.xlu0 %3963
      %3965 = vrot.lane.b32.xlu0 %v1099, 32
      %v3966 = vpop.permute.xlu0 %3965
      %3967 = vrot.lane.b32.xlu0 %v1105, 32
      %v3968 = vpop.permute.xlu0 %3967
      %3969 = vrot.lane.b32.xlu0 %v1111, 32
      %v3970 = vpop.permute.xlu0 %3969
      %3971 = vrot.lane.b32.xlu0 %v1117, 32
      %v3972 = vpop.permute.xlu0 %3971
      %3973 = vrot.lane.b32.xlu0 %v1123, 32
      %v3974 = vpop.permute.xlu0 %3973
      %3975 = vrot.lane.b32.xlu0 %v1129, 32
      %v3976 = vpop.permute.xlu0 %3975
      %3977 = vrot.lane.b32.xlu0 %v1135, 32
      %v3978 = vpop.permute.xlu0 %3977
      %3979 = vrot.lane.b32.xlu0 %v1141, 32
      %v3980 = vpop.permute.xlu0 %3979
      %3981 = vrot.lane.b32.xlu0 %v1147, 32
      %v3982 = vpop.permute.xlu0 %3981
      %3983 = vrot.lane.b32.xlu0 %v1153, 32
      %v3984 = vpop.permute.xlu0 %3983
      %v3985 = vsel %vm1194, %v3954, 0
      %v3987 = vsel %vm1194, %v3956, 0
      %v3989 = vsel %vm1194, %v3958, 0
      %v3991 = vsel %vm1194, %v3960, 0
      %v3993 = vsel %vm1194, %v3962, 0
      %v3995 = vsel %vm1194, %v3964, 0
      %v3997 = vsel %vm1194, %v3966, 0
      %v3999 = vsel %vm1194, %v3968, 0
      %v4001 = vsel %vm1194, %v3970, 0
      %v4003 = vsel %vm1194, %v3972, 0
      %v4005 = vsel %vm1194, %v3974, 0
      %v4007 = vsel %vm1194, %v3976, 0
      %v4009 = vsel %vm1194, %v3978, 0
      %v4011 = vsel %vm1194, %v3980, 0
      %v4013 = vsel %vm1194, %v3982, 0
      %v4015 = vsel %vm1194, %v3984, 0
      %4017 = vmatprep.subr.mxu0 0.0
      %4018 = vmatpush1.msra.mxu0 0.0
      %4019 = vmatprep.subr.mxu0 0.0
      %4020 = vmatpush1.msra.mxu0 0.0
      %4021 = vmatprep.subr.mxu0 0.0
      %4022 = vmatpush1.msra.mxu0 0.0
      %4023 = vmatprep.subr.mxu0 0.0
      %4024 = vmatpush1.msra.mxu0 0.0
      %4025 = vmatprep.subr.mxu0 0.0
      %4026 = vmatpush1.msra.mxu0 0.0
      %4027 = vmatprep.subr.mxu0 0.0
      %4028 = vmatpush1.msra.mxu0 0.0
      %4029 = vmatprep.subr.mxu0 0.0
      %4030 = vmatpush1.msra.mxu0 0.0
      %4031 = vmatprep.subr.mxu0 0.0
      %4032 = vmatpush1.msra.mxu0 0.0
      %4033 = vmatprep.subr.mxu0 0.0
      %4034 = vmatpush1.msra.mxu0 0.0
      %4035 = vmatprep.subr.mxu0 0.0
      %4036 = vmatpush1.msra.mxu0 0.0
      %4037 = vmatprep.subr.mxu0 0.0
      %4038 = vmatpush1.msra.mxu0 0.0
      %4039 = vmatprep.subr.mxu0 0.0
      %4040 = vmatpush1.msra.mxu0 0.0
      %4041 = vmatprep.subr.mxu0 0.0
      %4042 = vmatpush1.msra.mxu0 %v3944
      %4043 = vmatprep.subr.mxu0 0.0
      %4044 = vmatpush1.msra.mxu0 %v3943
      %4045 = vmatprep.subr.mxu0 0.0
      %4046 = vmatpush1.msra.mxu0 %v3942
      %4047 = vmatprep.subr.mxu0 0.0
      %4048 = vmatpush1.msra.mxu0 %v3941
      %4049 = vmatprep.subr.mxu0 0.0
      %4050 = vmatpush2.msra.mxu0 0.0
      %4051 = vmatprep.subr.mxu0 0.0
      %4052 = vmatpush2.msra.mxu0 0.0
      %4053 = vmatprep.subr.mxu0 0.0
      %4054 = vmatpush2.msra.mxu0 0.0
      %4055 = vmatprep.subr.mxu0 0.0
      %4056 = vmatpush2.msra.mxu0 0.0
      %4057 = vmatprep.subr.mxu0 0.0
      %4058 = vmatpush2.msra.mxu0 0.0
      %4059 = vmatprep.subr.mxu0 0.0
      %4060 = vmatpush2.msra.mxu0 0.0
      %4061 = vmatprep.subr.mxu0 0.0
      %4062 = vmatpush2.msra.mxu0 0.0
      %4063 = vmatprep.subr.mxu0 0.0
      %4064 = vmatpush2.msra.mxu0 0.0
      %4065 = vmatprep.subr.mxu0 0.0
      %4066 = vmatpush2.msra.mxu0 0.0
      %4067 = vmatprep.subr.mxu0 0.0
      %4068 = vmatpush2.msra.mxu0 0.0
      %4069 = vmatprep.subr.mxu0 0.0
      %4070 = vmatpush2.msra.mxu0 0.0
      %4071 = vmatprep.subr.mxu0 0.0
      %4072 = vmatpush2.msra.mxu0 0.0
      %4073 = vmatprep.subr.mxu0 0.0
      %4074 = vmatpush2.msra.mxu0 0.0
      %4075 = vmatprep.subr.mxu0 0.0
      %4076 = vmatpush2.msra.mxu0 0.0
      %4077 = vmatprep.subr.mxu0 0.0
      %4078 = vmatpush2.msra.mxu0 0.0
      %4079 = vmatprep.subr.mxu0 0.0
      %4080 = vmatpush2.msra.mxu0 0.0
      %4081 = vmatprep.mubr.f32.mxu0 0.0
      %4082 = vmatmul.mubr.f32.gmra.mxu0 %v3985
      %v4083 = vpop.f32.mrf.mxu0
      %v4084 = vadd.f32 %v3951, %v4083
      %v4085 = vpop.f32.mrf.mxu0
      %4086 = vmatprep.mubr.f32.mxu0 0.0
      %4087 = vmatmul.mubr.f32.gmra.mxu0 %v3987
      %v4088 = vpop.f32.mrf.mxu0
      %v4089 = vadd.f32 %v3951, %v4088
      %v4090 = vpop.f32.mrf.mxu0
      %4091 = vmatprep.mubr.f32.mxu0 0.0
      %4092 = vmatmul.mubr.f32.gmra.mxu0 %v3989
      %v4093 = vpop.f32.mrf.mxu0
      %v4094 = vadd.f32 %v3951, %v4093
      %v4095 = vpop.f32.mrf.mxu0
      %4096 = vmatprep.mubr.f32.mxu0 0.0
      %4097 = vmatmul.mubr.f32.gmra.mxu0 %v3991
      %v4098 = vpop.f32.mrf.mxu0
      %v4099 = vadd.f32 %v3951, %v4098
      %v4100 = vpop.f32.mrf.mxu0
      %4101 = vmatprep.mubr.f32.mxu0 0.0
      %4102 = vmatmul.mubr.f32.gmra.mxu0 %v3993
      %v4103 = vpop.f32.mrf.mxu0
      %v4104 = vadd.f32 %v3951, %v4103
      %v4105 = vpop.f32.mrf.mxu0
      %4106 = vmatprep.mubr.f32.mxu0 0.0
      %4107 = vmatmul.mubr.f32.gmra.mxu0 %v3995
      %v4108 = vpop.f32.mrf.mxu0
      %v4109 = vadd.f32 %v3951, %v4108
      %v4110 = vpop.f32.mrf.mxu0
      %4111 = vmatprep.mubr.f32.mxu0 0.0
      %4112 = vmatmul.mubr.f32.gmra.mxu0 %v3997
      %v4113 = vpop.f32.mrf.mxu0
      %v4114 = vadd.f32 %v3951, %v4113
      %v4115 = vpop.f32.mrf.mxu0
      %4116 = vmatprep.mubr.f32.mxu0 0.0
      %4117 = vmatmul.mubr.f32.gmra.mxu0 %v3999
      %v4118 = vpop.f32.mrf.mxu0
      %v4119 = vadd.f32 %v3951, %v4118
      %v4120 = vpop.f32.mrf.mxu0
      %4121 = vmatprep.mubr.f32.mxu0 0.0
      %4122 = vmatmul.mubr.f32.gmra.mxu0 %v4001
      %v4123 = vpop.f32.mrf.mxu0
      %v4124 = vadd.f32 %v3951, %v4123
      %v4125 = vpop.f32.mrf.mxu0
      %4126 = vmatprep.mubr.f32.mxu0 0.0
      %4127 = vmatmul.mubr.f32.gmra.mxu0 %v4003
      %v4128 = vpop.f32.mrf.mxu0
      %v4129 = vadd.f32 %v3951, %v4128
      %v4130 = vpop.f32.mrf.mxu0
      %4131 = vmatprep.mubr.f32.mxu0 0.0
      %4132 = vmatmul.mubr.f32.gmra.mxu0 %v4005
      %v4133 = vpop.f32.mrf.mxu0
      %v4134 = vadd.f32 %v3951, %v4133
      %v4135 = vpop.f32.mrf.mxu0
      %4136 = vmatprep.mubr.f32.mxu0 0.0
      %4137 = vmatmul.mubr.f32.gmra.mxu0 %v4007
      %v4138 = vpop.f32.mrf.mxu0
      %v4139 = vadd.f32 %v3951, %v4138
      %v4140 = vpop.f32.mrf.mxu0
      %4141 = vmatprep.mubr.f32.mxu0 0.0
      %4142 = vmatmul.mubr.f32.gmra.mxu0 %v4009
      %v4143 = vpop.f32.mrf.mxu0
      %v4144 = vadd.f32 %v3951, %v4143
      %v4145 = vpop.f32.mrf.mxu0
      %4146 = vmatprep.mubr.f32.mxu0 0.0
      %4147 = vmatmul.mubr.f32.gmra.mxu0 %v4011
      %v4148 = vpop.f32.mrf.mxu0
      %v4149 = vadd.f32 %v3951, %v4148
      %v4150 = vpop.f32.mrf.mxu0
      %4151 = vmatprep.mubr.f32.mxu0 0.0
      %4152 = vmatmul.mubr.f32.gmra.mxu0 %v4013
      %v4153 = vpop.f32.mrf.mxu0
      %v4154 = vadd.f32 %v3951, %v4153
      %v4155 = vpop.f32.mrf.mxu0
      %4156 = vmatprep.mubr.f32.mxu0 0.0
      %4157 = vmatmul.mubr.f32.gmra.mxu0 %v4015
      %v4158 = vpop.f32.mrf.mxu0
      %v4159 = vadd.f32 %v3951, %v4158
      %v4160 = vpop.f32.mrf.mxu0
      %4161 = vdwg.mxu0
      %v4162 = vsel %vm1194, %v4084, -inf
      %4163 = vmax.xlane.f32.xlu0 %v4162
      %v4164 = vpop.xlane.xlu0 %4163
      %v4165 = vsel %vm1194, %v4089, -inf
      %4166 = vmax.xlane.f32.xlu0 %v4165
      %v4167 = vpop.xlane.xlu0 %4166
      %v4168 = vsel %vm1194, %v4094, -inf
      %4169 = vmax.xlane.f32.xlu0 %v4168
      %v4170 = vpop.xlane.xlu0 %4169
      %v4171 = vsel %vm1194, %v4099, -inf
      %4172 = vmax.xlane.f32.xlu0 %v4171
      %v4173 = vpop.xlane.xlu0 %4172
      %v4174 = vsel %vm1194, %v4104, -inf
      %4175 = vmax.xlane.f32.xlu0 %v4174
      %v4176 = vpop.xlane.xlu0 %4175
      %v4177 = vsel %vm1194, %v4109, -inf
      %4178 = vmax.xlane.f32.xlu0 %v4177
      %v4179 = vpop.xlane.xlu0 %4178
      %v4180 = vsel %vm1194, %v4114, -inf
      %4181 = vmax.xlane.f32.xlu0 %v4180
      %v4182 = vpop.xlane.xlu0 %4181
      %v4183 = vsel %vm1194, %v4119, -inf
      %4184 = vmax.xlane.f32.xlu0 %v4183
      %v4185 = vpop.xlane.xlu0 %4184
      %v4186 = vsel %vm1194, %v4124, -inf
      %4187 = vmax.xlane.f32.xlu0 %v4186
      %v4188 = vpop.xlane.xlu0 %4187
      %v4189 = vsel %vm1194, %v4129, -inf
      %4190 = vmax.xlane.f32.xlu0 %v4189
      %v4191 = vpop.xlane.xlu0 %4190
      %v4192 = vsel %vm1194, %v4134, -inf
      %4193 = vmax.xlane.f32.xlu0 %v4192
      %v4194 = vpop.xlane.xlu0 %4193
      %v4195 = vsel %vm1194, %v4139, -inf
      %4196 = vmax.xlane.f32.xlu0 %v4195
      %v4197 = vpop.xlane.xlu0 %4196
      %v4198 = vsel %vm1194, %v4144, -inf
      %4199 = vmax.xlane.f32.xlu0 %v4198
      %v4200 = vpop.xlane.xlu0 %4199
      %v4201 = vsel %vm1194, %v4149, -inf
      %4202 = vmax.xlane.f32.xlu0 %v4201
      %v4203 = vpop.xlane.xlu0 %4202
      %v4204 = vsel %vm1194, %v4154, -inf
      %4205 = vmax.xlane.f32.xlu0 %v4204
      %v4206 = vpop.xlane.xlu0 %4205
      %v4207 = vsel %vm1194, %v4159, -inf
      %4208 = vmax.xlane.f32.xlu0 %v4207
      %v4209 = vpop.xlane.xlu0 %4208
      %v4210 = vsub.f32 %v4084, %v4164
      %v4211 = vsub.f32 %v4089, %v4167
      %v4212 = vsub.f32 %v4094, %v4170
      %v4213 = vsub.f32 %v4099, %v4173
      %v4214 = vsub.f32 %v4104, %v4176
      %v4215 = vsub.f32 %v4109, %v4179
      %v4216 = vsub.f32 %v4114, %v4182
      %v4217 = vsub.f32 %v4119, %v4185
      %v4218 = vsub.f32 %v4124, %v4188
      %v4219 = vsub.f32 %v4129, %v4191
      %v4220 = vsub.f32 %v4134, %v4194
      %v4221 = vsub.f32 %v4139, %v4197
      %v4222 = vsub.f32 %v4144, %v4200
      %v4223 = vsub.f32 %v4149, %v4203
      %v4224 = vsub.f32 %v4154, %v4206
      %v4225 = vsub.f32 %v4159, %v4209
      %v4226 = vmul.f32 %v4210, 1.442695
      %v4227 = vpow.pop %v4226
      %v4228 = vmul.f32 %v4211, 1.442695
      %v4229 = vpow.pop %v4228
      %v4230 = vmul.f32 %v4212, 1.442695
      %v4231 = vpow.pop %v4230
      %v4232 = vmul.f32 %v4213, 1.442695
      %v4233 = vpow.pop %v4232
      %v4234 = vmul.f32 %v4214, 1.442695
      %v4235 = vpow.pop %v4234
      %v4236 = vmul.f32 %v4215, 1.442695
      %v4237 = vpow.pop %v4236
      %v4238 = vmul.f32 %v4216, 1.442695
      %v4239 = vpow.pop %v4238
      %v4240 = vmul.f32 %v4217, 1.442695
      %v4241 = vpow.pop %v4240
      %v4242 = vmul.f32 %v4218, 1.442695
      %v4243 = vpow.pop %v4242
      %v4244 = vmul.f32 %v4219, 1.442695
      %v4245 = vpow.pop %v4244
      %v4246 = vmul.f32 %v4220, 1.442695
      %v4247 = vpow.pop %v4246
      %v4248 = vmul.f32 %v4221, 1.442695
      %v4249 = vpow.pop %v4248
      %v4250 = vmul.f32 %v4222, 1.442695
      %v4251 = vpow.pop %v4250
      %v4252 = vmul.f32 %v4223, 1.442695
      %v4253 = vpow.pop %v4252
      %v4254 = vmul.f32 %v4224, 1.442695
      %v4255 = vpow.pop %v4254
      %v4256 = vmul.f32 %v4225, 1.442695
      %v4257 = vpow.pop %v4256
      %v4258 = vsel %vm1194, %v4227, 0.0
      %4259 = vadd.xlane.f32.xlu0 %v4258
      %v4260 = vpop.xlane.xlu0 %4259
      %v4261 = vsel %vm1194, %v4229, 0.0
      %4262 = vadd.xlane.f32.xlu0 %v4261
      %v4263 = vpop.xlane.xlu0 %4262
      %v4264 = vsel %vm1194, %v4231, 0.0
      %4265 = vadd.xlane.f32.xlu0 %v4264
      %v4266 = vpop.xlane.xlu0 %4265
      %v4267 = vsel %vm1194, %v4233, 0.0
      %4268 = vadd.xlane.f32.xlu0 %v4267
      %v4269 = vpop.xlane.xlu0 %4268
      %v4270 = vsel %vm1194, %v4235, 0.0
      %4271 = vadd.xlane.f32.xlu0 %v4270
      %v4272 = vpop.xlane.xlu0 %4271
      %v4273 = vsel %vm1194, %v4237, 0.0
      %4274 = vadd.xlane.f32.xlu0 %v4273
      %v4275 = vpop.xlane.xlu0 %4274
      %v4276 = vsel %vm1194, %v4239, 0.0
      %4277 = vadd.xlane.f32.xlu0 %v4276
      %v4278 = vpop.xlane.xlu0 %4277
      %v4279 = vsel %vm1194, %v4241, 0.0
      %4280 = vadd.xlane.f32.xlu0 %v4279
      %v4281 = vpop.xlane.xlu0 %4280
      %v4282 = vsel %vm1194, %v4243, 0.0
      %4283 = vadd.xlane.f32.xlu0 %v4282
      %v4284 = vpop.xlane.xlu0 %4283
      %v4285 = vsel %vm1194, %v4245, 0.0
      %4286 = vadd.xlane.f32.xlu0 %v4285
      %v4287 = vpop.xlane.xlu0 %4286
      %v4288 = vsel %vm1194, %v4247, 0.0
      %4289 = vadd.xlane.f32.xlu0 %v4288
      %v4290 = vpop.xlane.xlu0 %4289
      %v4291 = vsel %vm1194, %v4249, 0.0
      %4292 = vadd.xlane.f32.xlu0 %v4291
      %v4293 = vpop.xlane.xlu0 %4292
      %v4294 = vsel %vm1194, %v4251, 0.0
      %4295 = vadd.xlane.f32.xlu0 %v4294
      %v4296 = vpop.xlane.xlu0 %4295
      %v4297 = vsel %vm1194, %v4253, 0.0
      %4298 = vadd.xlane.f32.xlu0 %v4297
      %v4299 = vpop.xlane.xlu0 %4298
      %v4300 = vsel %vm1194, %v4255, 0.0
      %4301 = vadd.xlane.f32.xlu0 %v4300
      %v4302 = vpop.xlane.xlu0 %4301
      %v4303 = vsel %vm1194, %v4257, 0.0
      %4304 = vadd.xlane.f32.xlu0 %v4303
      %v4305 = vpop.xlane.xlu0 %4304
      %v4306 = vrcp.pop %v4260
      %v4307 = vrcp.pop %v4263
      %v4308 = vrcp.pop %v4266
      %v4309 = vrcp.pop %v4269
      %v4310 = vrcp.pop %v4272
      %v4311 = vrcp.pop %v4275
      %v4312 = vrcp.pop %v4278
      %v4313 = vrcp.pop %v4281
      %v4314 = vrcp.pop %v4284
      %v4315 = vrcp.pop %v4287
      %v4316 = vrcp.pop %v4290
      %v4317 = vrcp.pop %v4293
      %v4318 = vrcp.pop %v4296
      %v4319 = vrcp.pop %v4299
      %v4320 = vrcp.pop %v4302
      %v4321 = vrcp.pop %v4305
      %v4322 = vmul.f32 %v4227, %v4306
      %v4323 = vmul.f32 %v4229, %v4307
      %v4324 = vmul.f32 %v4231, %v4308
      %v4325 = vmul.f32 %v4233, %v4309
      %v4326 = vmul.f32 %v4235, %v4310
      %v4327 = vmul.f32 %v4237, %v4311
      %v4328 = vmul.f32 %v4239, %v4312
      %v4329 = vmul.f32 %v4241, %v4313
      %v4330 = vmul.f32 %v4243, %v4314
      %v4331 = vmul.f32 %v4245, %v4315
      %v4332 = vmul.f32 %v4247, %v4316
      %v4333 = vmul.f32 %v4249, %v4317
      %v4334 = vmul.f32 %v4251, %v4318
      %v4335 = vmul.f32 %v4253, %v4319
      %v4336 = vmul.f32 %v4255, %v4320
      %v4337 = vmul.f32 %v4257, %v4321
      %v4338 = vmul.f32 %v4322, %v1155
      %v4339 = vmul.f32 %v4323, %v1156
      %v4340 = vmul.f32 %v4324, %v1157
      %v4341 = vmul.f32 %v4325, %v1158
      %v4342 = vmul.f32 %v4326, %v1159
      %v4343 = vmul.f32 %v4327, %v1160
      %v4344 = vmul.f32 %v4328, %v1161
      %v4345 = vmul.f32 %v4329, %v1162
      %v4346 = vmul.f32 %v4330, %v1163
      %v4347 = vmul.f32 %v4331, %v1164
      %v4348 = vmul.f32 %v4332, %v1165
      %v4349 = vmul.f32 %v4333, %v1166
      %v4350 = vmul.f32 %v4334, %v1167
      %v4351 = vmul.f32 %v4335, %v1168
      %v4352 = vmul.f32 %v4336, %v1169
      %v4353 = vmul.f32 %v4337, %v1170
      %4354 = vxpose.xlu0.b32.start [1/16] %v4338, 128
      %4355 = vxpose.xlu0.b32.cont [2/16] %v4339, 128
      %4356 = vxpose.xlu0.b32.cont [3/16] %v4340, 128
      %4357 = vxpose.xlu0.b32.cont [4/16] %v4341, 128
      %4358 = vxpose.xlu0.b32.cont [5/16] %v4342, 128
      %4359 = vxpose.xlu0.b32.cont [6/16] %v4343, 128
      %4360 = vxpose.xlu0.b32.cont [7/16] %v4344, 128
      %4361 = vxpose.xlu0.b32.cont [8/16] %v4345, 128
      %4362 = vxpose.xlu0.b32.cont [9/16] %v4346, 128
      %4363 = vxpose.xlu0.b32.cont [10/16] %v4347, 128
      %4364 = vxpose.xlu0.b32.cont [11/16] %v4348, 128
      %4365 = vxpose.xlu0.b32.cont [12/16] %v4349, 128
      %4366 = vxpose.xlu0.b32.cont [13/16] %v4350, 128
      %4367 = vxpose.xlu0.b32.cont [14/16] %v4351, 128
      %4368 = vxpose.xlu0.b32.cont [15/16] %v4352, 128
      %4369 = vxpose.xlu0.b32.end [16/16] %v4353, 128
      %v4370 = vpop.trf.xlu0
      %v4371 = vpop.trf.xlu0
      %v4372 = vpop.trf.xlu0
      %v4373 = vpop.trf.xlu0
      %v4374 = vpop.trf.xlu0
      %v4375 = vpop.trf.xlu0
      %v4376 = vpop.trf.xlu0
      %v4377 = vpop.trf.xlu0
      %v4378 = vpop.trf.xlu0
      %v4379 = vpop.trf.xlu0
      %v4380 = vpop.trf.xlu0
      %v4381 = vpop.trf.xlu0
      %v4382 = vpop.trf.xlu0
      %v4383 = vpop.trf.xlu0
      %v4384 = vpop.trf.xlu0
      %v4385 = vpop.trf.xlu0
      %4386 = vrot.lane.b32.xlu0 %v1061, 32
      %v4387 = vpop.permute.xlu0 %4386
      %4388 = vrot.lane.b32.xlu0 %v1067, 32
      %v4389 = vpop.permute.xlu0 %4388
      %4390 = vrot.lane.b32.xlu0 %v1073, 32
      %v4391 = vpop.permute.xlu0 %4390
      %4392 = vrot.lane.b32.xlu0 %v1079, 32
      %v4393 = vpop.permute.xlu0 %4392
      %4394 = vrot.lane.b32.xlu0 %v1085, 32
      %v4395 = vpop.permute.xlu0 %4394
      %4396 = vrot.lane.b32.xlu0 %v1091, 32
      %v4397 = vpop.permute.xlu0 %4396
      %4398 = vrot.lane.b32.xlu0 %v1097, 32
      %v4399 = vpop.permute.xlu0 %4398
      %4400 = vrot.lane.b32.xlu0 %v1103, 32
      %v4401 = vpop.permute.xlu0 %4400
      %4402 = vrot.lane.b32.xlu0 %v1109, 32
      %v4403 = vpop.permute.xlu0 %4402
      %4404 = vrot.lane.b32.xlu0 %v1115, 32
      %v4405 = vpop.permute.xlu0 %4404
      %4406 = vrot.lane.b32.xlu0 %v1121, 32
      %v4407 = vpop.permute.xlu0 %4406
      %4408 = vrot.lane.b32.xlu0 %v1127, 32
      %v4409 = vpop.permute.xlu0 %4408
      %4410 = vrot.lane.b32.xlu0 %v1133, 32
      %v4411 = vpop.permute.xlu0 %4410
      %4412 = vrot.lane.b32.xlu0 %v1139, 32
      %v4413 = vpop.permute.xlu0 %4412
      %4414 = vrot.lane.b32.xlu0 %v1145, 32
      %v4415 = vpop.permute.xlu0 %4414
      %4416 = vrot.lane.b32.xlu0 %v1151, 32
      %v4417 = vpop.permute.xlu0 %4416
      %4434 = vmatprep.subr.mxu0 0.0
      %4435 = vmatpush1.msra.mxu0 %v4417
      %4436 = vmatprep.subr.mxu0 0.0
      %4437 = vmatpush1.msra.mxu0 %v4415
      %4438 = vmatprep.subr.mxu0 0.0
      %4439 = vmatpush1.msra.mxu0 %v4413
      %4440 = vmatprep.subr.mxu0 0.0
      %4441 = vmatpush1.msra.mxu0 %v4411
      %4442 = vmatprep.subr.mxu0 0.0
      %4443 = vmatpush1.msra.mxu0 %v4409
      %4444 = vmatprep.subr.mxu0 0.0
      %4445 = vmatpush1.msra.mxu0 %v4407
      %4446 = vmatprep.subr.mxu0 0.0
      %4447 = vmatpush1.msra.mxu0 %v4405
      %4448 = vmatprep.subr.mxu0 0.0
      %4449 = vmatpush1.msra.mxu0 %v4403
      %4450 = vmatprep.subr.mxu0 0.0
      %4451 = vmatpush1.msra.mxu0 %v4401
      %4452 = vmatprep.subr.mxu0 0.0
      %4453 = vmatpush1.msra.mxu0 %v4399
      %4454 = vmatprep.subr.mxu0 0.0
      %4455 = vmatpush1.msra.mxu0 %v4397
      %4456 = vmatprep.subr.mxu0 0.0
      %4457 = vmatpush1.msra.mxu0 %v4395
      %4458 = vmatprep.subr.mxu0 0.0
      %4459 = vmatpush1.msra.mxu0 %v4393
      %4460 = vmatprep.subr.mxu0 0.0
      %4461 = vmatpush1.msra.mxu0 %v4391
      %4462 = vmatprep.subr.mxu0 0.0
      %4463 = vmatpush1.msra.mxu0 %v4389
      %4464 = vmatprep.subr.mxu0 0.0
      %4465 = vmatpush1.msra.mxu0 %v4387
      %4466 = vmatprep.subr.mxu0 0.0
      %4467 = vmatpush2.msra.mxu0 0.0
      %4468 = vmatprep.subr.mxu0 0.0
      %4469 = vmatpush2.msra.mxu0 0.0
      %4470 = vmatprep.subr.mxu0 0.0
      %4471 = vmatpush2.msra.mxu0 0.0
      %4472 = vmatprep.subr.mxu0 0.0
      %4473 = vmatpush2.msra.mxu0 0.0
      %4474 = vmatprep.subr.mxu0 0.0
      %4475 = vmatpush2.msra.mxu0 0.0
      %4476 = vmatprep.subr.mxu0 0.0
      %4477 = vmatpush2.msra.mxu0 0.0
      %4478 = vmatprep.subr.mxu0 0.0
      %4479 = vmatpush2.msra.mxu0 0.0
      %4480 = vmatprep.subr.mxu0 0.0
      %4481 = vmatpush2.msra.mxu0 0.0
      %4482 = vmatprep.subr.mxu0 0.0
      %4483 = vmatpush2.msra.mxu0 0.0
      %4484 = vmatprep.subr.mxu0 0.0
      %4485 = vmatpush2.msra.mxu0 0.0
      %4486 = vmatprep.subr.mxu0 0.0
      %4487 = vmatpush2.msra.mxu0 0.0
      %4488 = vmatprep.subr.mxu0 0.0
      %4489 = vmatpush2.msra.mxu0 0.0
      %4490 = vmatprep.subr.mxu0 0.0
      %4491 = vmatpush2.msra.mxu0 0.0
      %4492 = vmatprep.subr.mxu0 0.0
      %4493 = vmatpush2.msra.mxu0 0.0
      %4494 = vmatprep.subr.mxu0 0.0
      %4495 = vmatpush2.msra.mxu0 0.0
      %4496 = vmatprep.subr.mxu0 0.0
      %4497 = vmatpush2.msra.mxu0 0.0
      %4498 = vmatprep.mubr.f32.mxu0 0.0
      %4499 = vmatmul.mubr.f32.gmra.mxu0 %v4370
      %v4500 = vpop.f32.mrf.mxu0
      %v4501 = vadd.f32 0.0, %v4500
      %v4502 = vpop.f32.mrf.mxu0
      %4503 = vmatprep.mubr.f32.mxu0 0.0
      %4504 = vmatmul.mubr.f32.gmra.mxu0 %v4371
      %v4505 = vpop.f32.mrf.mxu0
      %v4506 = vadd.f32 0.0, %v4505
      %v4507 = vpop.f32.mrf.mxu0
      %4508 = vmatprep.mubr.f32.mxu0 0.0
      %4509 = vmatmul.mubr.f32.gmra.mxu0 %v4372
      %v4510 = vpop.f32.mrf.mxu0
      %v4511 = vadd.f32 0.0, %v4510
      %v4512 = vpop.f32.mrf.mxu0
      %4513 = vmatprep.mubr.f32.mxu0 0.0
      %4514 = vmatmul.mubr.f32.gmra.mxu0 %v4373
      %v4515 = vpop.f32.mrf.mxu0
      %v4516 = vadd.f32 0.0, %v4515
      %v4517 = vpop.f32.mrf.mxu0
      %4518 = vdwg.mxu0
      %v4519 = vsel %vm1194, %v4501, 0.0
      %4520 = vadd.xlane.f32.xlu0 %v4519
      %v4521 = vpop.xlane.xlu0 %4520
      %v4522 = vsel %vm1194, %v4506, 0.0
      %4523 = vadd.xlane.f32.xlu0 %v4522
      %v4524 = vpop.xlane.xlu0 %4523
      %v4525 = vsel %vm1194, %v4511, 0.0
      %4526 = vadd.xlane.f32.xlu0 %v4525
      %v4527 = vpop.xlane.xlu0 %4526
      %v4528 = vsel %vm1194, %v4516, 0.0
      %4529 = vadd.xlane.f32.xlu0 %v4528
      %v4530 = vpop.xlane.xlu0 %4529
      %v4531 = vadd.f32 %v4521, %v4524
      %v4532 = vadd.f32 %v4531, %v4527
      %v4533 = vadd.f32 %v4532, %v4530
      %v4534 = vrot.slane %v4533, 4
      %v4535 = vadd.f32 %v4533, %v4534
      %v4536 = vrot.slane %v4535, 2
      %v4537 = vadd.f32 %v4535, %v4536
      %v4538 = vrot.slane %v4537, 1
      %v4539 = vadd.f32 %v4537, %v4538
      %v4540 = vmul.f32 %v4539, %v1718
      %v4541 = vsub.f32 %v4501, %v4540
      %v4542 = vsub.f32 %v4506, %v4540
      %v4543 = vsub.f32 %v4511, %v4540
      %v4544 = vsub.f32 %v4516, %v4540
      %v4545 = vmul.f32 %v4541, %v4541
      %v4546 = vmul.f32 %v4542, %v4542
      %v4547 = vmul.f32 %v4543, %v4543
      %v4548 = vmul.f32 %v4544, %v4544
      %v4549 = vsel %vm1194, %v4545, 0.0
      %4550 = vadd.xlane.f32.xlu0 %v4549
      %v4551 = vpop.xlane.xlu0 %4550
      %v4552 = vsel %vm1194, %v4546, 0.0
      %4553 = vadd.xlane.f32.xlu0 %v4552
      %v4554 = vpop.xlane.xlu0 %4553
      %v4555 = vsel %vm1194, %v4547, 0.0
      %4556 = vadd.xlane.f32.xlu0 %v4555
      %v4557 = vpop.xlane.xlu0 %4556
      %v4558 = vsel %vm1194, %v4548, 0.0
      %4559 = vadd.xlane.f32.xlu0 %v4558
      %v4560 = vpop.xlane.xlu0 %4559
      %v4561 = vadd.f32 %v4551, %v4554
      %v4562 = vadd.f32 %v4561, %v4557
      %v4563 = vadd.f32 %v4562, %v4560
      %v4564 = vrot.slane %v4563, 4
      %v4565 = vadd.f32 %v4563, %v4564
      %v4566 = vrot.slane %v4565, 2
      %v4567 = vadd.f32 %v4565, %v4566
      %v4568 = vrot.slane %v4567, 1
      %v4569 = vadd.f32 %v4567, %v4568
      %v4570 = vmul.f32 %v4569, %v1718
      %v4571 = vadd.f32 %v4570, 1e-05
      %v4572 = vrsqrt.pop %v4571
      %v4573 = vmul.f32 %v4541, %v4572
      %v4574 = vmul.f32 %v4542, %v4572
      %v4575 = vmul.f32 %v4543, %v4572
      %v4576 = vmul.f32 %v4544, %v4572
      %v4577 = vmul.f32 %v4573, %v1171
      %v4578 = vmul.f32 %v4574, %v1172
      %v4579 = vmul.f32 %v4575, %v1173
      %v4580 = vmul.f32 %v4576, %v1174
      %v4581 = vadd.f32 %v4577, %v1175
      %v4582 = vadd.f32 %v4578, %v1176
      %v4583 = vadd.f32 %v4579, %v1177
      %v4584 = vadd.f32 %v4580, %v1178
      %v4586 = vsel %vm1194, %v4581, 0
      %v4589 = vsel %vm1194, %v4582, 0
      %v4592 = vsel %vm1194, %v4583, 0
      %v4595 = vsel %vm1194, %v4584, 0
      %4597 = vmatprep.subr.mxu0 0.0
      %4598 = vmatpush1.msra.mxu0 0.0
      %4599 = vmatprep.subr.mxu0 0.0
      %4600 = vmatpush1.msra.mxu0 0.0
      %4601 = vmatprep.subr.mxu0 0.0
      %4602 = vmatpush1.msra.mxu0 0.0
      %4603 = vmatprep.subr.mxu0 0.0
      %4604 = vmatpush1.msra.mxu0 0.0
      %4605 = vmatprep.subr.mxu0 0.0
      %4606 = vmatpush1.msra.mxu0 0.0
      %4607 = vmatprep.subr.mxu0 0.0
      %4608 = vmatpush1.msra.mxu0 0.0
      %4609 = vmatprep.subr.mxu0 0.0
      %4610 = vmatpush1.msra.mxu0 0.0
      %4611 = vmatprep.subr.mxu0 0.0
      %4612 = vmatpush1.msra.mxu0 0.0
      %4613 = vmatprep.subr.mxu0 0.0
      %4614 = vmatpush1.msra.mxu0 0.0
      %4615 = vmatprep.subr.mxu0 0.0
      %4616 = vmatpush1.msra.mxu0 0.0
      %4617 = vmatprep.subr.mxu0 0.0
      %4618 = vmatpush1.msra.mxu0 0.0
      %4619 = vmatprep.subr.mxu0 0.0
      %4620 = vmatpush1.msra.mxu0 0.0
      %4621 = vmatprep.subr.mxu0 0.0
      %4622 = vmatpush1.msra.mxu0 %v1182
      %4623 = vmatprep.subr.mxu0 0.0
      %4624 = vmatpush1.msra.mxu0 %v1181
      %4625 = vmatprep.subr.mxu0 0.0
      %4626 = vmatpush1.msra.mxu0 %v1180
      %4627 = vmatprep.subr.mxu0 0.0
      %4628 = vmatpush1.msra.mxu0 %v1179
      %4629 = vmatprep.subr.mxu0 0.0
      %4630 = vmatpush2.msra.mxu0 0.0
      %4631 = vmatprep.subr.mxu0 0.0
      %4632 = vmatpush2.msra.mxu0 0.0
      %4633 = vmatprep.subr.mxu0 0.0
      %4634 = vmatpush2.msra.mxu0 0.0
      %4635 = vmatprep.subr.mxu0 0.0
      %4636 = vmatpush2.msra.mxu0 0.0
      %4637 = vmatprep.subr.mxu0 0.0
      %4638 = vmatpush2.msra.mxu0 0.0
      %4639 = vmatprep.subr.mxu0 0.0
      %4640 = vmatpush2.msra.mxu0 0.0
      %4641 = vmatprep.subr.mxu0 0.0
      %4642 = vmatpush2.msra.mxu0 0.0
      %4643 = vmatprep.subr.mxu0 0.0
      %4644 = vmatpush2.msra.mxu0 0.0
      %4645 = vmatprep.subr.mxu0 0.0
      %4646 = vmatpush2.msra.mxu0 0.0
      %4647 = vmatprep.subr.mxu0 0.0
      %4648 = vmatpush2.msra.mxu0 0.0
      %4649 = vmatprep.subr.mxu0 0.0
      %4650 = vmatpush2.msra.mxu0 0.0
      %4651 = vmatprep.subr.mxu0 0.0
      %4652 = vmatpush2.msra.mxu0 0.0
      %4653 = vmatprep.subr.mxu0 0.0
      %4654 = vmatpush2.msra.mxu0 0.0
      %4655 = vmatprep.subr.mxu0 0.0
      %4656 = vmatpush2.msra.mxu0 0.0
      %4657 = vmatprep.subr.mxu0 0.0
      %4658 = vmatpush2.msra.mxu0 0.0
      %4659 = vmatprep.subr.mxu0 0.0
      %4660 = vmatpush2.msra.mxu0 0.0
      %4661 = vmatprep.mubr.f32.mxu0 0.0
      %4662 = vmatmul.mubr.f32.gmra.mxu0 %v4586
      %v4663 = vpop.f32.mrf.mxu0
      %v4664 = vadd.f32 0.0, %v4663
      %v4665 = vpop.f32.mrf.mxu0
      %4666 = vmatprep.mubr.f32.mxu0 0.0
      %4667 = vmatmul.mubr.f32.gmra.mxu0 %v4589
      %v4668 = vpop.f32.mrf.mxu0
      %v4669 = vadd.f32 0.0, %v4668
      %v4670 = vpop.f32.mrf.mxu0
      %4671 = vmatprep.mubr.f32.mxu0 0.0
      %4672 = vmatmul.mubr.f32.gmra.mxu0 %v4592
      %v4673 = vpop.f32.mrf.mxu0
      %v4674 = vadd.f32 0.0, %v4673
      %v4675 = vpop.f32.mrf.mxu0
      %4676 = vmatprep.mubr.f32.mxu0 0.0
      %4677 = vmatmul.mubr.f32.gmra.mxu0 %v4595
      %v4678 = vpop.f32.mrf.mxu0
      %v4679 = vadd.f32 0.0, %v4678
      %v4680 = vpop.f32.mrf.mxu0
      %4681 = vdwg.mxu0
      %v4683 = vsel %vm1194, %v4338, 0
      %v4686 = vsel %vm1194, %v4339, 0
      %v4689 = vsel %vm1194, %v4340, 0
      %v4692 = vsel %vm1194, %v4341, 0
      %v4695 = vsel %vm1194, %v4342, 0
      %v4698 = vsel %vm1194, %v4343, 0
      %v4701 = vsel %vm1194, %v4344, 0
      %v4704 = vsel %vm1194, %v4345, 0
      %v4707 = vsel %vm1194, %v4346, 0
      %v4710 = vsel %vm1194, %v4347, 0
      %v4713 = vsel %vm1194, %v4348, 0
      %v4716 = vsel %vm1194, %v4349, 0
      %v4719 = vsel %vm1194, %v4350, 0
      %v4722 = vsel %vm1194, %v4351, 0
      %v4725 = vsel %vm1194, %v4352, 0
      %v4728 = vsel %vm1194, %v4353, 0
      %4730 = vmatprep.subr.mxu0 0.0
      %4731 = vmatpush1.msra.mxu0 0.0
      %4732 = vmatprep.subr.mxu0 0.0
      %4733 = vmatpush1.msra.mxu0 0.0
      %4734 = vmatprep.subr.mxu0 0.0
      %4735 = vmatpush1.msra.mxu0 0.0
      %4736 = vmatprep.subr.mxu0 0.0
      %4737 = vmatpush1.msra.mxu0 0.0
      %4738 = vmatprep.subr.mxu0 0.0
      %4739 = vmatpush1.msra.mxu0 0.0
      %4740 = vmatprep.subr.mxu0 0.0
      %4741 = vmatpush1.msra.mxu0 0.0
      %4742 = vmatprep.subr.mxu0 0.0
      %4743 = vmatpush1.msra.mxu0 0.0
      %4744 = vmatprep.subr.mxu0 0.0
      %4745 = vmatpush1.msra.mxu0 0.0
      %4746 = vmatprep.subr.mxu0 0.0
      %4747 = vmatpush1.msra.mxu0 0.0
      %4748 = vmatprep.subr.mxu0 0.0
      %4749 = vmatpush1.msra.mxu0 0.0
      %4750 = vmatprep.subr.mxu0 0.0
      %4751 = vmatpush1.msra.mxu0 0.0
      %4752 = vmatprep.subr.mxu0 0.0
      %4753 = vmatpush1.msra.mxu0 0.0
      %4754 = vmatprep.subr.mxu0 0.0
      %4755 = vmatpush1.msra.mxu0 %v4679
      %4756 = vmatprep.subr.mxu0 0.0
      %4757 = vmatpush1.msra.mxu0 %v4674
      %4758 = vmatprep.subr.mxu0 0.0
      %4759 = vmatpush1.msra.mxu0 %v4669
      %4760 = vmatprep.subr.mxu0 0.0
      %4761 = vmatpush1.msra.mxu0 %v4664
      %4762 = vmatprep.subr.mxu0 0.0
      %4763 = vmatpush2.msra.mxu0 0.0
      %4764 = vmatprep.subr.mxu0 0.0
      %4765 = vmatpush2.msra.mxu0 0.0
      %4766 = vmatprep.subr.mxu0 0.0
      %4767 = vmatpush2.msra.mxu0 0.0
      %4768 = vmatprep.subr.mxu0 0.0
      %4769 = vmatpush2.msra.mxu0 0.0
      %4770 = vmatprep.subr.mxu0 0.0
      %4771 = vmatpush2.msra.mxu0 0.0
      %4772 = vmatprep.subr.mxu0 0.0
      %4773 = vmatpush2.msra.mxu0 0.0
      %4774 = vmatprep.subr.mxu0 0.0
      %4775 = vmatpush2.msra.mxu0 0.0
      %4776 = vmatprep.subr.mxu0 0.0
      %4777 = vmatpush2.msra.mxu0 0.0
      %4778 = vmatprep.subr.mxu0 0.0
      %4779 = vmatpush2.msra.mxu0 0.0
      %4780 = vmatprep.subr.mxu0 0.0
      %4781 = vmatpush2.msra.mxu0 0.0
      %4782 = vmatprep.subr.mxu0 0.0
      %4783 = vmatpush2.msra.mxu0 0.0
      %4784 = vmatprep.subr.mxu0 0.0
      %4785 = vmatpush2.msra.mxu0 0.0
      %4786 = vmatprep.subr.mxu0 0.0
      %4787 = vmatpush2.msra.mxu0 0.0
      %4788 = vmatprep.subr.mxu0 0.0
      %4789 = vmatpush2.msra.mxu0 0.0
      %4790 = vmatprep.subr.mxu0 0.0
      %4791 = vmatpush2.msra.mxu0 0.0
      %4792 = vmatprep.subr.mxu0 0.0
      %4793 = vmatpush2.msra.mxu0 0.0
      %4794 = vmatprep.mubr.f32.mxu0 0.0
      %4795 = vmatmul.mubr.f32.gmra.mxu0 %v4683
      %v4796 = vpop.f32.mrf.mxu0
      %v4797 = vadd.f32 0.0, %v4796
      %v4798 = vpop.f32.mrf.mxu0
      %4799 = vmatprep.mubr.f32.mxu0 0.0
      %4800 = vmatmul.mubr.f32.gmra.mxu0 %v4686
      %v4801 = vpop.f32.mrf.mxu0
      %v4802 = vadd.f32 0.0, %v4801
      %v4803 = vpop.f32.mrf.mxu0
      %4804 = vmatprep.mubr.f32.mxu0 0.0
      %4805 = vmatmul.mubr.f32.gmra.mxu0 %v4689
      %v4806 = vpop.f32.mrf.mxu0
      %v4807 = vadd.f32 0.0, %v4806
      %v4808 = vpop.f32.mrf.mxu0
      %4809 = vmatprep.mubr.f32.mxu0 0.0
      %4810 = vmatmul.mubr.f32.gmra.mxu0 %v4692
      %v4811 = vpop.f32.mrf.mxu0
      %v4812 = vadd.f32 0.0, %v4811
      %v4813 = vpop.f32.mrf.mxu0
      %4814 = vmatprep.mubr.f32.mxu0 0.0
      %4815 = vmatmul.mubr.f32.gmra.mxu0 %v4695
      %v4816 = vpop.f32.mrf.mxu0
      %v4817 = vadd.f32 0.0, %v4816
      %v4818 = vpop.f32.mrf.mxu0
      %4819 = vmatprep.mubr.f32.mxu0 0.0
      %4820 = vmatmul.mubr.f32.gmra.mxu0 %v4698
      %v4821 = vpop.f32.mrf.mxu0
      %v4822 = vadd.f32 0.0, %v4821
      %v4823 = vpop.f32.mrf.mxu0
      %4824 = vmatprep.mubr.f32.mxu0 0.0
      %4825 = vmatmul.mubr.f32.gmra.mxu0 %v4701
      %v4826 = vpop.f32.mrf.mxu0
      %v4827 = vadd.f32 0.0, %v4826
      %v4828 = vpop.f32.mrf.mxu0
      %4829 = vmatprep.mubr.f32.mxu0 0.0
      %4830 = vmatmul.mubr.f32.gmra.mxu0 %v4704
      %v4831 = vpop.f32.mrf.mxu0
      %v4832 = vadd.f32 0.0, %v4831
      %v4833 = vpop.f32.mrf.mxu0
      %4834 = vmatprep.mubr.f32.mxu0 0.0
      %4835 = vmatmul.mubr.f32.gmra.mxu0 %v4707
      %v4836 = vpop.f32.mrf.mxu0
      %v4837 = vadd.f32 0.0, %v4836
      %v4838 = vpop.f32.mrf.mxu0
      %4839 = vmatprep.mubr.f32.mxu0 0.0
      %4840 = vmatmul.mubr.f32.gmra.mxu0 %v4710
      %v4841 = vpop.f32.mrf.mxu0
      %v4842 = vadd.f32 0.0, %v4841
      %v4843 = vpop.f32.mrf.mxu0
      %4844 = vmatprep.mubr.f32.mxu0 0.0
      %4845 = vmatmul.mubr.f32.gmra.mxu0 %v4713
      %v4846 = vpop.f32.mrf.mxu0
      %v4847 = vadd.f32 0.0, %v4846
      %v4848 = vpop.f32.mrf.mxu0
      %4849 = vmatprep.mubr.f32.mxu0 0.0
      %4850 = vmatmul.mubr.f32.gmra.mxu0 %v4716
      %v4851 = vpop.f32.mrf.mxu0
      %v4852 = vadd.f32 0.0, %v4851
      %v4853 = vpop.f32.mrf.mxu0
      %4854 = vmatprep.mubr.f32.mxu0 0.0
      %4855 = vmatmul.mubr.f32.gmra.mxu0 %v4719
      %v4856 = vpop.f32.mrf.mxu0
      %v4857 = vadd.f32 0.0, %v4856
      %v4858 = vpop.f32.mrf.mxu0
      %4859 = vmatprep.mubr.f32.mxu0 0.0
      %4860 = vmatmul.mubr.f32.gmra.mxu0 %v4722
      %v4861 = vpop.f32.mrf.mxu0
      %v4862 = vadd.f32 0.0, %v4861
      %v4863 = vpop.f32.mrf.mxu0
      %4864 = vmatprep.mubr.f32.mxu0 0.0
      %4865 = vmatmul.mubr.f32.gmra.mxu0 %v4725
      %v4866 = vpop.f32.mrf.mxu0
      %v4867 = vadd.f32 0.0, %v4866
      %v4868 = vpop.f32.mrf.mxu0
      %4869 = vmatprep.mubr.f32.mxu0 0.0
      %4870 = vmatmul.mubr.f32.gmra.mxu0 %v4728
      %v4871 = vpop.f32.mrf.mxu0
      %v4872 = vadd.f32 0.0, %v4871
      %v4873 = vpop.f32.mrf.mxu0
      %4874 = vdwg.mxu0
      %4891 = vrot.lane.b32.xlu0 %v2927, 32
      %v4892 = vpop.permute.xlu0 %4891
      %4893 = vrot.lane.b32.xlu0 %v2932, 32
      %v4894 = vpop.permute.xlu0 %4893
      %4895 = vrot.lane.b32.xlu0 %v2937, 32
      %v4896 = vpop.permute.xlu0 %4895
      %4897 = vrot.lane.b32.xlu0 %v2942, 32
      %v4898 = vpop.permute.xlu0 %4897
      %4899 = vrot.lane.b32.xlu0 %v2947, 32
      %v4900 = vpop.permute.xlu0 %4899
      %4901 = vrot.lane.b32.xlu0 %v2952, 32
      %v4902 = vpop.permute.xlu0 %4901
      %4903 = vrot.lane.b32.xlu0 %v2957, 32
      %v4904 = vpop.permute.xlu0 %4903
      %4905 = vrot.lane.b32.xlu0 %v2962, 32
      %v4906 = vpop.permute.xlu0 %4905
      %4907 = vrot.lane.b32.xlu0 %v2967, 32
      %v4908 = vpop.permute.xlu0 %4907
      %4909 = vrot.lane.b32.xlu0 %v2972, 32
      %v4910 = vpop.permute.xlu0 %4909
      %4911 = vrot.lane.b32.xlu0 %v2977, 32
      %v4912 = vpop.permute.xlu0 %4911
      %4913 = vrot.lane.b32.xlu0 %v2982, 32
      %v4914 = vpop.permute.xlu0 %4913
      %4915 = vrot.lane.b32.xlu0 %v2987, 32
      %v4916 = vpop.permute.xlu0 %4915
      %4917 = vrot.lane.b32.xlu0 %v2992, 32
      %v4918 = vpop.permute.xlu0 %4917
      %4919 = vrot.lane.b32.xlu0 %v2997, 32
      %v4920 = vpop.permute.xlu0 %4919
      %4921 = vrot.lane.b32.xlu0 %v3002, 32
      %v4922 = vpop.permute.xlu0 %4921
      %4955 = vrot.lane.b32.xlu0 %v3862, 64
      %v4956 = vpop.permute.xlu0 %4955
      %4957 = vrot.lane.b32.xlu0 %v3867, 64
      %v4958 = vpop.permute.xlu0 %4957
      %4959 = vrot.lane.b32.xlu0 %v3872, 64
      %v4960 = vpop.permute.xlu0 %4959
      %4961 = vrot.lane.b32.xlu0 %v3877, 64
      %v4962 = vpop.permute.xlu0 %4961
      %4963 = vrot.lane.b32.xlu0 %v3882, 64
      %v4964 = vpop.permute.xlu0 %4963
      %4965 = vrot.lane.b32.xlu0 %v3887, 64
      %v4966 = vpop.permute.xlu0 %4965
      %4967 = vrot.lane.b32.xlu0 %v3892, 64
      %v4968 = vpop.permute.xlu0 %4967
      %4969 = vrot.lane.b32.xlu0 %v3897, 64
      %v4970 = vpop.permute.xlu0 %4969
      %4971 = vrot.lane.b32.xlu0 %v3902, 64
      %v4972 = vpop.permute.xlu0 %4971
      %4973 = vrot.lane.b32.xlu0 %v3907, 64
      %v4974 = vpop.permute.xlu0 %4973
      %4975 = vrot.lane.b32.xlu0 %v3912, 64
      %v4976 = vpop.permute.xlu0 %4975
      %4977 = vrot.lane.b32.xlu0 %v3917, 64
      %v4978 = vpop.permute.xlu0 %4977
      %4979 = vrot.lane.b32.xlu0 %v3922, 64
      %v4980 = vpop.permute.xlu0 %4979
      %4981 = vrot.lane.b32.xlu0 %v3927, 64
      %v4982 = vpop.permute.xlu0 %4981
      %4983 = vrot.lane.b32.xlu0 %v3932, 64
      %v4984 = vpop.permute.xlu0 %4983
      %4985 = vrot.lane.b32.xlu0 %v3937, 64
      %v4986 = vpop.permute.xlu0 %4985
      %5019 = vrot.lane.b32.xlu0 %v4797, 96
      %v5020 = vpop.permute.xlu0 %5019
      %5021 = vrot.lane.b32.xlu0 %v4802, 96
      %v5022 = vpop.permute.xlu0 %5021
      %5023 = vrot.lane.b32.xlu0 %v4807, 96
      %v5024 = vpop.permute.xlu0 %5023
      %5025 = vrot.lane.b32.xlu0 %v4812, 96
      %v5026 = vpop.permute.xlu0 %5025
      %5027 = vrot.lane.b32.xlu0 %v4817, 96
      %v5028 = vpop.permute.xlu0 %5027
      %5029 = vrot.lane.b32.xlu0 %v4822, 96
      %v5030 = vpop.permute.xlu0 %5029
      %5031 = vrot.lane.b32.xlu0 %v4827, 96
      %v5032 = vpop.permute.xlu0 %5031
      %5033 = vrot.lane.b32.xlu0 %v4832, 96
      %v5034 = vpop.permute.xlu0 %5033
      %5035 = vrot.lane.b32.xlu0 %v4837, 96
      %v5036 = vpop.permute.xlu0 %5035
      %5037 = vrot.lane.b32.xlu0 %v4842, 96
      %v5038 = vpop.permute.xlu0 %5037
      %5039 = vrot.lane.b32.xlu0 %v4847, 96
      %v5040 = vpop.permute.xlu0 %5039
      %5041 = vrot.lane.b32.xlu0 %v4852, 96
      %v5042 = vpop.permute.xlu0 %5041
      %5043 = vrot.lane.b32.xlu0 %v4857, 96
      %v5044 = vpop.permute.xlu0 %5043
      %5045 = vrot.lane.b32.xlu0 %v4862, 96
      %v5046 = vpop.permute.xlu0 %5045
      %5047 = vrot.lane.b32.xlu0 %v4867, 96
      %v5048 = vpop.permute.xlu0 %5047
      %5049 = vrot.lane.b32.xlu0 %v4872, 96
      %v5050 = vpop.permute.xlu0 %5049
      %v5067 = vsel %vm1194, %v1976, %v4892
      %v5068 = vsel %vm1194, %v1981, %v4894
      %v5069 = vsel %vm1194, %v1986, %v4896
      %v5070 = vsel %vm1194, %v1991, %v4898
      %v5071 = vsel %vm1194, %v1996, %v4900
      %v5072 = vsel %vm1194, %v2001, %v4902
      %v5073 = vsel %vm1194, %v2006, %v4904
      %v5074 = vsel %vm1194, %v2011, %v4906
      %v5075 = vsel %vm1194, %v2016, %v4908
      %v5076 = vsel %vm1194, %v2021, %v4910
      %v5077 = vsel %vm1194, %v2026, %v4912
      %v5078 = vsel %vm1194, %v2031, %v4914
      %v5079 = vsel %vm1194, %v2036, %v4916
      %v5080 = vsel %vm1194, %v2041, %v4918
      %v5081 = vsel %vm1194, %v2046, %v4920
      %v5082 = vsel %vm1194, %v2051, %v4922
      %v5083 = vsel %vm623, %v5067, %v4956
      %v5084 = vsel %vm623, %v5068, %v4958
      %v5085 = vsel %vm623, %v5069, %v4960
      %v5086 = vsel %vm623, %v5070, %v4962
      %v5087 = vsel %vm623, %v5071, %v4964
      %v5088 = vsel %vm623, %v5072, %v4966
      %v5089 = vsel %vm623, %v5073, %v4968
      %v5090 = vsel %vm623, %v5074, %v4970
      %v5091 = vsel %vm623, %v5075, %v4972
      %v5092 = vsel %vm623, %v5076, %v4974
      %v5093 = vsel %vm623, %v5077, %v4976
      %v5094 = vsel %vm623, %v5078, %v4978
      %v5095 = vsel %vm623, %v5079, %v4980
      %v5096 = vsel %vm623, %v5080, %v4982
      %v5097 = vsel %vm623, %v5081, %v4984
      %v5098 = vsel %vm623, %v5082, %v4986
      %vm5099 = vcmask 785408
      %v5100 = vsel %vm5099, %v5083, %v5020
      %v5101 = vsel %vm5099, %v5084, %v5022
      %v5102 = vsel %vm5099, %v5085, %v5024
      %v5103 = vsel %vm5099, %v5086, %v5026
      %v5104 = vsel %vm5099, %v5087, %v5028
      %v5105 = vsel %vm5099, %v5088, %v5030
      %v5106 = vsel %vm5099, %v5089, %v5032
      %v5107 = vsel %vm5099, %v5090, %v5034
      %v5108 = vsel %vm5099, %v5091, %v5036
      %v5109 = vsel %vm5099, %v5092, %v5038
      %v5110 = vsel %vm5099, %v5093, %v5040
      %v5111 = vsel %vm5099, %v5094, %v5042
      %v5112 = vsel %vm5099, %v5095, %v5044
      %v5113 = vsel %vm5099, %v5096, %v5046
      %v5114 = vsel %vm5099, %v5097, %v5048
      %v5115 = vsel %vm5099, %v5098, %v5050
      %v5116 = vld [vmem:[%s9] sm:$0xff]
      %v5117 = vld [vmem:[%s9 + $0x8] sm:$0xff]
      %v5118 = vld [vmem:[%s9 + $0x10] sm:$0xff]
      %v5119 = vld [vmem:[%s9 + $0x18] sm:$0xff]
      %v5120 = vld [vmem:[%s9 + $0x20] sm:$0xff]
      %v5121 = vld [vmem:[%s9 + $0x28] sm:$0xff]
      %v5122 = vld [vmem:[%s9 + $0x30] sm:$0xff]
      %v5123 = vld [vmem:[%s9 + $0x38] sm:$0xff]
      %v5124 = vld [vmem:[%s9 + $0x40] sm:$0xff]
      %v5125 = vld [vmem:[%s9 + $0x48] sm:$0xff]
      %v5126 = vld [vmem:[%s9 + $0x50] sm:$0xff]
      %v5127 = vld [vmem:[%s9 + $0x58] sm:$0xff]
      %v5128 = vld [vmem:[%s9 + $0x60] sm:$0xff]
      %v5129 = vld [vmem:[%s9 + $0x68] sm:$0xff]
      %v5130 = vld [vmem:[%s9 + $0x70] sm:$0xff]
      %v5131 = vld [vmem:[%s9 + $0x78] sm:$0xff]
      %v5132 = vld [vmem:[%s10] sm:$0x1]
      %v5134 = vlaneseq
      %v5135 = vshrl.u32 %v5134, 7
      %v5136 = vsub.s32 0, %v5135
      %v5137 = vrot.slane %v5132, %v5136
      %5139 = vmatprep.subr.mxu0 0.0
      %5140 = vmatpush1.msra.mxu0 %v5131
      %5141 = vmatprep.subr.mxu0 0.0
      %5142 = vmatpush1.msra.mxu0 %v5130
      %5143 = vmatprep.subr.mxu0 0.0
      %5144 = vmatpush1.msra.mxu0 %v5129
      %5145 = vmatprep.subr.mxu0 0.0
      %5146 = vmatpush1.msra.mxu0 %v5128
      %5147 = vmatprep.subr.mxu0 0.0
      %5148 = vmatpush1.msra.mxu0 %v5127
      %5149 = vmatprep.subr.mxu0 0.0
      %5150 = vmatpush1.msra.mxu0 %v5126
      %5151 = vmatprep.subr.mxu0 0.0
      %5152 = vmatpush1.msra.mxu0 %v5125
      %5153 = vmatprep.subr.mxu0 0.0
      %5154 = vmatpush1.msra.mxu0 %v5124
      %5155 = vmatprep.subr.mxu0 0.0
      %5156 = vmatpush1.msra.mxu0 %v5123
      %5157 = vmatprep.subr.mxu0 0.0
      %5158 = vmatpush1.msra.mxu0 %v5122
      %5159 = vmatprep.subr.mxu0 0.0
      %5160 = vmatpush1.msra.mxu0 %v5121
      %5161 = vmatprep.subr.mxu0 0.0
      %5162 = vmatpush1.msra.mxu0 %v5120
      %5163 = vmatprep.subr.mxu0 0.0
      %5164 = vmatpush1.msra.mxu0 %v5119
      %5165 = vmatprep.subr.mxu0 0.0
      %5166 = vmatpush1.msra.mxu0 %v5118
      %5167 = vmatprep.subr.mxu0 0.0
      %5168 = vmatpush1.msra.mxu0 %v5117
      %5169 = vmatprep.subr.mxu0 0.0
      %5170 = vmatpush1.msra.mxu0 %v5116
      %5171 = vmatprep.subr.mxu0 0.0
      %5172 = vmatpush2.msra.mxu0 0.0
      %5173 = vmatprep.subr.mxu0 0.0
      %5174 = vmatpush2.msra.mxu0 0.0
      %5175 = vmatprep.subr.mxu0 0.0
      %5176 = vmatpush2.msra.mxu0 0.0
      %5177 = vmatprep.subr.mxu0 0.0
      %5178 = vmatpush2.msra.mxu0 0.0
      %5179 = vmatprep.subr.mxu0 0.0
      %5180 = vmatpush2.msra.mxu0 0.0
      %5181 = vmatprep.subr.mxu0 0.0
      %5182 = vmatpush2.msra.mxu0 0.0
      %5183 = vmatprep.subr.mxu0 0.0
      %5184 = vmatpush2.msra.mxu0 0.0
      %5185 = vmatprep.subr.mxu0 0.0
      %5186 = vmatpush2.msra.mxu0 0.0
      %5187 = vmatprep.subr.mxu0 0.0
      %5188 = vmatpush2.msra.mxu0 0.0
      %5189 = vmatprep.subr.mxu0 0.0
      %5190 = vmatpush2.msra.mxu0 0.0
      %5191 = vmatprep.subr.mxu0 0.0
      %5192 = vmatpush2.msra.mxu0 0.0
      %5193 = vmatprep.subr.mxu0 0.0
      %5194 = vmatpush2.msra.mxu0 0.0
      %5195 = vmatprep.subr.mxu0 0.0
      %5196 = vmatpush2.msra.mxu0 0.0
      %5197 = vmatprep.subr.mxu0 0.0
      %5198 = vmatpush2.msra.mxu0 0.0
      %5199 = vmatprep.subr.mxu0 0.0
      %5200 = vmatpush2.msra.mxu0 0.0
      %5201 = vmatprep.subr.mxu0 0.0
      %5202 = vmatpush2.msra.mxu0 0.0
      %5203 = vmatprep.mubr.f32.mxu0 0.0
      %5204 = vmatmul.mubr.f32.gmra.mxu0 %v5100
      %v5205 = vpop.f32.mrf.mxu0
      %v5206 = vadd.f32 %v5137, %v5205
      %v5207 = vpop.f32.mrf.mxu0
      %5208 = vmatprep.mubr.f32.mxu0 0.0
      %5209 = vmatmul.mubr.f32.gmra.mxu0 %v5101
      %v5210 = vpop.f32.mrf.mxu0
      %v5211 = vadd.f32 %v5137, %v5210
      %v5212 = vpop.f32.mrf.mxu0
      %5213 = vmatprep.mubr.f32.mxu0 0.0
      %5214 = vmatmul.mubr.f32.gmra.mxu0 %v5102
      %v5215 = vpop.f32.mrf.mxu0
      %v5216 = vadd.f32 %v5137, %v5215
      %v5217 = vpop.f32.mrf.mxu0
      %5218 = vmatprep.mubr.f32.mxu0 0.0
      %5219 = vmatmul.mubr.f32.gmra.mxu0 %v5103
      %v5220 = vpop.f32.mrf.mxu0
      %v5221 = vadd.f32 %v5137, %v5220
      %v5222 = vpop.f32.mrf.mxu0
      %5223 = vmatprep.mubr.f32.mxu0 0.0
      %5224 = vmatmul.mubr.f32.gmra.mxu0 %v5104
      %v5225 = vpop.f32.mrf.mxu0
      %v5226 = vadd.f32 %v5137, %v5225
      %v5227 = vpop.f32.mrf.mxu0
      %5228 = vmatprep.mubr.f32.mxu0 0.0
      %5229 = vmatmul.mubr.f32.gmra.mxu0 %v5105
      %v5230 = vpop.f32.mrf.mxu0
      %v5231 = vadd.f32 %v5137, %v5230
      %v5232 = vpop.f32.mrf.mxu0
      %5233 = vmatprep.mubr.f32.mxu0 0.0
      %5234 = vmatmul.mubr.f32.gmra.mxu0 %v5106
      %v5235 = vpop.f32.mrf.mxu0
      %v5236 = vadd.f32 %v5137, %v5235
      %v5237 = vpop.f32.mrf.mxu0
      %5238 = vmatprep.mubr.f32.mxu0 0.0
      %5239 = vmatmul.mubr.f32.gmra.mxu0 %v5107
      %v5240 = vpop.f32.mrf.mxu0
      %v5241 = vadd.f32 %v5137, %v5240
      %v5242 = vpop.f32.mrf.mxu0
      %5243 = vmatprep.mubr.f32.mxu0 0.0
      %5244 = vmatmul.mubr.f32.gmra.mxu0 %v5108
      %v5245 = vpop.f32.mrf.mxu0
      %v5246 = vadd.f32 %v5137, %v5245
      %v5247 = vpop.f32.mrf.mxu0
      %5248 = vmatprep.mubr.f32.mxu0 0.0
      %5249 = vmatmul.mubr.f32.gmra.mxu0 %v5109
      %v5250 = vpop.f32.mrf.mxu0
      %v5251 = vadd.f32 %v5137, %v5250
      %v5252 = vpop.f32.mrf.mxu0
      %5253 = vmatprep.mubr.f32.mxu0 0.0
      %5254 = vmatmul.mubr.f32.gmra.mxu0 %v5110
      %v5255 = vpop.f32.mrf.mxu0
      %v5256 = vadd.f32 %v5137, %v5255
      %v5257 = vpop.f32.mrf.mxu0
      %5258 = vmatprep.mubr.f32.mxu0 0.0
      %5259 = vmatmul.mubr.f32.gmra.mxu0 %v5111
      %v5260 = vpop.f32.mrf.mxu0
      %v5261 = vadd.f32 %v5137, %v5260
      %v5262 = vpop.f32.mrf.mxu0
      %5263 = vmatprep.mubr.f32.mxu0 0.0
      %5264 = vmatmul.mubr.f32.gmra.mxu0 %v5112
      %v5265 = vpop.f32.mrf.mxu0
      %v5266 = vadd.f32 %v5137, %v5265
      %v5267 = vpop.f32.mrf.mxu0
      %5268 = vmatprep.mubr.f32.mxu0 0.0
      %5269 = vmatmul.mubr.f32.gmra.mxu0 %v5113
      %v5270 = vpop.f32.mrf.mxu0
      %v5271 = vadd.f32 %v5137, %v5270
      %v5272 = vpop.f32.mrf.mxu0
      %5273 = vmatprep.mubr.f32.mxu0 0.0
      %5274 = vmatmul.mubr.f32.gmra.mxu0 %v5114
      %v5275 = vpop.f32.mrf.mxu0
      %v5276 = vadd.f32 %v5137, %v5275
      %v5277 = vpop.f32.mrf.mxu0
      %5278 = vmatprep.mubr.f32.mxu0 0.0
      %5279 = vmatmul.mubr.f32.gmra.mxu0 %v5115
      %v5280 = vpop.f32.mrf.mxu0
      %v5281 = vadd.f32 %v5137, %v5280
      %v5282 = vpop.f32.mrf.mxu0
      %5283 = vdwg.mxu0
      %5284 = vst.msk [vmem:[%s386] sm:$0xff] %vm623, %v5206
      %5285 = vst.msk [vmem:[%s386 + $0x8] sm:$0xff] %vm623, %v5211
      %5286 = vst.msk [vmem:[%s386 + $0x10] sm:$0xff] %vm623, %v5216
      %5287 = vst.msk [vmem:[%s386 + $0x18] sm:$0xff] %vm623, %v5221
      %5288 = vst.msk [vmem:[%s386 + $0x20] sm:$0xff] %vm623, %v5226
      %5289 = vst.msk [vmem:[%s386 + $0x28] sm:$0xff] %vm623, %v5231
      %5290 = vst.msk [vmem:[%s386 + $0x30] sm:$0xff] %vm623, %v5236
      %5291 = vst.msk [vmem:[%s386 + $0x38] sm:$0xff] %vm623, %v5241
      %5292 = vst.msk [vmem:[%s386 + $0x40] sm:$0xff] %vm623, %v5246
      %5293 = vst.msk [vmem:[%s386 + $0x48] sm:$0xff] %vm623, %v5251
      %5294 = vst.msk [vmem:[%s386 + $0x50] sm:$0xff] %vm623, %v5256
      %5295 = vst.msk [vmem:[%s386 + $0x58] sm:$0xff] %vm623, %v5261
      %5296 = vst.msk [vmem:[%s386 + $0x60] sm:$0xff] %vm623, %v5266
      %5297 = vst.msk [vmem:[%s386 + $0x68] sm:$0xff] %vm623, %v5271
      %5298 = vst.msk [vmem:[%s386 + $0x70] sm:$0xff] %vm623, %v5276
      %5299 = vst.msk [vmem:[%s386 + $0x78] sm:$0xff] %vm623, %v5281
      %p5300 = scmp.lt.s32.totalorder %s22, 1
      %s5301 = scalar_select %p5300, %s22, 1
      %s5302 = smul.addr %s5301, 16
      %s5303 = smul.addr %s5302, 8
      %s5304 = scalar_lea.vmem %s11, %s5303
      // Predicated region
      $region65: #{tpu_custom_call.1} parent=63 // pred_check
        %p5305 = pneg %p276
      $region66: #{tpu_custom_call.1} parent=63 // pred_check_branch
        %5307 = sbr.rel (%p5305) target = $region68
      $region67: #{tpu_custom_call.1} parent=63 // pred_region
        _
      $region68: #{tpu_custom_call.1} parent=63 // pred_fallthru
        _
    $region64: #{tpu_custom_call.1} parent=5 // pred_fallthru
      _
    %p5308 = scmp.le.s32.totalorder 2, %s17
    // Predicated region
    $region69: #{tpu_custom_call.1} parent=5 // pred_check
      %p5309 = pneg %p5308
    $region70: #{tpu_custom_call.1} parent=5 // pred_check_branch
      %5311 = sbr.rel (%p5309) target = $region72
    $region71: #{tpu_custom_call.1} parent=5 // pred_region
      %s5312 = ssub.s32 %s17, 2
      // Predicated region
      $region73: #{tpu_custom_call.1} parent=71 // pred_check
        %p5313 = pneg %p282
      $region74: #{tpu_custom_call.1} parent=71 // pred_check_branch
        %5315 = sbr.rel (%p5313) target = $region76
      $region75: #{tpu_custom_call.1} parent=71 // pred_region
        %p5316 = scmp.lt.s32.totalorder %s23, 1
        %s5317 = scalar_select %p5316, %s23, 1
        %s5318 = smul.addr %s5317, 16
        %s5319 = smul.addr %s5318, 8
        %s5320 = scalar_lea.vmem %s11, %s5319
      $region76: #{tpu_custom_call.1} parent=71 // pred_fallthru
        _
    $region72: #{tpu_custom_call.1} parent=5 // pred_fallthru
      _
  $region6: #{tpu_custom_call.1} parent=0 // loop_footer
    %s21 = sadd.s32 1, %s17
  $region7: #{tpu_custom_call.1} parent=0 // loop_footer_branch
    %16 = sbr.rel target = $region3
  $region8: #{tpu_custom_call.1} parent=0 // loop_exit
    _

</llo_original>
